<compile_context>
chip_gen: v6e
topology: v6e:2x2x1
jax: 0.10.0
libtpu: 0.0.40
codegen_flags: <defaults>
</compile_context>

<pallas_src>
import numpy as np
import jax
import jax.numpy as jnp
from jax import lax
from jax.experimental import pallas as pl
from jax.experimental.pallas import tpu as pltpu

HIDDEN = 768   # BERT hidden size (fc1 in-features, fc2 out-features)
BOTTLE = 128   # fc1 out-features / fc2 in-features


def character_head_kernel(avg_ref, wp_ref, w1_ref, b1_ref, w2_ref, b2_ref,
                          orig_ref, rep_ref):
    # --- per-batch segment mean: (tm, S) @ (S, 768), bf16 -> f32 acc ----------
    orig = jnp.dot(avg_ref[0], wp_ref[0], preferred_element_type=jnp.float32)
    orig_ref[0] = orig  # module also returns the original-token embeddings

    # --- fc1 + ReLU: (tm, 768) @ (768, 128) + b1, f32 epilogue -----------------
    h = jnp.dot(orig.astype(jnp.bfloat16), w1_ref[...],
                preferred_element_type=jnp.float32) + b1_ref[...]
    h = jnp.maximum(h, 0.0)

    # --- fc2: (tm, 128) @ (128, 768) + b2 --------------------------------------
    rep = jnp.dot(h.astype(jnp.bfloat16), w2_ref[...],
                  preferred_element_type=jnp.float32) + b2_ref[...]

    # --- Normalize(power=2): x * rsqrt(sum(x^2, dim=1)), eps for padded rows ---
    ss = jnp.sum(rep * rep, axis=-1, keepdims=True)
    rep_ref[0] = rep * lax.rsqrt(jnp.maximum(ss, 1e-24))


def character_net_head(avg_bat, wp, w1, b1, w2, b2, *, tm=256):
    """avg_bat: (B, T_pb, S) f32 per-batch averaging tensor
       wp:      (B, S, 768)  f32 word-piece embeddings (BERT layer output)
       returns (rep_pad, orig_pad), both (B, T_pb, 768) f32."""
    B, t_pb, S = avg_bat.shape
    H = wp.shape[-1]
    assert t_pb % tm == 0
    n_t = t_pb // tm

    # bf16 MXU operands (f32 accumulation inside the kernel); biases stay f32.
    avg_bf = avg_bat.astype(jnp.bfloat16)
    wp_bf = wp.astype(jnp.bfloat16)
    w1_bf = w1.astype(jnp.bfloat16)
    w2_bf = w2.astype(jnp.bfloat16)

    bytes_accessed = (B * t_pb * S * 2 + B * S * H * 2            # avg, wp (bf16)
                      + H * BOTTLE * 2 + BOTTLE * H * 2           # w1, w2 (bf16)
                      + BOTTLE * 4 + H * 4                        # b1, b2 (f32)
                      + 2 * B * t_pb * H * 4)                     # orig, rep out
    cost = pl.CostEstimate(
        flops=2 * B * t_pb * S * H + 4 * B * t_pb * H * BOTTLE,
        transcendentals=B * t_pb,
        bytes_accessed=bytes_accessed)

    orig_pad, rep_pad = pl.pallas_call(
        character_head_kernel,
        out_shape=(
            jax.ShapeDtypeStruct((B, t_pb, H), jnp.float32),  # orig embeddings
            jax.ShapeDtypeStruct((B, t_pb, H), jnp.float32),  # normalized rep
        ),
        grid_spec=pltpu.PrefetchScalarGridSpec(
            num_scalar_prefetch=0,
            grid=(B, n_t),
            in_specs=[
                pl.BlockSpec((1, tm, S), lambda b, t: (b, t, 0)),   # avg tile
                pl.BlockSpec((1, S, H), lambda b, t: (b, 0, 0)),    # wp (per batch)
                pl.BlockSpec((H, BOTTLE), lambda b, t: (0, 0)),     # w1 (invariant)
                pl.BlockSpec((1, BOTTLE), lambda b, t: (0, 0)),     # b1 (invariant)
                pl.BlockSpec((BOTTLE, H), lambda b, t: (0, 0)),     # w2 (invariant)
                pl.BlockSpec((1, H), lambda b, t: (0, 0)),          # b2 (invariant)
            ],
            out_specs=(
                pl.BlockSpec((1, tm, H), lambda b, t: (b, t, 0)),
                pl.BlockSpec((1, tm, H), lambda b, t: (b, t, 0)),
            ),
        ),
        compiler_params=pltpu.CompilerParams(
            dimension_semantics=("parallel", "parallel"),
            vmem_limit_bytes=32 * 1024 * 1024),
        cost_estimate=cost,
    )(avg_bf, wp_bf, w1_bf, b1, w2_bf, b2)
    return rep_pad, orig_pad


def build_batched_averaging(input_mask, token_maps, seq_len, *, tm=256):
    """Per-batch (block-diagonal) averaging tensor replicating
    get_original_token_embedding, plus the gather indices that reproduce the
    module's cross-batch concatenation order."""
    B = len(token_maps)
    n_tok = [len(t) - 1 for t in token_maps]
    t_pb = max(tm, pl.cdiv(max(n_tok), tm) * tm)   # padded tokens per batch
    avg = np.zeros((B, t_pb, seq_len), dtype=np.float32)
    gather_idx = []
    for b, tmap in enumerate(token_maps):
        n_valid = int(np.sum(input_mask[b]))
        for i in range(len(tmap) - 1):
            lo, hi = tmap[i], tmap[i + 1]
            assert 0 <= lo < hi <= n_valid <= seq_len
            avg[b, i, lo:hi] = 1.0 / float(hi - lo)
            gather_idx.append(b * t_pb + i)
    return jnp.asarray(avg), np.asarray(gather_idx, dtype=np.int32), t_pb


if __name__ == "__main__":
    B, S = 2, 16  # batch, word-piece sequence length (small synthetic shapes)

    key = jax.random.PRNGKey(0)
    k_bert, k_w1, k_b1, k_w2, k_b2 = jax.random.split(key, 5)

    # Simulated BERT layer output (stand-in for all_encoder_layers[layer_index]).
    layer_output = jax.random.normal(k_bert, (B, S, HIDDEN), dtype=jnp.float32)

    # Attention mask and token maps (word-piece -> original-token boundaries).
    input_mask = np.array([[1] * 12 + [0] * 4,
                           [1] * 10 + [0] * 6], dtype=np.int32)
    token_maps = [[0, 1, 3, 6, 8, 11, 12],   # batch 0: 6 original tokens
                  [0, 2, 4, 7, 10]]          # batch 1: 4 original tokens

    # Deterministic fc1 / fc2 parameters (nn.Linear-style, stored transposed).
    w1 = jax.random.normal(k_w1, (HIDDEN, BOTTLE), dtype=jnp.float32) * 0.02
    b1 = jax.random.normal(k_b1, (1, BOTTLE), dtype=jnp.float32) * 0.02
    w2 = jax.random.normal(k_w2, (BOTTLE, HIDDEN), dtype=jnp.float32) * 0.02
    b2 = jax.random.normal(k_b2, (1, HIDDEN), dtype=jnp.float32) * 0.02

    avg_bat, gather_idx, t_pb = build_batched_averaging(input_mask, token_maps, S)
    n_tokens = len(gather_idx)

    rep_pad, orig_pad = character_net_head(avg_bat, layer_output, w1, b1, w2, b2)
    # Compact padded per-batch rows back into the module's concatenation order.
    rep = rep_pad.reshape(B * t_pb, HIDDEN)[gather_idx]
    orig = orig_pad.reshape(B * t_pb, HIDDEN)[gather_idx]
    jax.block_until_ready((rep, orig))

    # Pure-JAX f32 reference for correctness (bf16 MXU operands => loosened tol).
    orig_full_ref = jnp.einsum("bts,bsh->bth", avg_bat, layer_output)
    orig_ref = orig_full_ref.reshape(B * t_pb, HIDDEN)[gather_idx]
    h_ref = jnp.maximum(orig_ref @ w1 + b1, 0.0)
    rep_ref = h_ref @ w2 + b2
    rep_ref = rep_ref / jnp.sqrt(jnp.sum(rep_ref ** 2, axis=1, keepdims=True))

    assert rep.shape == (n_tokens, HIDDEN) and orig.shape == (n_tokens, HIDDEN)
    np.testing.assert_allclose(np.asarray(orig), np.asarray(orig_ref),
                               rtol=5e-2, atol=2e-2)
    np.testing.assert_allclose(np.asarray(rep), np.asarray(rep_ref),
                               rtol=5e-2, atol=5e-3)

    print("KERNEL_OK")
</pallas_src>

<mosaic_0001>
module attributes {stable_mosaic.version = 11 : i64} {
  func.func @character_head_kernel(%arg0: i32, %arg1: i32, %arg2: memref<1x256x16xbf16, #tpu.memory_space<vmem>>, %arg3: memref<1x16x768xbf16, #tpu.memory_space<vmem>>, %arg4: memref<768x128xbf16, #tpu.memory_space<vmem>>, %arg5: memref<1x128xf32, #tpu.memory_space<vmem>>, %arg6: memref<128x768xbf16, #tpu.memory_space<vmem>>, %arg7: memref<1x768xf32, #tpu.memory_space<vmem>>, %arg8: memref<1x256x768xf32, #tpu.memory_space<vmem>>, %arg9: memref<1x256x768xf32, #tpu.memory_space<vmem>>) attributes {dimension_semantics = [#tpu.dimension_semantics<parallel>, #tpu.dimension_semantics<parallel>], iteration_bounds = array<i64: 2, 1>, scalar_prefetch = 0 : i64, scratch_operands = 0 : i64, tpu.core_type = #tpu.core_type<tc>, window_params = [{transform_indices = @transform_0, window_bounds = array<i64: 1, 256, 16>}, {transform_indices = @transform_1, window_bounds = array<i64: 1, 16, 768>}, {pipeline_mode = #tpu.pipeline_mode<synchronous>, transform_indices = @transform_2, window_bounds = array<i64: 768, 128>}, {pipeline_mode = #tpu.pipeline_mode<synchronous>, transform_indices = @transform_3, window_bounds = array<i64: 1, 128>}, {pipeline_mode = #tpu.pipeline_mode<synchronous>, transform_indices = @transform_4, window_bounds = array<i64: 128, 768>}, {pipeline_mode = #tpu.pipeline_mode<synchronous>, transform_indices = @transform_5, window_bounds = array<i64: 1, 768>}, {transform_indices = @transform_6, window_bounds = array<i64: 1, 256, 768>}, {transform_indices = @transform_7, window_bounds = array<i64: 1, 256, 768>}]} {
    %c0 = arith.constant 0 : index
    %c0_0 = arith.constant 0 : index
    %c0_1 = arith.constant 0 : index
    %0 = vector.load %arg2[%c0, %c0_0, %c0_1] : memref<1x256x16xbf16, #tpu.memory_space<vmem>>, vector<1x256x16xbf16>
    %1 = vector.shape_cast %0 : vector<1x256x16xbf16> to vector<256x16xbf16>
    %c0_2 = arith.constant 0 : index
    %c0_3 = arith.constant 0 : index
    %c0_4 = arith.constant 0 : index
    %2 = vector.load %arg3[%c0_2, %c0_3, %c0_4] : memref<1x16x768xbf16, #tpu.memory_space<vmem>>, vector<1x16x768xbf16>
    %3 = vector.shape_cast %2 : vector<1x16x768xbf16> to vector<16x768xbf16>
    %cst = arith.constant dense<0.000000e+00> : vector<256x768xf32>
    %4 = tpu.matmul %1, %3, %cst {dimension_numbers = #tpu.dot_dimension_numbers<[1], [0], [0], [1], [0, 0, 1, 1], [], []>} : vector<256x16xbf16>, vector<16x768xbf16>, vector<256x768xf32> -> vector<256x768xf32>
    %c0_5 = arith.constant 0 : index
    %c0_6 = arith.constant 0 : index
    %c0_7 = arith.constant 0 : index
    %5 = vector.load %arg8[%c0_5, %c0_6, %c0_7] : memref<1x256x768xf32, #tpu.memory_space<vmem>>, vector<1x256x768xf32>
    %6 = vector.shape_cast %5 : vector<1x256x768xf32> to vector<256x768xf32>
    %7 = vector.shape_cast %4 : vector<256x768xf32> to vector<1x256x768xf32>
    tpu.vector_store %arg8[%c0_5, %c0_6, %c0_7], %7 {strides = array<i32>} : memref<1x256x768xf32, #tpu.memory_space<vmem>>, vector<1x256x768xf32>,
    %8 = arith.truncf %4 : vector<256x768xf32> to vector<256x768xbf16>
    %c0_8 = arith.constant 0 : index
    %c0_9 = arith.constant 0 : index
    %9 = vector.load %arg4[%c0_8, %c0_9] : memref<768x128xbf16, #tpu.memory_space<vmem>>, vector<768x128xbf16>
    %cst_10 = arith.constant dense<0.000000e+00> : vector<256x128xf32>
    %10 = tpu.matmul %8, %9, %cst_10 {dimension_numbers = #tpu.dot_dimension_numbers<[1], [0], [0], [1], [0, 0, 1, 1], [], []>} : vector<256x768xbf16>, vector<768x128xbf16>, vector<256x128xf32> -> vector<256x128xf32>
    %c0_11 = arith.constant 0 : index
    %c0_12 = arith.constant 0 : index
    %11 = vector.load %arg5[%c0_11, %c0_12] : memref<1x128xf32, #tpu.memory_space<vmem>>, vector<1x128xf32>
    %12 = vector.broadcast %11 : vector<1x128xf32> to vector<256x128xf32>
    %13 = arith.addf %10, %12 : vector<256x128xf32>
    %cst_13 = arith.constant 0.000000e+00 : f32
    %14 = vector.broadcast %cst_13 : f32 to vector<256x128xf32>
    %15 = arith.maximumf %13, %14 : vector<256x128xf32>
    %16 = arith.truncf %15 : vector<256x128xf32> to vector<256x128xbf16>
    %c0_14 = arith.constant 0 : index
    %c0_15 = arith.constant 0 : index
    %17 = vector.load %arg6[%c0_14, %c0_15] : memref<128x768xbf16, #tpu.memory_space<vmem>>, vector<128x768xbf16>
    %cst_16 = arith.constant dense<0.000000e+00> : vector<256x768xf32>
    %18 = tpu.matmul %16, %17, %cst_16 {dimension_numbers = #tpu.dot_dimension_numbers<[1], [0], [0], [1], [0, 0, 1, 1], [], []>} : vector<256x128xbf16>, vector<128x768xbf16>, vector<256x768xf32> -> vector<256x768xf32>
    %c0_17 = arith.constant 0 : index
    %c0_18 = arith.constant 0 : index
    %19 = vector.load %arg7[%c0_17, %c0_18] : memref<1x768xf32, #tpu.memory_space<vmem>>, vector<1x768xf32>
    %20 = vector.broadcast %19 : vector<1x768xf32> to vector<256x768xf32>
    %21 = arith.addf %18, %20 : vector<256x768xf32>
    %22 = arith.mulf %21, %21 : vector<256x768xf32>
    %cst_19 = arith.constant dense<0.000000e+00> : vector<256xf32>
    %23 = vector.multi_reduction <add>, %22, %cst_19 [1] : vector<256x768xf32> to vector<256xf32>
    %24 = vector.shape_cast %23 : vector<256xf32> to vector<256x1xf32>
    %cst_20 = arith.constant 1.000000e-24 : f32
    %25 = vector.broadcast %cst_20 : f32 to vector<256x1xf32>
    %26 = arith.maximumf %24, %25 : vector<256x1xf32>
    %27 = math.rsqrt %26 : vector<256x1xf32>
    %28 = vector.broadcast %27 : vector<256x1xf32> to vector<256x768xf32>
    %29 = arith.mulf %21, %28 : vector<256x768xf32>
    %c0_21 = arith.constant 0 : index
    %c0_22 = arith.constant 0 : index
    %c0_23 = arith.constant 0 : index
    %30 = vector.load %arg9[%c0_21, %c0_22, %c0_23] : memref<1x256x768xf32, #tpu.memory_space<vmem>>, vector<1x256x768xf32>
    %31 = vector.shape_cast %30 : vector<1x256x768xf32> to vector<256x768xf32>
    %32 = vector.shape_cast %29 : vector<256x768xf32> to vector<1x256x768xf32>
    tpu.vector_store %arg9[%c0_21, %c0_22, %c0_23], %32 {strides = array<i32>} : memref<1x256x768xf32, #tpu.memory_space<vmem>>, vector<1x256x768xf32>,
    return
  }
  func.func @transform_0(%arg0: i32, %arg1: i32) -> (i32, i32, i32) {
    %c0_i32 = arith.constant 0 : i32
    %c0_i32_0 = arith.constant 0 : i32
    return %arg0, %arg1, %c0_i32 : i32, i32, i32
  }
  func.func @transform_1(%arg0: i32, %arg1: i32) -> (i32, i32, i32) {
    %c0_i32 = arith.constant 0 : i32
    %c0_i32_0 = arith.constant 0 : i32
    %c0_i32_1 = arith.constant 0 : i32
    return %arg0, %c0_i32, %c0_i32_0 : i32, i32, i32
  }
  func.func @transform_2(%arg0: i32, %arg1: i32) -> (i32, i32) {
    %c0_i32 = arith.constant 0 : i32
    %c0_i32_0 = arith.constant 0 : i32
    %c0_i32_1 = arith.constant 0 : i32
    return %c0_i32, %c0_i32_0 : i32, i32
  }
  func.func @transform_3(%arg0: i32, %arg1: i32) -> (i32, i32) {
    %c0_i32 = arith.constant 0 : i32
    %c0_i32_0 = arith.constant 0 : i32
    %c0_i32_1 = arith.constant 0 : i32
    return %c0_i32, %c0_i32_0 : i32, i32
  }
  func.func @transform_4(%arg0: i32, %arg1: i32) -> (i32, i32) {
    %c0_i32 = arith.constant 0 : i32
    %c0_i32_0 = arith.constant 0 : i32
    %c0_i32_1 = arith.constant 0 : i32
    return %c0_i32, %c0_i32_0 : i32, i32
  }
  func.func @transform_5(%arg0: i32, %arg1: i32) -> (i32, i32) {
    %c0_i32 = arith.constant 0 : i32
    %c0_i32_0 = arith.constant 0 : i32
    %c0_i32_1 = arith.constant 0 : i32
    return %c0_i32, %c0_i32_0 : i32, i32
  }
  func.func @transform_6(%arg0: i32, %arg1: i32) -> (i32, i32, i32) {
    %c0_i32 = arith.constant 0 : i32
    %c0_i32_0 = arith.constant 0 : i32
    return %arg0, %arg1, %c0_i32 : i32, i32, i32
  }
  func.func @transform_7(%arg0: i32, %arg1: i32) -> (i32, i32, i32) {
    %c0_i32 = arith.constant 0 : i32
    %c0_i32_0 = arith.constant 0 : i32
    return %arg0, %arg1, %c0_i32 : i32, i32, i32
  }
}

</mosaic_0001>

<llo_original>
// kernel: tpu_custom_call.1
$region0: #{tpu_custom_call.1}
  #allocation0 [shape = 'u32[]', space=smem, size = 0x4, offset = 0x4, fixed_abs, tag = 'smem constant byte address 0x4 - core index']
  #allocation1 [shape = 'u32[144,128]{1,0:T(1,128)}', space=vmem, size = 0x12000, scoped, tag = 'internal scratch']
  %s0 = inlined_call_operand.vmem [shape: bf16[2,256,16], index: 0, kind: input, shape index: {}]
  %s1 = inlined_call_operand.hbm [shape: bf16[2,16,768], index: 1, kind: input, shape index: {}]
  %s2 = inlined_call_operand.hbm [shape: bf16[768,128], index: 2, kind: input, shape index: {}]
  %s3 = inlined_call_operand.hbm [shape: f32[1,128], index: 3, kind: input, shape index: {}]
  %s4 = inlined_call_operand.hbm [shape: bf16[128,768], index: 4, kind: input, shape index: {}]
  %s5 = inlined_call_operand.hbm [shape: f32[1,768], index: 5, kind: input, shape index: {}]
  %s6 = inlined_call_operand.hbm [shape: f32[2,256,768], index: 6, kind: output, shape index: {0}]
  %s7 = inlined_call_operand.hbm [shape: f32[2,256,768], index: 7, kind: output, shape index: {1}]
  %8 = xla_tuple %s6, %s7
  %s9 = sld [smem:[#allocation0]]
  $region85: #{tpu_custom_call.1} parent=0
    _
  %s11 = ssub.s32 1, %s9
  %s12 = scalar_select 0, %s11, %s9
  $region1: #{tpu_custom_call.1} parent=0
    #allocation2 [shape = 'u8[49152]{0}', space=vmem, size = 0xc000, scoped, tag = 'input window, operand 1']
    #allocation3 [shape = 's32[2]{0}', space=sflag, size = 0x8, scoped, tag = 'scoped memory for tpu_custom_call.1']
    #allocation4 [shape = 's32[2]{0}', space=sflag, size = 0x8, scoped, tag = 'scoped memory for tpu_custom_call.1']
    #allocation5 [shape = 'u8[196608]{0}', space=vmem, size = 0x30000, scoped, tag = 'input window, operand 2, single buffered']
    #allocation6 [shape = 's32[1]{0}', space=sflag, size = 0x4, scoped, tag = 'scoped memory for tpu_custom_call.1']
    #allocation7 [shape = 'u8[512]{0}', space=vmem, size = 0x400, scoped, tag = 'input window, operand 3, single buffered']
    #allocation8 [shape = 'u8[196608]{0}', space=vmem, size = 0x30000, scoped, tag = 'input window, operand 4, single buffered']
    #allocation9 [shape = 's32[1]{0}', space=sflag, size = 0x4, scoped, tag = 'scoped memory for tpu_custom_call.1']
    #allocation10 [shape = 'u8[3072]{0}', space=vmem, size = 0xc00, scoped, tag = 'input window, operand 5, single buffered']
    #allocation11 [shape = 'u8[1572864]{0}', space=vmem, size = 0x180000, scoped, tag = 'output window, operand 0']
    #allocation12 [shape = 'u8[1572864]{0}', space=vmem, size = 0x180000, scoped, tag = 'output window, operand 1']
    #allocation13 [shape = 's32[2]{0}', space=sflag, size = 0x8, scoped, tag = 'scoped memory for tpu_custom_call.1']
    %13 = vsyncpa [#allocation3], 0
    %s14 = scalar_lea.sflag [#allocation3], 1
    %15 = vsyncpa %s14, 0
    %16 = vsyncpa [#allocation6], 0
    %17 = vsyncpa [#allocation9], 0
    %18 = vsyncpa [#allocation4], 0
    %s19 = scalar_lea.sflag [#allocation4], 1
    %20 = vsyncpa %s19, 0
    %21 = vsyncpa [#allocation13], 0
    %s22 = scalar_lea.sflag [#allocation13], 1
    %23 = vsyncpa %s22, 0
    loop: start=0, step=1, limit=4
    $region2: #{tpu_custom_call.1} parent=1 // loop_pre_header
      _
    $region3: #{tpu_custom_call.1} parent=1 // loop_header
      %s25 = sphi 0, %s29
      %p26 = scmp.ge.s32.totalorder %s25, 4
      %s32 = sphi 0, %s44
      %s33 = sphi 0, %s40
      %s34 = sphi 0, %s32
      %s35 = sphi 0, %s33
      %s36 = sphi 0, %s34
      %s37 = sphi 0, %s35
      %s49 = sphi 0, %s51
      %s52 = sphi 0, %s49
      %s53 = sphi 0, %s52
      %s69 = sphi 0, %s53
      %s75 = sphi 0, %s77
      %s78 = sphi 0, %s75
      %s79 = sphi 0, %s78
      %s95 = sphi 0, %s79
      %s99 = sphi 0, %s99
      %s101 = sphi 0, %s99
      %s102 = sphi 0, %s101
      %s116 = sphi 0, %s102
      %s120 = sphi 0, %s120
      %s122 = sphi 0, %s120
      %s123 = sphi 0, %s122
      %s137 = sphi 0, %s123
      %s141 = sphi 0, %s141
      %s143 = sphi 0, %s141
      %s144 = sphi 0, %s143
      %s158 = sphi 0, %s144
      %s162 = sphi 0, %s162
      %s164 = sphi 0, %s162
      %s165 = sphi 0, %s164
      %s179 = sphi 0, %s165
      %s187 = sphi 0, %s189
      %s190 = sphi 0, %s187
      %s191 = sphi 0, %s190
      %s207 = sphi 0, %s191
      %s215 = sphi 0, %s217
      %s218 = sphi 0, %s215
      %s219 = sphi 0, %s218
      %s235 = sphi 0, %s219
    $region4: #{tpu_custom_call.1} parent=1 // loop_header_branch
      %28 = sbr.rel (%p26) target = $region8
    $region5: #{tpu_custom_call.1} parent=1 // loop_body
      %s30 = ssub.s32 %s25, 1
      %s31 = ssub.s32 %s25, 2
      %s38 = sadd.s32 1, %s33
      %p39 = scmp.ge.s32.totalorder %s38, 1
      %s40 = scalar_select %p39, 0, %s38
      %s41 = sadd.s32 1, %s32
      %s42 = scalar_select %p39, %s41, %s32
      %p43 = scmp.ge.s32.totalorder %s42, 2
      %s44 = scalar_select %p43, 0, %s42
      %s45 = ssub.s32 %s32, %s44
      %s46 = ssub.s32 %s33, %s40
      %s47 = sor.u32 %s45, %s46
      %p48 = scmp.eq.s32.totalorder %s47, 0
      %s50 = sadd.s32 %s49, 1
      %s51 = scalar_select %p48, %s49, %s50
      %p54 = pneg %p48
      %p55 = scmp.eq.s32.totalorder %s25, 1
      %p56 = por %p54, %p55
      %p57 = scmp.ne.s32.totalorder %s49, %s52
      %p58 = scmp.eq.s32.totalorder %s25, 0
      %p59 = por %p57, %p58
      %p60 = scmp.ne.s32.totalorder %s49, %s52
      %p61 = scmp.eq.s32.totalorder %s30, 1
      %p62 = por %p60, %p61
      %p63 = scmp.ne.s32.totalorder %s52, %s53
      %p64 = scmp.eq.s32.totalorder %s30, 0
      %p65 = por %p63, %p64
      %p66 = scmp.ne.s32.totalorder %s52, %s53
      %p67 = scmp.eq.s32.totalorder %s31, 1
      %p68 = por %p66, %p67
      %p70 = scmp.ne.s32.totalorder %s53, %s69
      %p71 = scmp.eq.s32.totalorder %s31, 0
      %p72 = por %p70, %p71
      %s73 = ssub.s32 %s32, %s44
      %p74 = scmp.eq.s32.totalorder %s73, 0
      %s76 = sadd.s32 %s75, 1
      %s77 = scalar_select %p74, %s75, %s76
      %p80 = pneg %p74
      %p81 = scmp.eq.s32.totalorder %s25, 1
      %p82 = por %p80, %p81
      %p83 = scmp.ne.s32.totalorder %s75, %s78
      %p84 = scmp.eq.s32.totalorder %s25, 0
      %p85 = por %p83, %p84
      %p86 = scmp.ne.s32.totalorder %s75, %s78
      %p87 = scmp.eq.s32.totalorder %s30, 1
      %p88 = por %p86, %p87
      %p89 = scmp.ne.s32.totalorder %s78, %s79
      %p90 = scmp.eq.s32.totalorder %s30, 0
      %p91 = por %p89, %p90
      %p92 = scmp.ne.s32.totalorder %s78, %s79
      %p93 = scmp.eq.s32.totalorder %s31, 1
      %p94 = por %p92, %p93
      %p96 = scmp.ne.s32.totalorder %s79, %s95
      %p97 = scmp.eq.s32.totalorder %s31, 0
      %p98 = por %p96, %p97
      %s100 = sadd.s32 %s99, 1
      %p103 = scmp.eq.s32.totalorder %s25, 1
      %p104 = scmp.ne.s32.totalorder %s99, %s101
      %p105 = scmp.eq.s32.totalorder %s25, 0
      %p106 = por %p104, %p105
      %p107 = scmp.ne.s32.totalorder %s99, %s101
      %p108 = scmp.eq.s32.totalorder %s30, 1
      %p109 = por %p107, %p108
      %p110 = scmp.ne.s32.totalorder %s101, %s102
      %p111 = scmp.eq.s32.totalorder %s30, 0
      %p112 = por %p110, %p111
      %p113 = scmp.ne.s32.totalorder %s101, %s102
      %p114 = scmp.eq.s32.totalorder %s31, 1
      %p115 = por %p113, %p114
      %p117 = scmp.ne.s32.totalorder %s102, %s116
      %p118 = scmp.eq.s32.totalorder %s31, 0
      %p119 = por %p117, %p118
      %s121 = sadd.s32 %s120, 1
      %p124 = scmp.eq.s32.totalorder %s25, 1
      %p125 = scmp.ne.s32.totalorder %s120, %s122
      %p126 = scmp.eq.s32.totalorder %s25, 0
      %p127 = por %p125, %p126
      %p128 = scmp.ne.s32.totalorder %s120, %s122
      %p129 = scmp.eq.s32.totalorder %s30, 1
      %p130 = por %p128, %p129
      %p131 = scmp.ne.s32.totalorder %s122, %s123
      %p132 = scmp.eq.s32.totalorder %s30, 0
      %p133 = por %p131, %p132
      %p134 = scmp.ne.s32.totalorder %s122, %s123
      %p135 = scmp.eq.s32.totalorder %s31, 1
      %p136 = por %p134, %p135
      %p138 = scmp.ne.s32.totalorder %s123, %s137
      %p139 = scmp.eq.s32.totalorder %s31, 0
      %p140 = por %p138, %p139
      %s142 = sadd.s32 %s141, 1
      %p145 = scmp.eq.s32.totalorder %s25, 1
      %p146 = scmp.ne.s32.totalorder %s141, %s143
      %p147 = scmp.eq.s32.totalorder %s25, 0
      %p148 = por %p146, %p147
      %p149 = scmp.ne.s32.totalorder %s141, %s143
      %p150 = scmp.eq.s32.totalorder %s30, 1
      %p151 = por %p149, %p150
      %p152 = scmp.ne.s32.totalorder %s143, %s144
      %p153 = scmp.eq.s32.totalorder %s30, 0
      %p154 = por %p152, %p153
      %p155 = scmp.ne.s32.totalorder %s143, %s144
      %p156 = scmp.eq.s32.totalorder %s31, 1
      %p157 = por %p155, %p156
      %p159 = scmp.ne.s32.totalorder %s144, %s158
      %p160 = scmp.eq.s32.totalorder %s31, 0
      %p161 = por %p159, %p160
      %s163 = sadd.s32 %s162, 1
      %p166 = scmp.eq.s32.totalorder %s25, 1
      %p167 = scmp.ne.s32.totalorder %s162, %s164
      %p168 = scmp.eq.s32.totalorder %s25, 0
      %p169 = por %p167, %p168
      %p170 = scmp.ne.s32.totalorder %s162, %s164
      %p171 = scmp.eq.s32.totalorder %s30, 1
      %p172 = por %p170, %p171
      %p173 = scmp.ne.s32.totalorder %s164, %s165
      %p174 = scmp.eq.s32.totalorder %s30, 0
      %p175 = por %p173, %p174
      %p176 = scmp.ne.s32.totalorder %s164, %s165
      %p177 = scmp.eq.s32.totalorder %s31, 1
      %p178 = por %p176, %p177
      %p180 = scmp.ne.s32.totalorder %s165, %s179
      %p181 = scmp.eq.s32.totalorder %s31, 0
      %p182 = por %p180, %p181
      %s183 = ssub.s32 %s32, %s44
      %s184 = ssub.s32 %s33, %s40
      %s185 = sor.u32 %s183, %s184
      %p186 = scmp.eq.s32.totalorder %s185, 0
      %s188 = sadd.s32 %s187, 1
      %s189 = scalar_select %p186, %s187, %s188
      %p192 = pneg %p186
      %p193 = scmp.eq.s32.totalorder %s25, 1
      %p194 = por %p192, %p193
      %p195 = scmp.ne.s32.totalorder %s187, %s190
      %p196 = scmp.eq.s32.totalorder %s25, 0
      %p197 = por %p195, %p196
      %p198 = scmp.ne.s32.totalorder %s187, %s190
      %p199 = scmp.eq.s32.totalorder %s30, 1
      %p200 = por %p198, %p199
      %p201 = scmp.ne.s32.totalorder %s190, %s191
      %p202 = scmp.eq.s32.totalorder %s30, 0
      %p203 = por %p201, %p202
      %p204 = scmp.ne.s32.totalorder %s190, %s191
      %p205 = scmp.eq.s32.totalorder %s31, 1
      %p206 = por %p204, %p205
      %p208 = scmp.ne.s32.totalorder %s191, %s207
      %p209 = scmp.eq.s32.totalorder %s31, 0
      %p210 = por %p208, %p209
      %s211 = ssub.s32 %s32, %s44
      %s212 = ssub.s32 %s33, %s40
      %s213 = sor.u32 %s211, %s212
      %p214 = scmp.eq.s32.totalorder %s213, 0
      %s216 = sadd.s32 %s215, 1
      %s217 = scalar_select %p214, %s215, %s216
      %p220 = pneg %p214
      %p221 = scmp.eq.s32.totalorder %s25, 1
      %p222 = por %p220, %p221
      %p223 = scmp.ne.s32.totalorder %s215, %s218
      %p224 = scmp.eq.s32.totalorder %s25, 0
      %p225 = por %p223, %p224
      %p226 = scmp.ne.s32.totalorder %s215, %s218
      %p227 = scmp.eq.s32.totalorder %s30, 1
      %p228 = por %p226, %p227
      %p229 = scmp.ne.s32.totalorder %s218, %s219
      %p230 = scmp.eq.s32.totalorder %s30, 0
      %p231 = por %p229, %p230
      %p232 = scmp.ne.s32.totalorder %s218, %s219
      %p233 = scmp.eq.s32.totalorder %s31, 1
      %p234 = por %p232, %p233
      %p236 = scmp.ne.s32.totalorder %s219, %s235
      %p237 = scmp.eq.s32.totalorder %s31, 0
      %p238 = por %p236, %p237
      %p239 = scmp.le.s32.totalorder 1, %s25
      %p240 = scmp.lt.s32.totalorder %s25, 3
      %p241 = pnand %p239, %p240
      %p242 = pneg %p241
      // Predicated region
      $region9: #{tpu_custom_call.1} parent=5 // pred_check
        _
      $region10: #{tpu_custom_call.1} parent=5 // pred_check_branch
        %244 = sbr.rel (%p241) target = $region12
      $region11: #{tpu_custom_call.1} parent=5 // pred_region
        %s245 = ssub.s32 %s25, 1
        // Predicated region
        $region13: #{tpu_custom_call.1} parent=11 // pred_check
          %p246 = pneg %p112
        $region14: #{tpu_custom_call.1} parent=11 // pred_check_branch
          %248 = sbr.rel (%p246) target = $region16
        $region15: #{tpu_custom_call.1} parent=11 // pred_region
          %s250 = ssub.s32 6144, 6144
          %251 = vsyncadd [#allocation6], %s250
          %s252 = sshll.u32 [#allocation5], 4
          %s253 = int_to_ptr.vmem [resolvable:$true] %s252
          %258 = dma.hbm_to_vmem [thread:$0]  %s2, 6144, %s253, [#allocation6], 64, 64, 4
        $region16: #{tpu_custom_call.1} parent=11 // pred_fallthru
          _
        // Predicated region
        $region17: #{tpu_custom_call.1} parent=11 // pred_check
          %p259 = pneg %p133
        $region18: #{tpu_custom_call.1} parent=11 // pred_check_branch
          %261 = sbr.rel (%p259) target = $region20
        $region19: #{tpu_custom_call.1} parent=11 // pred_region
          %s263 = ssub.s32 16, 16
          %264 = vsyncadd [#allocation6], %s263
          %s266 = sshll.u32 [#allocation7], 4
          %s267 = int_to_ptr.vmem [resolvable:$true] %s266
          %269 = dma.hbm_to_vmem [thread:$0]  %s3, 16, %s267, [#allocation6]
        $region20: #{tpu_custom_call.1} parent=11 // pred_fallthru
          _
        // Predicated region
        $region21: #{tpu_custom_call.1} parent=11 // pred_check
          %p270 = pneg %p154
        $region22: #{tpu_custom_call.1} parent=11 // pred_check_branch
          %272 = sbr.rel (%p270) target = $region24
        $region23: #{tpu_custom_call.1} parent=11 // pred_region
          %s274 = ssub.s32 6144, 6144
          %275 = vsyncadd [#allocation9], %s274
          %s276 = sshll.u32 [#allocation8], 4
          %s277 = int_to_ptr.vmem [resolvable:$true] %s276
          %282 = dma.hbm_to_vmem [thread:$0]  %s4, 6144, %s277, [#allocation9], 384, 384, 24
        $region24: #{tpu_custom_call.1} parent=11 // pred_fallthru
          _
        // Predicated region
        $region25: #{tpu_custom_call.1} parent=11 // pred_check
          %p283 = pneg %p175
        $region26: #{tpu_custom_call.1} parent=11 // pred_check_branch
          %285 = sbr.rel (%p283) target = $region28
        $region27: #{tpu_custom_call.1} parent=11 // pred_region
          %s287 = ssub.s32 96, 96
          %288 = vsyncadd [#allocation9], %s287
          %s290 = sshll.u32 [#allocation10], 4
          %s291 = int_to_ptr.vmem [resolvable:$true] %s290
          %293 = dma.hbm_to_vmem [thread:$0]  %s5, 96, %s291, [#allocation9]
        $region28: #{tpu_custom_call.1} parent=11 // pred_fallthru
          _
      $region12: #{tpu_custom_call.1} parent=5 // pred_fallthru
        _
      %p294 = scmp.lt.s32.totalorder %s25, 2
      // Predicated region
      $region29: #{tpu_custom_call.1} parent=5 // pred_check
        %p295 = pneg %p294
      $region30: #{tpu_custom_call.1} parent=5 // pred_check_branch
        %297 = sbr.rel (%p295) target = $region32
      $region31: #{tpu_custom_call.1} parent=5 // pred_region
        // Predicated region
        $region33: #{tpu_custom_call.1} parent=31 // pred_check
          %p298 = pneg %p59
        $region34: #{tpu_custom_call.1} parent=31 // pred_check_branch
          %300 = sbr.rel (%p298) target = $region36
        $region35: #{tpu_custom_call.1} parent=31 // pred_region
          %s301 = smul.u32 32, %s33
          %p302 = scmp.lt.s32.totalorder %s32, 1
          %s303 = scalar_select %p302, %s32, 1
          %p304 = scmp.lt.s32.totalorder %s301, 31
          %s305 = scalar_select %p304, %s301, 31
          %s306 = smul.addr %s303, 32
          %s307 = sadd.s32 %s305, %s306
          %s308 = smul.addr %s307, 4
          %s309 = scalar_lea.vmem %s0, %s308
          %s310 = smul.u32 32, %s33
        $region36: #{tpu_custom_call.1} parent=31 // pred_fallthru
          _
        // Predicated region
        $region37: #{tpu_custom_call.1} parent=31 // pred_check
          %p311 = pneg %p85
        $region38: #{tpu_custom_call.1} parent=31 // pred_check_branch
          %313 = sbr.rel (%p311) target = $region40
        $region39: #{tpu_custom_call.1} parent=31 // pred_region
          %s314 = sand.u32 %s75, 1
          %s315 = scalar_lea.sflag [#allocation3], %s314
          %s316 = sand.u32 %s75, 1
          %s317 = smul.addr %s316, 48
          %s318 = scalar_lea.vmem [#allocation2], %s317
          %s320 = ssub.s32 768, 768
          %321 = vsyncadd %s315, %s320
          %s322 = smul.addr %s32, 12
          %s323 = smul.addr %s322, 64
          %s324 = scalar_lea.hbm %s1, %s323
          %s325 = sshll.u32 %s318, 4
          %s326 = int_to_ptr.vmem [resolvable:$true] %s325
          %331 = dma.hbm_to_vmem [thread:$0]  %s324, 768, %s326, %s315, 384, 384, 24
        $region40: #{tpu_custom_call.1} parent=31 // pred_fallthru
          _
      $region32: #{tpu_custom_call.1} parent=5 // pred_fallthru
        _
      %p332 = scmp.le.s32.totalorder 1, %s25
      %p333 = scmp.lt.s32.totalorder %s25, 3
      %p334 = pnand %p332, %p333
      %p335 = pneg %p334
      // Predicated region
      $region41: #{tpu_custom_call.1} parent=5 // pred_check
        _
      $region42: #{tpu_custom_call.1} parent=5 // pred_check_branch
        %337 = sbr.rel (%p334) target = $region44
      $region43: #{tpu_custom_call.1} parent=5 // pred_region
        %s338 = ssub.s32 %s25, 1
        %s339 = sand.u32 %s78, 1
        %s340 = scalar_lea.sflag [#allocation3], %s339
        %s341 = sand.u32 %s78, 1
        %s342 = smul.addr %s341, 48
        %s343 = scalar_lea.vmem [#allocation2], %s342
        // Predicated region
        $region45: #{tpu_custom_call.1} parent=43 // pred_check
          %p344 = pneg %p91
        $region46: #{tpu_custom_call.1} parent=43 // pred_check_branch
          %346 = sbr.rel (%p344) target = $region48
        $region47: #{tpu_custom_call.1} parent=43 // pred_region
          %347 = dma.done %s340, 768
        $region48: #{tpu_custom_call.1} parent=43 // pred_fallthru
          _
        // Predicated region
        $region49: #{tpu_custom_call.1} parent=43 // pred_check
          %p348 = pneg %p112
        $region50: #{tpu_custom_call.1} parent=43 // pred_check_branch
          %350 = sbr.rel (%p348) target = $region52
        $region51: #{tpu_custom_call.1} parent=43 // pred_region
          %351 = dma.done [#allocation6], 6144
        $region52: #{tpu_custom_call.1} parent=43 // pred_fallthru
          _
        // Predicated region
        $region53: #{tpu_custom_call.1} parent=43 // pred_check
          %p352 = pneg %p133
        $region54: #{tpu_custom_call.1} parent=43 // pred_check_branch
          %354 = sbr.rel (%p352) target = $region56
        $region55: #{tpu_custom_call.1} parent=43 // pred_region
          %355 = dma.done [#allocation6], 16
        $region56: #{tpu_custom_call.1} parent=43 // pred_fallthru
          _
        // Predicated region
        $region57: #{tpu_custom_call.1} parent=43 // pred_check
          %p356 = pneg %p154
        $region58: #{tpu_custom_call.1} parent=43 // pred_check_branch
          %358 = sbr.rel (%p356) target = $region60
        $region59: #{tpu_custom_call.1} parent=43 // pred_region
          %359 = dma.done [#allocation9], 6144
        $region60: #{tpu_custom_call.1} parent=43 // pred_fallthru
          _
        // Predicated region
        $region61: #{tpu_custom_call.1} parent=43 // pred_check
          %p360 = pneg %p175
        $region62: #{tpu_custom_call.1} parent=43 // pred_check_branch
          %362 = sbr.rel (%p360) target = $region64
        $region63: #{tpu_custom_call.1} parent=43 // pred_region
          %363 = dma.done [#allocation9], 96
        $region64: #{tpu_custom_call.1} parent=43 // pred_fallthru
          _
        %s364 = smul.u32 32, %s35
        %p365 = scmp.lt.s32.totalorder %s34, 1
        %s366 = scalar_select %p365, %s34, 1
        %p367 = scmp.lt.s32.totalorder %s364, 31
        %s368 = scalar_select %p367, %s364, 31
        %s369 = smul.addr %s366, 32
        %s370 = sadd.s32 %s368, %s369
        %s371 = smul.addr %s370, 4
        %s372 = scalar_lea.vmem %s0, %s371
        %p373 = pneg %p65
        %p374 = pneg %p62
        %s375 = sand.u32 %s78, 1
        %s376 = scalar_lea.sflag [#allocation3], %s375
        %s377 = sand.u32 %s78, 1
        %s378 = smul.addr %s377, 48
        %s379 = scalar_lea.vmem [#allocation2], %s378
        %p380 = pneg %p91
        %p381 = pneg %p88
        %p382 = pneg %p112
        %p383 = pneg %p109
        %p384 = pneg %p133
        %p385 = pneg %p130
        %p386 = pneg %p154
        %p387 = pneg %p151
        %p388 = pneg %p175
        %p389 = pneg %p172
        %p390 = pneg %p203
        %p391 = pneg %p200
        %s392 = sand.u32 %s190, 1
        %s393 = scalar_lea.sflag [#allocation4], %s392
        %s394 = sand.u32 %s190, 1
        %s395 = smul.addr %s394, 1536
        %s396 = scalar_lea.vmem [#allocation11], %s395
        %p397 = pneg %p231
        %p398 = pneg %p228
        %s399 = sand.u32 %s218, 1
        %s400 = scalar_lea.sflag [#allocation13], %s399
        %s401 = sand.u32 %s218, 1
        %s402 = smul.addr %s401, 1536
        %s403 = scalar_lea.vmem [#allocation12], %s402
        %s404 = smul.u32 32, %s35
        %p405 = scmp.lt.s32.totalorder %s34, 1
        %s406 = scalar_select %p405, %s34, 1
        %p407 = scmp.lt.s32.totalorder %s404, 31
        %s408 = scalar_select %p407, %s404, 31
        %s409 = smul.addr %s406, 32
        %s410 = sadd.s32 %s408, %s409
        %s411 = smul.addr %s410, 4
        %s412 = scalar_lea.vmem %s0, %s411
        %s413 = smul.u32 32, %s35
        %s414 = smul.u32 32, %s35
        %s415 = smul.u32 32, %s35
        %v417 = vld [vmem:[%s412] sm:$0xf]
        %v418 = vld [vmem:[%s412 + $0x4] sm:$0xf]
        %v419 = vld [vmem:[%s412 + $0x8] sm:$0xf]
        %v420 = vld [vmem:[%s412 + $0xc] sm:$0xf]
        %v421 = vld [vmem:[%s412 + $0x10] sm:$0xf]
        %v422 = vld [vmem:[%s412 + $0x14] sm:$0xf]
        %v423 = vld [vmem:[%s412 + $0x18] sm:$0xf]
        %v424 = vld [vmem:[%s412 + $0x1c] sm:$0xf]
        %v425 = vld [vmem:[%s412 + $0x20] sm:$0xf]
        %v426 = vld [vmem:[%s412 + $0x24] sm:$0xf]
        %v427 = vld [vmem:[%s412 + $0x28] sm:$0xf]
        %v428 = vld [vmem:[%s412 + $0x2c] sm:$0xf]
        %v429 = vld [vmem:[%s412 + $0x30] sm:$0xf]
        %v430 = vld [vmem:[%s412 + $0x34] sm:$0xf]
        %v431 = vld [vmem:[%s412 + $0x38] sm:$0xf]
        %v432 = vld [vmem:[%s412 + $0x3c] sm:$0xf]
        %v433 = vld [vmem:[%s412 + $0x40] sm:$0xf]
        %v434 = vld [vmem:[%s412 + $0x44] sm:$0xf]
        %v435 = vld [vmem:[%s412 + $0x48] sm:$0xf]
        %v436 = vld [vmem:[%s412 + $0x4c] sm:$0xf]
        %v437 = vld [vmem:[%s412 + $0x50] sm:$0xf]
        %v438 = vld [vmem:[%s412 + $0x54] sm:$0xf]
        %v439 = vld [vmem:[%s412 + $0x58] sm:$0xf]
        %v440 = vld [vmem:[%s412 + $0x5c] sm:$0xf]
        %v441 = vld [vmem:[%s412 + $0x60] sm:$0xf]
        %v442 = vld [vmem:[%s412 + $0x64] sm:$0xf]
        %v443 = vld [vmem:[%s412 + $0x68] sm:$0xf]
        %v444 = vld [vmem:[%s412 + $0x6c] sm:$0xf]
        %v445 = vld [vmem:[%s412 + $0x70] sm:$0xf]
        %v446 = vld [vmem:[%s412 + $0x74] sm:$0xf]
        %v447 = vld [vmem:[%s412 + $0x78] sm:$0xf]
        %v448 = vld [vmem:[%s412 + $0x7c] sm:$0xf]
        %v449 = vld [vmem:[%s343] sm:$0xff]
        %v450 = vld [vmem:[%s343 + $0x8] sm:$0xff]
        %v451 = vld [vmem:[%s343 + $0x10] sm:$0xff]
        %v452 = vld [vmem:[%s343 + $0x18] sm:$0xff]
        %v453 = vld [vmem:[%s343 + $0x20] sm:$0xff]
        %v454 = vld [vmem:[%s343 + $0x28] sm:$0xff]
        %v487 = vunpack.c.l.b16 %v417
        %v488 = vunpack.c.l.b16 %v418
        %v489 = vunpack.c.l.b16 %v419
        %v490 = vunpack.c.l.b16 %v420
        %v491 = vunpack.c.l.b16 %v421
        %v492 = vunpack.c.l.b16 %v422
        %v493 = vunpack.c.l.b16 %v423
        %v494 = vunpack.c.l.b16 %v424
        %v495 = vunpack.c.l.b16 %v425
        %v496 = vunpack.c.l.b16 %v426
        %v497 = vunpack.c.l.b16 %v427
        %v498 = vunpack.c.l.b16 %v428
        %v499 = vunpack.c.l.b16 %v429
        %v500 = vunpack.c.l.b16 %v430
        %v501 = vunpack.c.l.b16 %v431
        %v502 = vunpack.c.l.b16 %v432
        %v503 = vunpack.c.l.b16 %v433
        %v504 = vunpack.c.l.b16 %v434
        %v505 = vunpack.c.l.b16 %v435
        %v506 = vunpack.c.l.b16 %v436
        %v507 = vunpack.c.l.b16 %v437
        %v508 = vunpack.c.l.b16 %v438
        %v509 = vunpack.c.l.b16 %v439
        %v510 = vunpack.c.l.b16 %v440
        %v511 = vunpack.c.l.b16 %v441
        %v512 = vunpack.c.l.b16 %v442
        %v513 = vunpack.c.l.b16 %v443
        %v514 = vunpack.c.l.b16 %v444
        %v515 = vunpack.c.l.b16 %v445
        %v516 = vunpack.c.l.b16 %v446
        %v517 = vunpack.c.l.b16 %v447
        %v518 = vunpack.c.l.b16 %v448
        %v519 = vpack.c.b16 %v488, %v487
        %v520 = vpack.c.b16 %v490, %v489
        %v521 = vpack.c.b16 %v492, %v491
        %v522 = vpack.c.b16 %v494, %v493
        %v523 = vpack.c.b16 %v496, %v495
        %v524 = vpack.c.b16 %v498, %v497
        %v525 = vpack.c.b16 %v500, %v499
        %v526 = vpack.c.b16 %v502, %v501
        %v527 = vpack.c.b16 %v504, %v503
        %v528 = vpack.c.b16 %v506, %v505
        %v529 = vpack.c.b16 %v508, %v507
        %v530 = vpack.c.b16 %v510, %v509
        %v531 = vpack.c.b16 %v512, %v511
        %v532 = vpack.c.b16 %v514, %v513
        %v533 = vpack.c.b16 %v516, %v515
        %v534 = vpack.c.b16 %v518, %v517
        %v541 = vunpack.c.l.b16 %v449
        %v542 = vunpack.c.h.b16 %v449
        %v543 = vunpack.c.l.b16 %v450
        %v544 = vunpack.c.h.b16 %v450
        %v545 = vunpack.c.l.b16 %v451
        %v546 = vunpack.c.h.b16 %v451
        %v547 = vunpack.c.l.b16 %v452
        %v548 = vunpack.c.h.b16 %v452
        %v549 = vunpack.c.l.b16 %v453
        %v550 = vunpack.c.h.b16 %v453
        %v551 = vunpack.c.l.b16 %v454
        %v552 = vunpack.c.h.b16 %v454
        %v553 = vpack.c.b16 %v547, %v541
        %v554 = vpack.c.b16 %v548, %v542
        %v555 = vpack.c.b16 %v549, %v543
        %v556 = vpack.c.b16 %v550, %v544
        %v557 = vpack.c.b16 %v551, %v545
        %v558 = vpack.c.b16 %v552, %v546
        %vm565 = vcmask 130048
        %v567 = vsel %vm565, %v519, 0
        %v570 = vsel %vm565, %v520, 0
        %v573 = vsel %vm565, %v521, 0
        %v576 = vsel %vm565, %v522, 0
        %v579 = vsel %vm565, %v523, 0
        %v582 = vsel %vm565, %v524, 0
        %v585 = vsel %vm565, %v525, 0
        %v588 = vsel %vm565, %v526, 0
        %v591 = vsel %vm565, %v527, 0
        %v594 = vsel %vm565, %v528, 0
        %v597 = vsel %vm565, %v529, 0
        %v600 = vsel %vm565, %v530, 0
        %v603 = vsel %vm565, %v531, 0
        %v606 = vsel %vm565, %v532, 0
        %v609 = vsel %vm565, %v533, 0
        %v612 = vsel %vm565, %v534, 0
        %614 = vmatprep.subr.bf16.mxu0 0
        %615 = vmatpush1.bf16.msra.mxu0 0
        %616 = vmatprep.subr.bf16.mxu0 0
        %617 = vmatpush1.bf16.msra.mxu0 0
        %618 = vmatprep.subr.bf16.mxu0 0
        %619 = vmatpush1.bf16.msra.mxu0 0
        %620 = vmatprep.subr.bf16.mxu0 0
        %621 = vmatpush1.bf16.msra.mxu0 0
        %622 = vmatprep.subr.bf16.mxu0 0
        %623 = vmatpush1.bf16.msra.mxu0 0
        %624 = vmatprep.subr.bf16.mxu0 0
        %625 = vmatpush1.bf16.msra.mxu0 0
        %626 = vmatprep.subr.bf16.mxu0 0
        %627 = vmatpush1.bf16.msra.mxu0 0
        %628 = vmatprep.subr.bf16.mxu0 %v554
        %629 = vmatpush1.bf16.msra.mxu0 %v553
        %630 = vmatprep.subr.bf16.mxu0 0
        %631 = vmatpush2.bf16.msra.mxu0 0
        %632 = vmatprep.subr.bf16.mxu0 0
        %633 = vmatpush2.bf16.msra.mxu0 0
        %634 = vmatprep.subr.bf16.mxu0 0
        %635 = vmatpush2.bf16.msra.mxu0 0
        %636 = vmatprep.subr.bf16.mxu0 0
        %637 = vmatpush2.bf16.msra.mxu0 0
        %638 = vmatprep.subr.bf16.mxu0 0
        %639 = vmatpush2.bf16.msra.mxu0 0
        %640 = vmatprep.subr.bf16.mxu0 0
        %641 = vmatpush2.bf16.msra.mxu0 0
        %642 = vmatprep.subr.bf16.mxu0 0
        %643 = vmatpush2.bf16.msra.mxu0 0
        %644 = vmatprep.subr.bf16.mxu0 0
        %645 = vmatpush2.bf16.msra.mxu0 0
        %646 = vmatprep.mubr.bf16.mxu0 0
        %647 = vmatmul.mubr.bf16.gmra.mxu0 %v567
        %v648 = vpop.f32.mrf.mxu0
        %v649 = vadd.f32 0.0, %v648
        %v650 = vpop.f32.mrf.mxu0
        %v651 = vadd.f32 0.0, %v650
        %v652 = vpop.f32.mrf.mxu0
        %v653 = vadd.f32 0.0, %v652
        %v654 = vpop.f32.mrf.mxu0
        %v655 = vadd.f32 0.0, %v654
        %656 = vmatprep.mubr.bf16.mxu0 0
        %657 = vmatmul.mubr.bf16.gmra.mxu0 %v570
        %v658 = vpop.f32.mrf.mxu0
        %v659 = vadd.f32 0.0, %v658
        %v660 = vpop.f32.mrf.mxu0
        %v661 = vadd.f32 0.0, %v660
        %v662 = vpop.f32.mrf.mxu0
        %v663 = vadd.f32 0.0, %v662
        %v664 = vpop.f32.mrf.mxu0
        %v665 = vadd.f32 0.0, %v664
        %666 = vmatprep.mubr.bf16.mxu0 0
        %667 = vmatmul.mubr.bf16.gmra.mxu0 %v573
        %v668 = vpop.f32.mrf.mxu0
        %v669 = vadd.f32 0.0, %v668
        %v670 = vpop.f32.mrf.mxu0
        %v671 = vadd.f32 0.0, %v670
        %v672 = vpop.f32.mrf.mxu0
        %v673 = vadd.f32 0.0, %v672
        %v674 = vpop.f32.mrf.mxu0
        %v675 = vadd.f32 0.0, %v674
        %676 = vmatprep.mubr.bf16.mxu0 0
        %677 = vmatmul.mubr.bf16.gmra.mxu0 %v576
        %v678 = vpop.f32.mrf.mxu0
        %v679 = vadd.f32 0.0, %v678
        %v680 = vpop.f32.mrf.mxu0
        %v681 = vadd.f32 0.0, %v680
        %v682 = vpop.f32.mrf.mxu0
        %v683 = vadd.f32 0.0, %v682
        %v684 = vpop.f32.mrf.mxu0
        %v685 = vadd.f32 0.0, %v684
        %686 = vmatprep.mubr.bf16.mxu0 0
        %687 = vmatmul.mubr.bf16.gmra.mxu0 %v579
        %v688 = vpop.f32.mrf.mxu0
        %v689 = vadd.f32 0.0, %v688
        %v690 = vpop.f32.mrf.mxu0
        %v691 = vadd.f32 0.0, %v690
        %v692 = vpop.f32.mrf.mxu0
        %v693 = vadd.f32 0.0, %v692
        %v694 = vpop.f32.mrf.mxu0
        %v695 = vadd.f32 0.0, %v694
        %696 = vmatprep.mubr.bf16.mxu0 0
        %697 = vmatmul.mubr.bf16.gmra.mxu0 %v582
        %v698 = vpop.f32.mrf.mxu0
        %v699 = vadd.f32 0.0, %v698
        %v700 = vpop.f32.mrf.mxu0
        %v701 = vadd.f32 0.0, %v700
        %v702 = vpop.f32.mrf.mxu0
        %v703 = vadd.f32 0.0, %v702
        %v704 = vpop.f32.mrf.mxu0
        %v705 = vadd.f32 0.0, %v704
        %706 = vmatprep.mubr.bf16.mxu0 0
        %707 = vmatmul.mubr.bf16.gmra.mxu0 %v585
        %v708 = vpop.f32.mrf.mxu0
        %v709 = vadd.f32 0.0, %v708
        %v710 = vpop.f32.mrf.mxu0
        %v711 = vadd.f32 0.0, %v710
        %v712 = vpop.f32.mrf.mxu0
        %v713 = vadd.f32 0.0, %v712
        %v714 = vpop.f32.mrf.mxu0
        %v715 = vadd.f32 0.0, %v714
        %716 = vmatprep.mubr.bf16.mxu0 0
        %717 = vmatmul.mubr.bf16.gmra.mxu0 %v588
        %v718 = vpop.f32.mrf.mxu0
        %v719 = vadd.f32 0.0, %v718
        %v720 = vpop.f32.mrf.mxu0
        %v721 = vadd.f32 0.0, %v720
        %v722 = vpop.f32.mrf.mxu0
        %v723 = vadd.f32 0.0, %v722
        %v724 = vpop.f32.mrf.mxu0
        %v725 = vadd.f32 0.0, %v724
        %726 = vmatprep.mubr.bf16.mxu0 0
        %727 = vmatmul.mubr.bf16.gmra.mxu0 %v591
        %v728 = vpop.f32.mrf.mxu0
        %v729 = vadd.f32 0.0, %v728
        %v730 = vpop.f32.mrf.mxu0
        %v731 = vadd.f32 0.0, %v730
        %v732 = vpop.f32.mrf.mxu0
        %v733 = vadd.f32 0.0, %v732
        %v734 = vpop.f32.mrf.mxu0
        %v735 = vadd.f32 0.0, %v734
        %736 = vmatprep.mubr.bf16.mxu0 0
        %737 = vmatmul.mubr.bf16.gmra.mxu0 %v594
        %v738 = vpop.f32.mrf.mxu0
        %v739 = vadd.f32 0.0, %v738
        %v740 = vpop.f32.mrf.mxu0
        %v741 = vadd.f32 0.0, %v740
        %v742 = vpop.f32.mrf.mxu0
        %v743 = vadd.f32 0.0, %v742
        %v744 = vpop.f32.mrf.mxu0
        %v745 = vadd.f32 0.0, %v744
        %746 = vmatprep.mubr.bf16.mxu0 0
        %747 = vmatmul.mubr.bf16.gmra.mxu0 %v597
        %v748 = vpop.f32.mrf.mxu0
        %v749 = vadd.f32 0.0, %v748
        %v750 = vpop.f32.mrf.mxu0
        %v751 = vadd.f32 0.0, %v750
        %v752 = vpop.f32.mrf.mxu0
        %v753 = vadd.f32 0.0, %v752
        %v754 = vpop.f32.mrf.mxu0
        %v755 = vadd.f32 0.0, %v754
        %756 = vmatprep.mubr.bf16.mxu0 0
        %757 = vmatmul.mubr.bf16.gmra.mxu0 %v600
        %v758 = vpop.f32.mrf.mxu0
        %v759 = vadd.f32 0.0, %v758
        %v760 = vpop.f32.mrf.mxu0
        %v761 = vadd.f32 0.0, %v760
        %v762 = vpop.f32.mrf.mxu0
        %v763 = vadd.f32 0.0, %v762
        %v764 = vpop.f32.mrf.mxu0
        %v765 = vadd.f32 0.0, %v764
        %766 = vmatprep.mubr.bf16.mxu0 0
        %767 = vmatmul.mubr.bf16.gmra.mxu0 %v603
        %v768 = vpop.f32.mrf.mxu0
        %v769 = vadd.f32 0.0, %v768
        %v770 = vpop.f32.mrf.mxu0
        %v771 = vadd.f32 0.0, %v770
        %v772 = vpop.f32.mrf.mxu0
        %v773 = vadd.f32 0.0, %v772
        %v774 = vpop.f32.mrf.mxu0
        %v775 = vadd.f32 0.0, %v774
        %776 = vmatprep.mubr.bf16.mxu0 0
        %777 = vmatmul.mubr.bf16.gmra.mxu0 %v606
        %v778 = vpop.f32.mrf.mxu0
        %v779 = vadd.f32 0.0, %v778
        %v780 = vpop.f32.mrf.mxu0
        %v781 = vadd.f32 0.0, %v780
        %v782 = vpop.f32.mrf.mxu0
        %v783 = vadd.f32 0.0, %v782
        %v784 = vpop.f32.mrf.mxu0
        %v785 = vadd.f32 0.0, %v784
        %786 = vmatprep.mubr.bf16.mxu0 0
        %787 = vmatmul.mubr.bf16.gmra.mxu0 %v609
        %v788 = vpop.f32.mrf.mxu0
        %v789 = vadd.f32 0.0, %v788
        %v790 = vpop.f32.mrf.mxu0
        %v791 = vadd.f32 0.0, %v790
        %v792 = vpop.f32.mrf.mxu0
        %v793 = vadd.f32 0.0, %v792
        %v794 = vpop.f32.mrf.mxu0
        %v795 = vadd.f32 0.0, %v794
        %796 = vmatprep.mubr.bf16.mxu0 0
        %797 = vmatmul.mubr.bf16.gmra.mxu0 %v612
        %v798 = vpop.f32.mrf.mxu0
        %v799 = vadd.f32 0.0, %v798
        %v800 = vpop.f32.mrf.mxu0
        %v801 = vadd.f32 0.0, %v800
        %v802 = vpop.f32.mrf.mxu0
        %v803 = vadd.f32 0.0, %v802
        %v804 = vpop.f32.mrf.mxu0
        %v805 = vadd.f32 0.0, %v804
        %806 = vdwg.mxu0
        %807 = vmatprep.subr.bf16.mxu0 0
        %808 = vmatpush1.bf16.msra.mxu0 0
        %809 = vmatprep.subr.bf16.mxu0 0
        %810 = vmatpush1.bf16.msra.mxu0 0
        %811 = vmatprep.subr.bf16.mxu0 0
        %812 = vmatpush1.bf16.msra.mxu0 0
        %813 = vmatprep.subr.bf16.mxu0 0
        %814 = vmatpush1.bf16.msra.mxu0 0
        %815 = vmatprep.subr.bf16.mxu0 0
        %816 = vmatpush1.bf16.msra.mxu0 0
        %817 = vmatprep.subr.bf16.mxu0 0
        %818 = vmatpush1.bf16.msra.mxu0 0
        %819 = vmatprep.subr.bf16.mxu0 0
        %820 = vmatpush1.bf16.msra.mxu0 0
        %821 = vmatprep.subr.bf16.mxu0 %v556
        %822 = vmatpush1.bf16.msra.mxu0 %v555
        %823 = vmatprep.subr.bf16.mxu0 0
        %824 = vmatpush2.bf16.msra.mxu0 0
        %825 = vmatprep.subr.bf16.mxu0 0
        %826 = vmatpush2.bf16.msra.mxu0 0
        %827 = vmatprep.subr.bf16.mxu0 0
        %828 = vmatpush2.bf16.msra.mxu0 0
        %829 = vmatprep.subr.bf16.mxu0 0
        %830 = vmatpush2.bf16.msra.mxu0 0
        %831 = vmatprep.subr.bf16.mxu0 0
        %832 = vmatpush2.bf16.msra.mxu0 0
        %833 = vmatprep.subr.bf16.mxu0 0
        %834 = vmatpush2.bf16.msra.mxu0 0
        %835 = vmatprep.subr.bf16.mxu0 0
        %836 = vmatpush2.bf16.msra.mxu0 0
        %837 = vmatprep.subr.bf16.mxu0 0
        %838 = vmatpush2.bf16.msra.mxu0 0
        %839 = vmatprep.mubr.bf16.mxu0 0
        %840 = vmatmul.mubr.bf16.gmra.mxu0 %v567
        %v841 = vpop.f32.mrf.mxu0
        %v842 = vadd.f32 0.0, %v841
        %v843 = vpop.f32.mrf.mxu0
        %v844 = vadd.f32 0.0, %v843
        %v845 = vpop.f32.mrf.mxu0
        %v846 = vadd.f32 0.0, %v845
        %v847 = vpop.f32.mrf.mxu0
        %v848 = vadd.f32 0.0, %v847
        %849 = vmatprep.mubr.bf16.mxu0 0
        %850 = vmatmul.mubr.bf16.gmra.mxu0 %v570
        %v851 = vpop.f32.mrf.mxu0
        %v852 = vadd.f32 0.0, %v851
        %v853 = vpop.f32.mrf.mxu0
        %v854 = vadd.f32 0.0, %v853
        %v855 = vpop.f32.mrf.mxu0
        %v856 = vadd.f32 0.0, %v855
        %v857 = vpop.f32.mrf.mxu0
        %v858 = vadd.f32 0.0, %v857
        %859 = vmatprep.mubr.bf16.mxu0 0
        %860 = vmatmul.mubr.bf16.gmra.mxu0 %v573
        %v861 = vpop.f32.mrf.mxu0
        %v862 = vadd.f32 0.0, %v861
        %v863 = vpop.f32.mrf.mxu0
        %v864 = vadd.f32 0.0, %v863
        %v865 = vpop.f32.mrf.mxu0
        %v866 = vadd.f32 0.0, %v865
        %v867 = vpop.f32.mrf.mxu0
        %v868 = vadd.f32 0.0, %v867
        %869 = vmatprep.mubr.bf16.mxu0 0
        %870 = vmatmul.mubr.bf16.gmra.mxu0 %v576
        %v871 = vpop.f32.mrf.mxu0
        %v872 = vadd.f32 0.0, %v871
        %v873 = vpop.f32.mrf.mxu0
        %v874 = vadd.f32 0.0, %v873
        %v875 = vpop.f32.mrf.mxu0
        %v876 = vadd.f32 0.0, %v875
        %v877 = vpop.f32.mrf.mxu0
        %v878 = vadd.f32 0.0, %v877
        %879 = vmatprep.mubr.bf16.mxu0 0
        %880 = vmatmul.mubr.bf16.gmra.mxu0 %v579
        %v881 = vpop.f32.mrf.mxu0
        %v882 = vadd.f32 0.0, %v881
        %v883 = vpop.f32.mrf.mxu0
        %v884 = vadd.f32 0.0, %v883
        %v885 = vpop.f32.mrf.mxu0
        %v886 = vadd.f32 0.0, %v885
        %v887 = vpop.f32.mrf.mxu0
        %v888 = vadd.f32 0.0, %v887
        %889 = vmatprep.mubr.bf16.mxu0 0
        %890 = vmatmul.mubr.bf16.gmra.mxu0 %v582
        %v891 = vpop.f32.mrf.mxu0
        %v892 = vadd.f32 0.0, %v891
        %v893 = vpop.f32.mrf.mxu0
        %v894 = vadd.f32 0.0, %v893
        %v895 = vpop.f32.mrf.mxu0
        %v896 = vadd.f32 0.0, %v895
        %v897 = vpop.f32.mrf.mxu0
        %v898 = vadd.f32 0.0, %v897
        %899 = vmatprep.mubr.bf16.mxu0 0
        %900 = vmatmul.mubr.bf16.gmra.mxu0 %v585
        %v901 = vpop.f32.mrf.mxu0
        %v902 = vadd.f32 0.0, %v901
        %v903 = vpop.f32.mrf.mxu0
        %v904 = vadd.f32 0.0, %v903
        %v905 = vpop.f32.mrf.mxu0
        %v906 = vadd.f32 0.0, %v905
        %v907 = vpop.f32.mrf.mxu0
        %v908 = vadd.f32 0.0, %v907
        %909 = vmatprep.mubr.bf16.mxu0 0
        %910 = vmatmul.mubr.bf16.gmra.mxu0 %v588
        %v911 = vpop.f32.mrf.mxu0
        %v912 = vadd.f32 0.0, %v911
        %v913 = vpop.f32.mrf.mxu0
        %v914 = vadd.f32 0.0, %v913
        %v915 = vpop.f32.mrf.mxu0
        %v916 = vadd.f32 0.0, %v915
        %v917 = vpop.f32.mrf.mxu0
        %v918 = vadd.f32 0.0, %v917
        %919 = vmatprep.mubr.bf16.mxu0 0
        %920 = vmatmul.mubr.bf16.gmra.mxu0 %v591
        %v921 = vpop.f32.mrf.mxu0
        %v922 = vadd.f32 0.0, %v921
        %v923 = vpop.f32.mrf.mxu0
        %v924 = vadd.f32 0.0, %v923
        %v925 = vpop.f32.mrf.mxu0
        %v926 = vadd.f32 0.0, %v925
        %v927 = vpop.f32.mrf.mxu0
        %v928 = vadd.f32 0.0, %v927
        %929 = vmatprep.mubr.bf16.mxu0 0
        %930 = vmatmul.mubr.bf16.gmra.mxu0 %v594
        %v931 = vpop.f32.mrf.mxu0
        %v932 = vadd.f32 0.0, %v931
        %v933 = vpop.f32.mrf.mxu0
        %v934 = vadd.f32 0.0, %v933
        %v935 = vpop.f32.mrf.mxu0
        %v936 = vadd.f32 0.0, %v935
        %v937 = vpop.f32.mrf.mxu0
        %v938 = vadd.f32 0.0, %v937
        %939 = vmatprep.mubr.bf16.mxu0 0
        %940 = vmatmul.mubr.bf16.gmra.mxu0 %v597
        %v941 = vpop.f32.mrf.mxu0
        %v942 = vadd.f32 0.0, %v941
        %v943 = vpop.f32.mrf.mxu0
        %v944 = vadd.f32 0.0, %v943
        %v945 = vpop.f32.mrf.mxu0
        %v946 = vadd.f32 0.0, %v945
        %v947 = vpop.f32.mrf.mxu0
        %v948 = vadd.f32 0.0, %v947
        %949 = vmatprep.mubr.bf16.mxu0 0
        %950 = vmatmul.mubr.bf16.gmra.mxu0 %v600
        %v951 = vpop.f32.mrf.mxu0
        %v952 = vadd.f32 0.0, %v951
        %v953 = vpop.f32.mrf.mxu0
        %v954 = vadd.f32 0.0, %v953
        %v955 = vpop.f32.mrf.mxu0
        %v956 = vadd.f32 0.0, %v955
        %v957 = vpop.f32.mrf.mxu0
        %v958 = vadd.f32 0.0, %v957
        %959 = vmatprep.mubr.bf16.mxu0 0
        %960 = vmatmul.mubr.bf16.gmra.mxu0 %v603
        %v961 = vpop.f32.mrf.mxu0
        %v962 = vadd.f32 0.0, %v961
        %v963 = vpop.f32.mrf.mxu0
        %v964 = vadd.f32 0.0, %v963
        %v965 = vpop.f32.mrf.mxu0
        %v966 = vadd.f32 0.0, %v965
        %v967 = vpop.f32.mrf.mxu0
        %v968 = vadd.f32 0.0, %v967
        %969 = vmatprep.mubr.bf16.mxu0 0
        %970 = vmatmul.mubr.bf16.gmra.mxu0 %v606
        %v971 = vpop.f32.mrf.mxu0
        %v972 = vadd.f32 0.0, %v971
        %v973 = vpop.f32.mrf.mxu0
        %v974 = vadd.f32 0.0, %v973
        %v975 = vpop.f32.mrf.mxu0
        %v976 = vadd.f32 0.0, %v975
        %v977 = vpop.f32.mrf.mxu0
        %v978 = vadd.f32 0.0, %v977
        %979 = vmatprep.mubr.bf16.mxu0 0
        %980 = vmatmul.mubr.bf16.gmra.mxu0 %v609
        %v981 = vpop.f32.mrf.mxu0
        %v982 = vadd.f32 0.0, %v981
        %v983 = vpop.f32.mrf.mxu0
        %v984 = vadd.f32 0.0, %v983
        %v985 = vpop.f32.mrf.mxu0
        %v986 = vadd.f32 0.0, %v985
        %v987 = vpop.f32.mrf.mxu0
        %v988 = vadd.f32 0.0, %v987
        %989 = vmatprep.mubr.bf16.mxu0 0
        %990 = vmatmul.mubr.bf16.gmra.mxu0 %v612
        %v991 = vpop.f32.mrf.mxu0
        %v992 = vadd.f32 0.0, %v991
        %v993 = vpop.f32.mrf.mxu0
        %v994 = vadd.f32 0.0, %v993
        %v995 = vpop.f32.mrf.mxu0
        %v996 = vadd.f32 0.0, %v995
        %v997 = vpop.f32.mrf.mxu0
        %v998 = vadd.f32 0.0, %v997
        %999 = vdwg.mxu0
        %1000 = vmatprep.subr.bf16.mxu0 0
        %1001 = vmatpush1.bf16.msra.mxu0 0
        %1002 = vmatprep.subr.bf16.mxu0 0
        %1003 = vmatpush1.bf16.msra.mxu0 0
        %1004 = vmatprep.subr.bf16.mxu0 0
        %1005 = vmatpush1.bf16.msra.mxu0 0
        %1006 = vmatprep.subr.bf16.mxu0 0
        %1007 = vmatpush1.bf16.msra.mxu0 0
        %1008 = vmatprep.subr.bf16.mxu0 0
        %1009 = vmatpush1.bf16.msra.mxu0 0
        %1010 = vmatprep.subr.bf16.mxu0 0
        %1011 = vmatpush1.bf16.msra.mxu0 0
        %1012 = vmatprep.subr.bf16.mxu0 0
        %1013 = vmatpush1.bf16.msra.mxu0 0
        %1014 = vmatprep.subr.bf16.mxu0 %v558
        %1015 = vmatpush1.bf16.msra.mxu0 %v557
        %1016 = vmatprep.subr.bf16.mxu0 0
        %1017 = vmatpush2.bf16.msra.mxu0 0
        %1018 = vmatprep.subr.bf16.mxu0 0
        %1019 = vmatpush2.bf16.msra.mxu0 0
        %1020 = vmatprep.subr.bf16.mxu0 0
        %1021 = vmatpush2.bf16.msra.mxu0 0
        %1022 = vmatprep.subr.bf16.mxu0 0
        %1023 = vmatpush2.bf16.msra.mxu0 0
        %1024 = vmatprep.subr.bf16.mxu0 0
        %1025 = vmatpush2.bf16.msra.mxu0 0
        %1026 = vmatprep.subr.bf16.mxu0 0
        %1027 = vmatpush2.bf16.msra.mxu0 0
        %1028 = vmatprep.subr.bf16.mxu0 0
        %1029 = vmatpush2.bf16.msra.mxu0 0
        %1030 = vmatprep.subr.bf16.mxu0 0
        %1031 = vmatpush2.bf16.msra.mxu0 0
        %1032 = vmatprep.mubr.bf16.mxu0 0
        %1033 = vmatmul.mubr.bf16.gmra.mxu0 %v567
        %v1034 = vpop.f32.mrf.mxu0
        %v1035 = vadd.f32 0.0, %v1034
        %v1036 = vpop.f32.mrf.mxu0
        %v1037 = vadd.f32 0.0, %v1036
        %v1038 = vpop.f32.mrf.mxu0
        %v1039 = vadd.f32 0.0, %v1038
        %v1040 = vpop.f32.mrf.mxu0
        %v1041 = vadd.f32 0.0, %v1040
        %1042 = vmatprep.mubr.bf16.mxu0 0
        %1043 = vmatmul.mubr.bf16.gmra.mxu0 %v570
        %v1044 = vpop.f32.mrf.mxu0
        %v1045 = vadd.f32 0.0, %v1044
        %v1046 = vpop.f32.mrf.mxu0
        %v1047 = vadd.f32 0.0, %v1046
        %v1048 = vpop.f32.mrf.mxu0
        %v1049 = vadd.f32 0.0, %v1048
        %v1050 = vpop.f32.mrf.mxu0
        %v1051 = vadd.f32 0.0, %v1050
        %1052 = vmatprep.mubr.bf16.mxu0 0
        %1053 = vmatmul.mubr.bf16.gmra.mxu0 %v573
        %v1054 = vpop.f32.mrf.mxu0
        %v1055 = vadd.f32 0.0, %v1054
        %v1056 = vpop.f32.mrf.mxu0
        %v1057 = vadd.f32 0.0, %v1056
        %v1058 = vpop.f32.mrf.mxu0
        %v1059 = vadd.f32 0.0, %v1058
        %v1060 = vpop.f32.mrf.mxu0
        %v1061 = vadd.f32 0.0, %v1060
        %1062 = vmatprep.mubr.bf16.mxu0 0
        %1063 = vmatmul.mubr.bf16.gmra.mxu0 %v576
        %v1064 = vpop.f32.mrf.mxu0
        %v1065 = vadd.f32 0.0, %v1064
        %v1066 = vpop.f32.mrf.mxu0
        %v1067 = vadd.f32 0.0, %v1066
        %v1068 = vpop.f32.mrf.mxu0
        %v1069 = vadd.f32 0.0, %v1068
        %v1070 = vpop.f32.mrf.mxu0
        %v1071 = vadd.f32 0.0, %v1070
        %1072 = vmatprep.mubr.bf16.mxu0 0
        %1073 = vmatmul.mubr.bf16.gmra.mxu0 %v579
        %v1074 = vpop.f32.mrf.mxu0
        %v1075 = vadd.f32 0.0, %v1074
        %v1076 = vpop.f32.mrf.mxu0
        %v1077 = vadd.f32 0.0, %v1076
        %v1078 = vpop.f32.mrf.mxu0
        %v1079 = vadd.f32 0.0, %v1078
        %v1080 = vpop.f32.mrf.mxu0
        %v1081 = vadd.f32 0.0, %v1080
        %1082 = vmatprep.mubr.bf16.mxu0 0
        %1083 = vmatmul.mubr.bf16.gmra.mxu0 %v582
        %v1084 = vpop.f32.mrf.mxu0
        %v1085 = vadd.f32 0.0, %v1084
        %v1086 = vpop.f32.mrf.mxu0
        %v1087 = vadd.f32 0.0, %v1086
        %v1088 = vpop.f32.mrf.mxu0
        %v1089 = vadd.f32 0.0, %v1088
        %v1090 = vpop.f32.mrf.mxu0
        %v1091 = vadd.f32 0.0, %v1090
        %1092 = vmatprep.mubr.bf16.mxu0 0
        %1093 = vmatmul.mubr.bf16.gmra.mxu0 %v585
        %v1094 = vpop.f32.mrf.mxu0
        %v1095 = vadd.f32 0.0, %v1094
        %v1096 = vpop.f32.mrf.mxu0
        %v1097 = vadd.f32 0.0, %v1096
        %v1098 = vpop.f32.mrf.mxu0
        %v1099 = vadd.f32 0.0, %v1098
        %v1100 = vpop.f32.mrf.mxu0
        %v1101 = vadd.f32 0.0, %v1100
        %1102 = vmatprep.mubr.bf16.mxu0 0
        %1103 = vmatmul.mubr.bf16.gmra.mxu0 %v588
        %v1104 = vpop.f32.mrf.mxu0
        %v1105 = vadd.f32 0.0, %v1104
        %v1106 = vpop.f32.mrf.mxu0
        %v1107 = vadd.f32 0.0, %v1106
        %v1108 = vpop.f32.mrf.mxu0
        %v1109 = vadd.f32 0.0, %v1108
        %v1110 = vpop.f32.mrf.mxu0
        %v1111 = vadd.f32 0.0, %v1110
        %1112 = vmatprep.mubr.bf16.mxu0 0
        %1113 = vmatmul.mubr.bf16.gmra.mxu0 %v591
        %v1114 = vpop.f32.mrf.mxu0
        %v1115 = vadd.f32 0.0, %v1114
        %v1116 = vpop.f32.mrf.mxu0
        %v1117 = vadd.f32 0.0, %v1116
        %v1118 = vpop.f32.mrf.mxu0
        %v1119 = vadd.f32 0.0, %v1118
        %v1120 = vpop.f32.mrf.mxu0
        %v1121 = vadd.f32 0.0, %v1120
        %1122 = vmatprep.mubr.bf16.mxu0 0
        %1123 = vmatmul.mubr.bf16.gmra.mxu0 %v594
        %v1124 = vpop.f32.mrf.mxu0
        %v1125 = vadd.f32 0.0, %v1124
        %v1126 = vpop.f32.mrf.mxu0
        %v1127 = vadd.f32 0.0, %v1126
        %v1128 = vpop.f32.mrf.mxu0
        %v1129 = vadd.f32 0.0, %v1128
        %v1130 = vpop.f32.mrf.mxu0
        %v1131 = vadd.f32 0.0, %v1130
        %1132 = vmatprep.mubr.bf16.mxu0 0
        %1133 = vmatmul.mubr.bf16.gmra.mxu0 %v597
        %v1134 = vpop.f32.mrf.mxu0
        %v1135 = vadd.f32 0.0, %v1134
        %v1136 = vpop.f32.mrf.mxu0
        %v1137 = vadd.f32 0.0, %v1136
        %v1138 = vpop.f32.mrf.mxu0
        %v1139 = vadd.f32 0.0, %v1138
        %v1140 = vpop.f32.mrf.mxu0
        %v1141 = vadd.f32 0.0, %v1140
        %1142 = vmatprep.mubr.bf16.mxu0 0
        %1143 = vmatmul.mubr.bf16.gmra.mxu0 %v600
        %v1144 = vpop.f32.mrf.mxu0
        %v1145 = vadd.f32 0.0, %v1144
        %v1146 = vpop.f32.mrf.mxu0
        %v1147 = vadd.f32 0.0, %v1146
        %v1148 = vpop.f32.mrf.mxu0
        %v1149 = vadd.f32 0.0, %v1148
        %v1150 = vpop.f32.mrf.mxu0
        %v1151 = vadd.f32 0.0, %v1150
        %1152 = vmatprep.mubr.bf16.mxu0 0
        %1153 = vmatmul.mubr.bf16.gmra.mxu0 %v603
        %v1154 = vpop.f32.mrf.mxu0
        %v1155 = vadd.f32 0.0, %v1154
        %v1156 = vpop.f32.mrf.mxu0
        %v1157 = vadd.f32 0.0, %v1156
        %v1158 = vpop.f32.mrf.mxu0
        %v1159 = vadd.f32 0.0, %v1158
        %v1160 = vpop.f32.mrf.mxu0
        %v1161 = vadd.f32 0.0, %v1160
        %1162 = vmatprep.mubr.bf16.mxu0 0
        %1163 = vmatmul.mubr.bf16.gmra.mxu0 %v606
        %v1164 = vpop.f32.mrf.mxu0
        %v1165 = vadd.f32 0.0, %v1164
        %v1166 = vpop.f32.mrf.mxu0
        %v1167 = vadd.f32 0.0, %v1166
        %v1168 = vpop.f32.mrf.mxu0
        %v1169 = vadd.f32 0.0, %v1168
        %v1170 = vpop.f32.mrf.mxu0
        %v1171 = vadd.f32 0.0, %v1170
        %1172 = vmatprep.mubr.bf16.mxu0 0
        %1173 = vmatmul.mubr.bf16.gmra.mxu0 %v609
        %v1174 = vpop.f32.mrf.mxu0
        %v1175 = vadd.f32 0.0, %v1174
        %v1176 = vpop.f32.mrf.mxu0
        %v1177 = vadd.f32 0.0, %v1176
        %v1178 = vpop.f32.mrf.mxu0
        %v1179 = vadd.f32 0.0, %v1178
        %v1180 = vpop.f32.mrf.mxu0
        %v1181 = vadd.f32 0.0, %v1180
        %1182 = vmatprep.mubr.bf16.mxu0 0
        %1183 = vmatmul.mubr.bf16.gmra.mxu0 %v612
        %v1184 = vpop.f32.mrf.mxu0
        %v1185 = vadd.f32 0.0, %v1184
        %v1186 = vpop.f32.mrf.mxu0
        %v1187 = vadd.f32 0.0, %v1186
        %v1188 = vpop.f32.mrf.mxu0
        %v1189 = vadd.f32 0.0, %v1188
        %v1190 = vpop.f32.mrf.mxu0
        %v1191 = vadd.f32 0.0, %v1190
        %1192 = vdwg.mxu0
        %1193 = vst [vmem:[%s396] sm:$0xff] %v649
        %1194 = vst [vmem:[%s396 + $0x8] sm:$0xff] %v651
        %1195 = vst [vmem:[%s396 + $0x10] sm:$0xff] %v842
        %1196 = vst [vmem:[%s396 + $0x18] sm:$0xff] %v844
        %1197 = vst [vmem:[%s396 + $0x20] sm:$0xff] %v1035
        %1198 = vst [vmem:[%s396 + $0x28] sm:$0xff] %v1037
        %1199 = vst [vmem:[%s396 + $0x30] sm:$0xff] %v653
        %1200 = vst [vmem:[%s396 + $0x38] sm:$0xff] %v655
        %1201 = vst [vmem:[%s396 + $0x40] sm:$0xff] %v846
        %1202 = vst [vmem:[%s396 + $0x48] sm:$0xff] %v848
        %1203 = vst [vmem:[%s396 + $0x50] sm:$0xff] %v1039
        %1204 = vst [vmem:[%s396 + $0x58] sm:$0xff] %v1041
        %1205 = vst [vmem:[%s396 + $0x60] sm:$0xff] %v659
        %1206 = vst [vmem:[%s396 + $0x68] sm:$0xff] %v661
        %1207 = vst [vmem:[%s396 + $0x70] sm:$0xff] %v852
        %1208 = vst [vmem:[%s396 + $0x78] sm:$0xff] %v854
        %1209 = vst [vmem:[%s396 + $0x80] sm:$0xff] %v1045
        %1210 = vst [vmem:[%s396 + $0x88] sm:$0xff] %v1047
        %1211 = vst [vmem:[%s396 + $0x90] sm:$0xff] %v663
        %1212 = vst [vmem:[%s396 + $0x98] sm:$0xff] %v665
        %1213 = vst [vmem:[%s396 + $0xa0] sm:$0xff] %v856
        %1214 = vst [vmem:[%s396 + $0xa8] sm:$0xff] %v858
        %1215 = vst [vmem:[%s396 + $0xb0] sm:$0xff] %v1049
        %1216 = vst [vmem:[%s396 + $0xb8] sm:$0xff] %v1051
        %1217 = vst [vmem:[%s396 + $0xc0] sm:$0xff] %v669
        %1218 = vst [vmem:[%s396 + $0xc8] sm:$0xff] %v671
        %1219 = vst [vmem:[%s396 + $0xd0] sm:$0xff] %v862
        %1220 = vst [vmem:[%s396 + $0xd8] sm:$0xff] %v864
        %1221 = vst [vmem:[%s396 + $0xe0] sm:$0xff] %v1055
        %1222 = vst [vmem:[%s396 + $0xe8] sm:$0xff] %v1057
        %1223 = vst [vmem:[%s396 + $0xf0] sm:$0xff] %v673
        %1224 = vst [vmem:[%s396 + $0xf8] sm:$0xff] %v675
        %1225 = vst [vmem:[%s396 + $0x100] sm:$0xff] %v866
        %1226 = vst [vmem:[%s396 + $0x108] sm:$0xff] %v868
        %1227 = vst [vmem:[%s396 + $0x110] sm:$0xff] %v1059
        %1228 = vst [vmem:[%s396 + $0x118] sm:$0xff] %v1061
        %1229 = vst [vmem:[%s396 + $0x120] sm:$0xff] %v679
        %1230 = vst [vmem:[%s396 + $0x128] sm:$0xff] %v681
        %1231 = vst [vmem:[%s396 + $0x130] sm:$0xff] %v872
        %1232 = vst [vmem:[%s396 + $0x138] sm:$0xff] %v874
        %1233 = vst [vmem:[%s396 + $0x140] sm:$0xff] %v1065
        %1234 = vst [vmem:[%s396 + $0x148] sm:$0xff] %v1067
        %1235 = vst [vmem:[%s396 + $0x150] sm:$0xff] %v683
        %1236 = vst [vmem:[%s396 + $0x158] sm:$0xff] %v685
        %1237 = vst [vmem:[%s396 + $0x160] sm:$0xff] %v876
        %1238 = vst [vmem:[%s396 + $0x168] sm:$0xff] %v878
        %1239 = vst [vmem:[%s396 + $0x170] sm:$0xff] %v1069
        %1240 = vst [vmem:[%s396 + $0x178] sm:$0xff] %v1071
        %1241 = vst [vmem:[%s396 + $0x180] sm:$0xff] %v689
        %1242 = vst [vmem:[%s396 + $0x188] sm:$0xff] %v691
        %1243 = vst [vmem:[%s396 + $0x190] sm:$0xff] %v882
        %1244 = vst [vmem:[%s396 + $0x198] sm:$0xff] %v884
        %1245 = vst [vmem:[%s396 + $0x1a0] sm:$0xff] %v1075
        %1246 = vst [vmem:[%s396 + $0x1a8] sm:$0xff] %v1077
        %1247 = vst [vmem:[%s396 + $0x1b0] sm:$0xff] %v693
        %1248 = vst [vmem:[%s396 + $0x1b8] sm:$0xff] %v695
        %1249 = vst [vmem:[%s396 + $0x1c0] sm:$0xff] %v886
        %1250 = vst [vmem:[%s396 + $0x1c8] sm:$0xff] %v888
        %1251 = vst [vmem:[%s396 + $0x1d0] sm:$0xff] %v1079
        %1252 = vst [vmem:[%s396 + $0x1d8] sm:$0xff] %v1081
        %1253 = vst [vmem:[%s396 + $0x1e0] sm:$0xff] %v699
        %1254 = vst [vmem:[%s396 + $0x1e8] sm:$0xff] %v701
        %1255 = vst [vmem:[%s396 + $0x1f0] sm:$0xff] %v892
        %1256 = vst [vmem:[%s396 + $0x1f8] sm:$0xff] %v894
        %1257 = vst [vmem:[%s396 + $0x200] sm:$0xff] %v1085
        %1258 = vst [vmem:[%s396 + $0x208] sm:$0xff] %v1087
        %1259 = vst [vmem:[%s396 + $0x210] sm:$0xff] %v703
        %1260 = vst [vmem:[%s396 + $0x218] sm:$0xff] %v705
        %1261 = vst [vmem:[%s396 + $0x220] sm:$0xff] %v896
        %1262 = vst [vmem:[%s396 + $0x228] sm:$0xff] %v898
        %1263 = vst [vmem:[%s396 + $0x230] sm:$0xff] %v1089
        %1264 = vst [vmem:[%s396 + $0x238] sm:$0xff] %v1091
        %1265 = vst [vmem:[%s396 + $0x240] sm:$0xff] %v709
        %1266 = vst [vmem:[%s396 + $0x248] sm:$0xff] %v711
        %1267 = vst [vmem:[%s396 + $0x250] sm:$0xff] %v902
        %1268 = vst [vmem:[%s396 + $0x258] sm:$0xff] %v904
        %1269 = vst [vmem:[%s396 + $0x260] sm:$0xff] %v1095
        %1270 = vst [vmem:[%s396 + $0x268] sm:$0xff] %v1097
        %1271 = vst [vmem:[%s396 + $0x270] sm:$0xff] %v713
        %1272 = vst [vmem:[%s396 + $0x278] sm:$0xff] %v715
        %1273 = vst [vmem:[%s396 + $0x280] sm:$0xff] %v906
        %1274 = vst [vmem:[%s396 + $0x288] sm:$0xff] %v908
        %1275 = vst [vmem:[%s396 + $0x290] sm:$0xff] %v1099
        %1276 = vst [vmem:[%s396 + $0x298] sm:$0xff] %v1101
        %1277 = vst [vmem:[%s396 + $0x2a0] sm:$0xff] %v719
        %1278 = vst [vmem:[%s396 + $0x2a8] sm:$0xff] %v721
        %1279 = vst [vmem:[%s396 + $0x2b0] sm:$0xff] %v912
        %1280 = vst [vmem:[%s396 + $0x2b8] sm:$0xff] %v914
        %1281 = vst [vmem:[%s396 + $0x2c0] sm:$0xff] %v1105
        %1282 = vst [vmem:[%s396 + $0x2c8] sm:$0xff] %v1107
        %1283 = vst [vmem:[%s396 + $0x2d0] sm:$0xff] %v723
        %1284 = vst [vmem:[%s396 + $0x2d8] sm:$0xff] %v725
        %1285 = vst [vmem:[%s396 + $0x2e0] sm:$0xff] %v916
        %1286 = vst [vmem:[%s396 + $0x2e8] sm:$0xff] %v918
        %1287 = vst [vmem:[%s396 + $0x2f0] sm:$0xff] %v1109
        %1288 = vst [vmem:[%s396 + $0x2f8] sm:$0xff] %v1111
        %1289 = vst [vmem:[%s396 + $0x300] sm:$0xff] %v729
        %1290 = vst [vmem:[%s396 + $0x308] sm:$0xff] %v731
        %1291 = vst [vmem:[%s396 + $0x310] sm:$0xff] %v922
        %1292 = vst [vmem:[%s396 + $0x318] sm:$0xff] %v924
        %1293 = vst [vmem:[%s396 + $0x320] sm:$0xff] %v1115
        %1294 = vst [vmem:[%s396 + $0x328] sm:$0xff] %v1117
        %1295 = vst [vmem:[%s396 + $0x330] sm:$0xff] %v733
        %1296 = vst [vmem:[%s396 + $0x338] sm:$0xff] %v735
        %1297 = vst [vmem:[%s396 + $0x340] sm:$0xff] %v926
        %1298 = vst [vmem:[%s396 + $0x348] sm:$0xff] %v928
        %1299 = vst [vmem:[%s396 + $0x350] sm:$0xff] %v1119
        %1300 = vst [vmem:[%s396 + $0x358] sm:$0xff] %v1121
        %1301 = vst [vmem:[%s396 + $0x360] sm:$0xff] %v739
        %1302 = vst [vmem:[%s396 + $0x368] sm:$0xff] %v741
        %1303 = vst [vmem:[%s396 + $0x370] sm:$0xff] %v932
        %1304 = vst [vmem:[%s396 + $0x378] sm:$0xff] %v934
        %1305 = vst [vmem:[%s396 + $0x380] sm:$0xff] %v1125
        %1306 = vst [vmem:[%s396 + $0x388] sm:$0xff] %v1127
        %1307 = vst [vmem:[%s396 + $0x390] sm:$0xff] %v743
        %1308 = vst [vmem:[%s396 + $0x398] sm:$0xff] %v745
        %1309 = vst [vmem:[%s396 + $0x3a0] sm:$0xff] %v936
        %1310 = vst [vmem:[%s396 + $0x3a8] sm:$0xff] %v938
        %1311 = vst [vmem:[%s396 + $0x3b0] sm:$0xff] %v1129
        %1312 = vst [vmem:[%s396 + $0x3b8] sm:$0xff] %v1131
        %1313 = vst [vmem:[%s396 + $0x3c0] sm:$0xff] %v749
        %1314 = vst [vmem:[%s396 + $0x3c8] sm:$0xff] %v751
        %1315 = vst [vmem:[%s396 + $0x3d0] sm:$0xff] %v942
        %1316 = vst [vmem:[%s396 + $0x3d8] sm:$0xff] %v944
        %1317 = vst [vmem:[%s396 + $0x3e0] sm:$0xff] %v1135
        %1318 = vst [vmem:[%s396 + $0x3e8] sm:$0xff] %v1137
        %1319 = vst [vmem:[%s396 + $0x3f0] sm:$0xff] %v753
        %1320 = vst [vmem:[%s396 + $0x3f8] sm:$0xff] %v755
        %1321 = vst [vmem:[%s396 + $0x400] sm:$0xff] %v946
        %1322 = vst [vmem:[%s396 + $0x408] sm:$0xff] %v948
        %1323 = vst [vmem:[%s396 + $0x410] sm:$0xff] %v1139
        %1324 = vst [vmem:[%s396 + $0x418] sm:$0xff] %v1141
        %1325 = vst [vmem:[%s396 + $0x420] sm:$0xff] %v759
        %1326 = vst [vmem:[%s396 + $0x428] sm:$0xff] %v761
        %1327 = vst [vmem:[%s396 + $0x430] sm:$0xff] %v952
        %1328 = vst [vmem:[%s396 + $0x438] sm:$0xff] %v954
        %1329 = vst [vmem:[%s396 + $0x440] sm:$0xff] %v1145
        %1330 = vst [vmem:[%s396 + $0x448] sm:$0xff] %v1147
        %1331 = vst [vmem:[%s396 + $0x450] sm:$0xff] %v763
        %1332 = vst [vmem:[%s396 + $0x458] sm:$0xff] %v765
        %1333 = vst [vmem:[%s396 + $0x460] sm:$0xff] %v956
        %1334 = vst [vmem:[%s396 + $0x468] sm:$0xff] %v958
        %1335 = vst [vmem:[%s396 + $0x470] sm:$0xff] %v1149
        %1336 = vst [vmem:[%s396 + $0x478] sm:$0xff] %v1151
        %1337 = vst [vmem:[%s396 + $0x480] sm:$0xff] %v769
        %1338 = vst [vmem:[%s396 + $0x488] sm:$0xff] %v771
        %1339 = vst [vmem:[%s396 + $0x490] sm:$0xff] %v962
        %1340 = vst [vmem:[%s396 + $0x498] sm:$0xff] %v964
        %1341 = vst [vmem:[%s396 + $0x4a0] sm:$0xff] %v1155
        %1342 = vst [vmem:[%s396 + $0x4a8] sm:$0xff] %v1157
        %1343 = vst [vmem:[%s396 + $0x4b0] sm:$0xff] %v773
        %1344 = vst [vmem:[%s396 + $0x4b8] sm:$0xff] %v775
        %1345 = vst [vmem:[%s396 + $0x4c0] sm:$0xff] %v966
        %1346 = vst [vmem:[%s396 + $0x4c8] sm:$0xff] %v968
        %1347 = vst [vmem:[%s396 + $0x4d0] sm:$0xff] %v1159
        %1348 = vst [vmem:[%s396 + $0x4d8] sm:$0xff] %v1161
        %1349 = vst [vmem:[%s396 + $0x4e0] sm:$0xff] %v779
        %1350 = vst [vmem:[%s396 + $0x4e8] sm:$0xff] %v781
        %1351 = vst [vmem:[%s396 + $0x4f0] sm:$0xff] %v972
        %1352 = vst [vmem:[%s396 + $0x4f8] sm:$0xff] %v974
        %1353 = vst [vmem:[%s396 + $0x500] sm:$0xff] %v1165
        %1354 = vst [vmem:[%s396 + $0x508] sm:$0xff] %v1167
        %1355 = vst [vmem:[%s396 + $0x510] sm:$0xff] %v783
        %1356 = vst [vmem:[%s396 + $0x518] sm:$0xff] %v785
        %1357 = vst [vmem:[%s396 + $0x520] sm:$0xff] %v976
        %1358 = vst [vmem:[%s396 + $0x528] sm:$0xff] %v978
        %1359 = vst [vmem:[%s396 + $0x530] sm:$0xff] %v1169
        %1360 = vst [vmem:[%s396 + $0x538] sm:$0xff] %v1171
        %1361 = vst [vmem:[%s396 + $0x540] sm:$0xff] %v789
        %1362 = vst [vmem:[%s396 + $0x548] sm:$0xff] %v791
        %1363 = vst [vmem:[%s396 + $0x550] sm:$0xff] %v982
        %1364 = vst [vmem:[%s396 + $0x558] sm:$0xff] %v984
        %1365 = vst [vmem:[%s396 + $0x560] sm:$0xff] %v1175
        %1366 = vst [vmem:[%s396 + $0x568] sm:$0xff] %v1177
        %1367 = vst [vmem:[%s396 + $0x570] sm:$0xff] %v793
        %1368 = vst [vmem:[%s396 + $0x578] sm:$0xff] %v795
        %1369 = vst [vmem:[%s396 + $0x580] sm:$0xff] %v986
        %1370 = vst [vmem:[%s396 + $0x588] sm:$0xff] %v988
        %1371 = vst [vmem:[%s396 + $0x590] sm:$0xff] %v1179
        %1372 = vst [vmem:[%s396 + $0x598] sm:$0xff] %v1181
        %1373 = vst [vmem:[%s396 + $0x5a0] sm:$0xff] %v799
        %1374 = vst [vmem:[%s396 + $0x5a8] sm:$0xff] %v801
        %1375 = vst [vmem:[%s396 + $0x5b0] sm:$0xff] %v992
        %1376 = vst [vmem:[%s396 + $0x5b8] sm:$0xff] %v994
        %1377 = vst [vmem:[%s396 + $0x5c0] sm:$0xff] %v1185
        %1378 = vst [vmem:[%s396 + $0x5c8] sm:$0xff] %v1187
        %1379 = vst [vmem:[%s396 + $0x5d0] sm:$0xff] %v803
        %1380 = vst [vmem:[%s396 + $0x5d8] sm:$0xff] %v805
        %1381 = vst [vmem:[%s396 + $0x5e0] sm:$0xff] %v996
        %1382 = vst [vmem:[%s396 + $0x5e8] sm:$0xff] %v998
        %1383 = vst [vmem:[%s396 + $0x5f0] sm:$0xff] %v1189
        %1384 = vst [vmem:[%s396 + $0x5f8] sm:$0xff] %v1191
        %v1385 = vpack.c.bf16 %v653, %v649
        %v1386 = vpack.c.bf16 %v655, %v651
        %v1387 = vpack.c.bf16 %v846, %v842
        %v1388 = vpack.c.bf16 %v848, %v844
        %v1389 = vpack.c.bf16 %v1039, %v1035
        %v1390 = vpack.c.bf16 %v1041, %v1037
        %v1391 = vpack.c.bf16 %v663, %v659
        %v1392 = vpack.c.bf16 %v665, %v661
        %v1393 = vpack.c.bf16 %v856, %v852
        %v1394 = vpack.c.bf16 %v858, %v854
        %v1395 = vpack.c.bf16 %v1049, %v1045
        %v1396 = vpack.c.bf16 %v1051, %v1047
        %v1397 = vpack.c.bf16 %v673, %v669
        %v1398 = vpack.c.bf16 %v675, %v671
        %v1399 = vpack.c.bf16 %v866, %v862
        %v1400 = vpack.c.bf16 %v868, %v864
        %v1401 = vpack.c.bf16 %v1059, %v1055
        %v1402 = vpack.c.bf16 %v1061, %v1057
        %v1403 = vpack.c.bf16 %v683, %v679
        %v1404 = vpack.c.bf16 %v685, %v681
        %v1405 = vpack.c.bf16 %v876, %v872
        %v1406 = vpack.c.bf16 %v878, %v874
        %v1407 = vpack.c.bf16 %v1069, %v1065
        %v1408 = vpack.c.bf16 %v1071, %v1067
        %v1409 = vpack.c.bf16 %v693, %v689
        %v1410 = vpack.c.bf16 %v695, %v691
        %v1411 = vpack.c.bf16 %v886, %v882
        %v1412 = vpack.c.bf16 %v888, %v884
        %v1413 = vpack.c.bf16 %v1079, %v1075
        %v1414 = vpack.c.bf16 %v1081, %v1077
        %v1415 = vpack.c.bf16 %v703, %v699
        %v1416 = vpack.c.bf16 %v705, %v701
        %v1417 = vpack.c.bf16 %v896, %v892
        %v1418 = vpack.c.bf16 %v898, %v894
        %v1419 = vpack.c.bf16 %v1089, %v1085
        %v1420 = vpack.c.bf16 %v1091, %v1087
        %v1421 = vpack.c.bf16 %v713, %v709
        %v1422 = vpack.c.bf16 %v715, %v711
        %v1423 = vpack.c.bf16 %v906, %v902
        %v1424 = vpack.c.bf16 %v908, %v904
        %v1425 = vpack.c.bf16 %v1099, %v1095
        %v1426 = vpack.c.bf16 %v1101, %v1097
        %v1427 = vpack.c.bf16 %v723, %v719
        %v1428 = vpack.c.bf16 %v725, %v721
        %v1429 = vpack.c.bf16 %v916, %v912
        %v1430 = vpack.c.bf16 %v918, %v914
        %v1431 = vpack.c.bf16 %v1109, %v1105
        %v1432 = vpack.c.bf16 %v1111, %v1107
        %v1433 = vpack.c.bf16 %v733, %v729
        %v1434 = vpack.c.bf16 %v735, %v731
        %v1435 = vpack.c.bf16 %v926, %v922
        %v1436 = vpack.c.bf16 %v928, %v924
        %v1437 = vpack.c.bf16 %v1119, %v1115
        %v1438 = vpack.c.bf16 %v1121, %v1117
        %v1439 = vpack.c.bf16 %v743, %v739
        %v1440 = vpack.c.bf16 %v745, %v741
        %v1441 = vpack.c.bf16 %v936, %v932
        %v1442 = vpack.c.bf16 %v938, %v934
        %v1443 = vpack.c.bf16 %v1129, %v1125
        %v1444 = vpack.c.bf16 %v1131, %v1127
        %v1445 = vpack.c.bf16 %v753, %v749
        %v1446 = vpack.c.bf16 %v755, %v751
        %v1447 = vpack.c.bf16 %v946, %v942
        %v1448 = vpack.c.bf16 %v948, %v944
        %v1449 = vpack.c.bf16 %v1139, %v1135
        %v1450 = vpack.c.bf16 %v1141, %v1137
        %v1451 = vpack.c.bf16 %v763, %v759
        %v1452 = vpack.c.bf16 %v765, %v761
        %v1453 = vpack.c.bf16 %v956, %v952
        %v1454 = vpack.c.bf16 %v958, %v954
        %v1455 = vpack.c.bf16 %v1149, %v1145
        %v1456 = vpack.c.bf16 %v1151, %v1147
        %v1457 = vpack.c.bf16 %v773, %v769
        %v1458 = vpack.c.bf16 %v775, %v771
        %v1459 = vpack.c.bf16 %v966, %v962
        %v1460 = vpack.c.bf16 %v968, %v964
        %v1461 = vpack.c.bf16 %v1159, %v1155
        %v1462 = vpack.c.bf16 %v1161, %v1157
        %v1463 = vpack.c.bf16 %v783, %v779
        %v1464 = vpack.c.bf16 %v785, %v781
        %v1465 = vpack.c.bf16 %v976, %v972
        %v1466 = vpack.c.bf16 %v978, %v974
        %v1467 = vpack.c.bf16 %v1169, %v1165
        %v1468 = vpack.c.bf16 %v1171, %v1167
        %v1469 = vpack.c.bf16 %v793, %v789
        %v1470 = vpack.c.bf16 %v795, %v791
        %v1471 = vpack.c.bf16 %v986, %v982
        %v1472 = vpack.c.bf16 %v988, %v984
        %v1473 = vpack.c.bf16 %v1179, %v1175
        %v1474 = vpack.c.bf16 %v1181, %v1177
        %v1475 = vpack.c.bf16 %v803, %v799
        %v1476 = vpack.c.bf16 %v805, %v801
        %v1477 = vpack.c.bf16 %v996, %v992
        %v1478 = vpack.c.bf16 %v998, %v994
        %v1479 = vpack.c.bf16 %v1189, %v1185
        %v1480 = vpack.c.bf16 %v1191, %v1187
        %v1481 = vld [vmem:[#allocation5] sm:$0xf]
        %v1482 = vld [vmem:[#allocation5 + $0x4] sm:$0xf]
        %v1483 = vld [vmem:[#allocation5 + $0x8] sm:$0xf]
        %v1484 = vld [vmem:[#allocation5 + $0xc] sm:$0xf]
        %v1485 = vld [vmem:[#allocation5 + $0x10] sm:$0xf]
        %v1486 = vld [vmem:[#allocation5 + $0x14] sm:$0xf]
        %v1487 = vld [vmem:[#allocation5 + $0x18] sm:$0xf]
        %v1488 = vld [vmem:[#allocation5 + $0x1c] sm:$0xf]
        %v1489 = vld [vmem:[#allocation5 + $0x20] sm:$0xf]
        %v1490 = vld [vmem:[#allocation5 + $0x24] sm:$0xf]
        %v1491 = vld [vmem:[#allocation5 + $0x28] sm:$0xf]
        %v1492 = vld [vmem:[#allocation5 + $0x2c] sm:$0xf]
        %v1493 = vld [vmem:[#allocation5 + $0x30] sm:$0xf]
        %v1494 = vld [vmem:[#allocation5 + $0x34] sm:$0xf]
        %v1495 = vld [vmem:[#allocation5 + $0x38] sm:$0xf]
        %v1496 = vld [vmem:[#allocation5 + $0x3c] sm:$0xf]
        %v1497 = vld [vmem:[#allocation5 + $0x40] sm:$0xf]
        %v1498 = vld [vmem:[#allocation5 + $0x44] sm:$0xf]
        %v1499 = vld [vmem:[#allocation5 + $0x48] sm:$0xf]
        %v1500 = vld [vmem:[#allocation5 + $0x4c] sm:$0xf]
        %v1501 = vld [vmem:[#allocation5 + $0x50] sm:$0xf]
        %v1502 = vld [vmem:[#allocation5 + $0x54] sm:$0xf]
        %v1503 = vld [vmem:[#allocation5 + $0x58] sm:$0xf]
        %v1504 = vld [vmem:[#allocation5 + $0x5c] sm:$0xf]
        %v1505 = vld [vmem:[#allocation5 + $0x60] sm:$0xf]
        %v1506 = vld [vmem:[#allocation5 + $0x64] sm:$0xf]
        %v1507 = vld [vmem:[#allocation5 + $0x68] sm:$0xf]
        %v1508 = vld [vmem:[#allocation5 + $0x6c] sm:$0xf]
        %v1509 = vld [vmem:[#allocation5 + $0x70] sm:$0xf]
        %v1510 = vld [vmem:[#allocation5 + $0x74] sm:$0xf]
        %v1511 = vld [vmem:[#allocation5 + $0x78] sm:$0xf]
        %v1512 = vld [vmem:[#allocation5 + $0x7c] sm:$0xf]
        %v1513 = vld [vmem:[#allocation5 + $0x80] sm:$0xf]
        %v1514 = vld [vmem:[#allocation5 + $0x84] sm:$0xf]
        %v1515 = vld [vmem:[#allocation5 + $0x88] sm:$0xf]
        %v1516 = vld [vmem:[#allocation5 + $0x8c] sm:$0xf]
        %v1517 = vld [vmem:[#allocation5 + $0x90] sm:$0xf]
        %v1518 = vld [vmem:[#allocation5 + $0x94] sm:$0xf]
        %v1519 = vld [vmem:[#allocation5 + $0x98] sm:$0xf]
        %v1520 = vld [vmem:[#allocation5 + $0x9c] sm:$0xf]
        %v1521 = vld [vmem:[#allocation5 + $0xa0] sm:$0xf]
        %v1522 = vld [vmem:[#allocation5 + $0xa4] sm:$0xf]
        %v1523 = vld [vmem:[#allocation5 + $0xa8] sm:$0xf]
        %v1524 = vld [vmem:[#allocation5 + $0xac] sm:$0xf]
        %v1525 = vld [vmem:[#allocation5 + $0xb0] sm:$0xf]
        %v1526 = vld [vmem:[#allocation5 + $0xb4] sm:$0xf]
        %v1527 = vld [vmem:[#allocation5 + $0xb8] sm:$0xf]
        %v1528 = vld [vmem:[#allocation5 + $0xbc] sm:$0xf]
        %v1529 = vld [vmem:[#allocation5 + $0xc0] sm:$0xf]
        %v1530 = vld [vmem:[#allocation5 + $0xc4] sm:$0xf]
        %v1531 = vld [vmem:[#allocation5 + $0xc8] sm:$0xf]
        %v1532 = vld [vmem:[#allocation5 + $0xcc] sm:$0xf]
        %v1533 = vld [vmem:[#allocation5 + $0xd0] sm:$0xf]
        %v1534 = vld [vmem:[#allocation5 + $0xd4] sm:$0xf]
        %v1535 = vld [vmem:[#allocation5 + $0xd8] sm:$0xf]
        %v1536 = vld [vmem:[#allocation5 + $0xdc] sm:$0xf]
        %v1537 = vld [vmem:[#allocation5 + $0xe0] sm:$0xf]
        %v1538 = vld [vmem:[#allocation5 + $0xe4] sm:$0xf]
        %v1539 = vld [vmem:[#allocation5 + $0xe8] sm:$0xf]
        %v1540 = vld [vmem:[#allocation5 + $0xec] sm:$0xf]
        %v1541 = vld [vmem:[#allocation5 + $0xf0] sm:$0xf]
        %v1542 = vld [vmem:[#allocation5 + $0xf4] sm:$0xf]
        %v1543 = vld [vmem:[#allocation5 + $0xf8] sm:$0xf]
        %v1544 = vld [vmem:[#allocation5 + $0xfc] sm:$0xf]
        %v1545 = vld [vmem:[#allocation5 + $0x100] sm:$0xf]
        %v1546 = vld [vmem:[#allocation5 + $0x104] sm:$0xf]
        %v1547 = vld [vmem:[#allocation5 + $0x108] sm:$0xf]
        %v1548 = vld [vmem:[#allocation5 + $0x10c] sm:$0xf]
        %v1549 = vld [vmem:[#allocation5 + $0x110] sm:$0xf]
        %v1550 = vld [vmem:[#allocation5 + $0x114] sm:$0xf]
        %v1551 = vld [vmem:[#allocation5 + $0x118] sm:$0xf]
        %v1552 = vld [vmem:[#allocation5 + $0x11c] sm:$0xf]
        %v1553 = vld [vmem:[#allocation5 + $0x120] sm:$0xf]
        %v1554 = vld [vmem:[#allocation5 + $0x124] sm:$0xf]
        %v1555 = vld [vmem:[#allocation5 + $0x128] sm:$0xf]
        %v1556 = vld [vmem:[#allocation5 + $0x12c] sm:$0xf]
        %v1557 = vld [vmem:[#allocation5 + $0x130] sm:$0xf]
        %v1558 = vld [vmem:[#allocation5 + $0x134] sm:$0xf]
        %v1559 = vld [vmem:[#allocation5 + $0x138] sm:$0xf]
        %v1560 = vld [vmem:[#allocation5 + $0x13c] sm:$0xf]
        %v1561 = vld [vmem:[#allocation5 + $0x140] sm:$0xf]
        %v1562 = vld [vmem:[#allocation5 + $0x144] sm:$0xf]
        %v1563 = vld [vmem:[#allocation5 + $0x148] sm:$0xf]
        %v1564 = vld [vmem:[#allocation5 + $0x14c] sm:$0xf]
        %v1565 = vld [vmem:[#allocation5 + $0x150] sm:$0xf]
        %v1566 = vld [vmem:[#allocation5 + $0x154] sm:$0xf]
        %v1567 = vld [vmem:[#allocation5 + $0x158] sm:$0xf]
        %v1568 = vld [vmem:[#allocation5 + $0x15c] sm:$0xf]
        %v1569 = vld [vmem:[#allocation5 + $0x160] sm:$0xf]
        %v1570 = vld [vmem:[#allocation5 + $0x164] sm:$0xf]
        %v1571 = vld [vmem:[#allocation5 + $0x168] sm:$0xf]
        %v1572 = vld [vmem:[#allocation5 + $0x16c] sm:$0xf]
        %v1573 = vld [vmem:[#allocation5 + $0x170] sm:$0xf]
        %v1574 = vld [vmem:[#allocation5 + $0x174] sm:$0xf]
        %v1575 = vld [vmem:[#allocation5 + $0x178] sm:$0xf]
        %v1576 = vld [vmem:[#allocation5 + $0x17c] sm:$0xf]
        %v1577 = vld [vmem:[#allocation7] sm:$0x1]
        %v1579 = vlaneseq
        %v1580 = vshrl.u32 %v1579, 7
        %v1581 = vsub.s32 0, %v1580
        %v1582 = vrot.slane %v1577, %v1581
        %v1680 = vunpack.c.l.b16 %v1481
        %v1681 = vunpack.c.l.b16 %v1482
        %v1682 = vunpack.c.l.b16 %v1483
        %v1683 = vunpack.c.l.b16 %v1484
        %v1684 = vunpack.c.l.b16 %v1485
        %v1685 = vunpack.c.l.b16 %v1486
        %v1686 = vunpack.c.l.b16 %v1487
        %v1687 = vunpack.c.l.b16 %v1488
        %v1688 = vunpack.c.l.b16 %v1489
        %v1689 = vunpack.c.l.b16 %v1490
        %v1690 = vunpack.c.l.b16 %v1491
        %v1691 = vunpack.c.l.b16 %v1492
        %v1692 = vunpack.c.l.b16 %v1493
        %v1693 = vunpack.c.l.b16 %v1494
        %v1694 = vunpack.c.l.b16 %v1495
        %v1695 = vunpack.c.l.b16 %v1496
        %v1696 = vunpack.c.l.b16 %v1497
        %v1697 = vunpack.c.l.b16 %v1498
        %v1698 = vunpack.c.l.b16 %v1499
        %v1699 = vunpack.c.l.b16 %v1500
        %v1700 = vunpack.c.l.b16 %v1501
        %v1701 = vunpack.c.l.b16 %v1502
        %v1702 = vunpack.c.l.b16 %v1503
        %v1703 = vunpack.c.l.b16 %v1504
        %v1704 = vunpack.c.l.b16 %v1505
        %v1705 = vunpack.c.l.b16 %v1506
        %v1706 = vunpack.c.l.b16 %v1507
        %v1707 = vunpack.c.l.b16 %v1508
        %v1708 = vunpack.c.l.b16 %v1509
        %v1709 = vunpack.c.l.b16 %v1510
        %v1710 = vunpack.c.l.b16 %v1511
        %v1711 = vunpack.c.l.b16 %v1512
        %v1712 = vunpack.c.l.b16 %v1513
        %v1713 = vunpack.c.l.b16 %v1514
        %v1714 = vunpack.c.l.b16 %v1515
        %v1715 = vunpack.c.l.b16 %v1516
        %v1716 = vunpack.c.l.b16 %v1517
        %v1717 = vunpack.c.l.b16 %v1518
        %v1718 = vunpack.c.l.b16 %v1519
        %v1719 = vunpack.c.l.b16 %v1520
        %v1720 = vunpack.c.l.b16 %v1521
        %v1721 = vunpack.c.l.b16 %v1522
        %v1722 = vunpack.c.l.b16 %v1523
        %v1723 = vunpack.c.l.b16 %v1524
        %v1724 = vunpack.c.l.b16 %v1525
        %v1725 = vunpack.c.l.b16 %v1526
        %v1726 = vunpack.c.l.b16 %v1527
        %v1727 = vunpack.c.l.b16 %v1528
        %v1728 = vunpack.c.l.b16 %v1529
        %v1729 = vunpack.c.l.b16 %v1530
        %v1730 = vunpack.c.l.b16 %v1531
        %v1731 = vunpack.c.l.b16 %v1532
        %v1732 = vunpack.c.l.b16 %v1533
        %v1733 = vunpack.c.l.b16 %v1534
        %v1734 = vunpack.c.l.b16 %v1535
        %v1735 = vunpack.c.l.b16 %v1536
        %v1736 = vunpack.c.l.b16 %v1537
        %v1737 = vunpack.c.l.b16 %v1538
        %v1738 = vunpack.c.l.b16 %v1539
        %v1739 = vunpack.c.l.b16 %v1540
        %v1740 = vunpack.c.l.b16 %v1541
        %v1741 = vunpack.c.l.b16 %v1542
        %v1742 = vunpack.c.l.b16 %v1543
        %v1743 = vunpack.c.l.b16 %v1544
        %v1744 = vunpack.c.l.b16 %v1545
        %v1745 = vunpack.c.l.b16 %v1546
        %v1746 = vunpack.c.l.b16 %v1547
        %v1747 = vunpack.c.l.b16 %v1548
        %v1748 = vunpack.c.l.b16 %v1549
        %v1749 = vunpack.c.l.b16 %v1550
        %v1750 = vunpack.c.l.b16 %v1551
        %v1751 = vunpack.c.l.b16 %v1552
        %v1752 = vunpack.c.l.b16 %v1553
        %v1753 = vunpack.c.l.b16 %v1554
        %v1754 = vunpack.c.l.b16 %v1555
        %v1755 = vunpack.c.l.b16 %v1556
        %v1756 = vunpack.c.l.b16 %v1557
        %v1757 = vunpack.c.l.b16 %v1558
        %v1758 = vunpack.c.l.b16 %v1559
        %v1759 = vunpack.c.l.b16 %v1560
        %v1760 = vunpack.c.l.b16 %v1561
        %v1761 = vunpack.c.l.b16 %v1562
        %v1762 = vunpack.c.l.b16 %v1563
        %v1763 = vunpack.c.l.b16 %v1564
        %v1764 = vunpack.c.l.b16 %v1565
        %v1765 = vunpack.c.l.b16 %v1566
        %v1766 = vunpack.c.l.b16 %v1567
        %v1767 = vunpack.c.l.b16 %v1568
        %v1768 = vunpack.c.l.b16 %v1569
        %v1769 = vunpack.c.l.b16 %v1570
        %v1770 = vunpack.c.l.b16 %v1571
        %v1771 = vunpack.c.l.b16 %v1572
        %v1772 = vunpack.c.l.b16 %v1573
        %v1773 = vunpack.c.l.b16 %v1574
        %v1774 = vunpack.c.l.b16 %v1575
        %v1775 = vunpack.c.l.b16 %v1576
        %v1776 = vpack.c.b16 %v1681, %v1680
        %v1777 = vpack.c.b16 %v1683, %v1682
        %v1778 = vpack.c.b16 %v1685, %v1684
        %v1779 = vpack.c.b16 %v1687, %v1686
        %v1780 = vpack.c.b16 %v1689, %v1688
        %v1781 = vpack.c.b16 %v1691, %v1690
        %v1782 = vpack.c.b16 %v1693, %v1692
        %v1783 = vpack.c.b16 %v1695, %v1694
        %v1784 = vpack.c.b16 %v1697, %v1696
        %v1785 = vpack.c.b16 %v1699, %v1698
        %v1786 = vpack.c.b16 %v1701, %v1700
        %v1787 = vpack.c.b16 %v1703, %v1702
        %v1788 = vpack.c.b16 %v1705, %v1704
        %v1789 = vpack.c.b16 %v1707, %v1706
        %v1790 = vpack.c.b16 %v1709, %v1708
        %v1791 = vpack.c.b16 %v1711, %v1710
        %v1792 = vpack.c.b16 %v1713, %v1712
        %v1793 = vpack.c.b16 %v1715, %v1714
        %v1794 = vpack.c.b16 %v1717, %v1716
        %v1795 = vpack.c.b16 %v1719, %v1718
        %v1796 = vpack.c.b16 %v1721, %v1720
        %v1797 = vpack.c.b16 %v1723, %v1722
        %v1798 = vpack.c.b16 %v1725, %v1724
        %v1799 = vpack.c.b16 %v1727, %v1726
        %v1800 = vpack.c.b16 %v1729, %v1728
        %v1801 = vpack.c.b16 %v1731, %v1730
        %v1802 = vpack.c.b16 %v1733, %v1732
        %v1803 = vpack.c.b16 %v1735, %v1734
        %v1804 = vpack.c.b16 %v1737, %v1736
        %v1805 = vpack.c.b16 %v1739, %v1738
        %v1806 = vpack.c.b16 %v1741, %v1740
        %v1807 = vpack.c.b16 %v1743, %v1742
        %v1808 = vpack.c.b16 %v1745, %v1744
        %v1809 = vpack.c.b16 %v1747, %v1746
        %v1810 = vpack.c.b16 %v1749, %v1748
        %v1811 = vpack.c.b16 %v1751, %v1750
        %v1812 = vpack.c.b16 %v1753, %v1752
        %v1813 = vpack.c.b16 %v1755, %v1754
        %v1814 = vpack.c.b16 %v1757, %v1756
        %v1815 = vpack.c.b16 %v1759, %v1758
        %v1816 = vpack.c.b16 %v1761, %v1760
        %v1817 = vpack.c.b16 %v1763, %v1762
        %v1818 = vpack.c.b16 %v1765, %v1764
        %v1819 = vpack.c.b16 %v1767, %v1766
        %v1820 = vpack.c.b16 %v1769, %v1768
        %v1821 = vpack.c.b16 %v1771, %v1770
        %v1822 = vpack.c.b16 %v1773, %v1772
        %v1823 = vpack.c.b16 %v1775, %v1774
        %1872 = vmatprep.subr.bf16.mxu0 0
        %1873 = vmatpush1.bf16.msra.mxu0 %v1783
        %1874 = vmatprep.subr.bf16.mxu0 0
        %1875 = vmatpush1.bf16.msra.mxu0 %v1782
        %1876 = vmatprep.subr.bf16.mxu0 0
        %1877 = vmatpush1.bf16.msra.mxu0 %v1781
        %1878 = vmatprep.subr.bf16.mxu0 0
        %1879 = vmatpush1.bf16.msra.mxu0 %v1780
        %1880 = vmatprep.subr.bf16.mxu0 0
        %1881 = vmatpush1.bf16.msra.mxu0 %v1779
        %1882 = vmatprep.subr.bf16.mxu0 0
        %1883 = vmatpush1.bf16.msra.mxu0 %v1778
        %1884 = vmatprep.subr.bf16.mxu0 0
        %1885 = vmatpush1.bf16.msra.mxu0 %v1777
        %1886 = vmatprep.subr.bf16.mxu0 0
        %1887 = vmatpush1.bf16.msra.mxu0 %v1776
        %1888 = vmatprep.subr.bf16.mxu0 0
        %1889 = vmatpush2.bf16.msra.mxu0 %v1791
        %1890 = vmatprep.subr.bf16.mxu0 0
        %1891 = vmatpush2.bf16.msra.mxu0 %v1790
        %1892 = vmatprep.subr.bf16.mxu0 0
        %1893 = vmatpush2.bf16.msra.mxu0 %v1789
        %1894 = vmatprep.subr.bf16.mxu0 0
        %1895 = vmatpush2.bf16.msra.mxu0 %v1788
        %1896 = vmatprep.subr.bf16.mxu0 0
        %1897 = vmatpush2.bf16.msra.mxu0 %v1787
        %1898 = vmatprep.subr.bf16.mxu0 0
        %1899 = vmatpush2.bf16.msra.mxu0 %v1786
        %1900 = vmatprep.subr.bf16.mxu0 0
        %1901 = vmatpush2.bf16.msra.mxu0 %v1785
        %1902 = vmatprep.subr.bf16.mxu0 0
        %1903 = vmatpush2.bf16.msra.mxu0 %v1784
        %1904 = vmatprep.mubr.bf16.mxu0 %v1386
        %1905 = vmatmul.mubr.bf16.gmra.mxu0 %v1385
        %v1906 = vpop.f32.mrf.mxu0
        %v1907 = vadd.f32 %v1582, %v1906
        %v1908 = vpop.f32.mrf.mxu0
        %v1909 = vpop.f32.mrf.mxu0
        %v1910 = vadd.f32 %v1582, %v1909
        %v1911 = vpop.f32.mrf.mxu0
        %1912 = vmatprep.mubr.bf16.mxu0 %v1392
        %1913 = vmatmul.mubr.bf16.gmra.mxu0 %v1391
        %v1914 = vpop.f32.mrf.mxu0
        %v1915 = vadd.f32 %v1582, %v1914
        %v1916 = vpop.f32.mrf.mxu0
        %v1917 = vpop.f32.mrf.mxu0
        %v1918 = vadd.f32 %v1582, %v1917
        %v1919 = vpop.f32.mrf.mxu0
        %1920 = vmatprep.mubr.bf16.mxu0 %v1398
        %1921 = vmatmul.mubr.bf16.gmra.mxu0 %v1397
        %v1922 = vpop.f32.mrf.mxu0
        %v1923 = vadd.f32 %v1582, %v1922
        %v1924 = vpop.f32.mrf.mxu0
        %v1925 = vpop.f32.mrf.mxu0
        %v1926 = vadd.f32 %v1582, %v1925
        %v1927 = vpop.f32.mrf.mxu0
        %1928 = vmatprep.mubr.bf16.mxu0 %v1404
        %1929 = vmatmul.mubr.bf16.gmra.mxu0 %v1403
        %v1930 = vpop.f32.mrf.mxu0
        %v1931 = vadd.f32 %v1582, %v1930
        %v1932 = vpop.f32.mrf.mxu0
        %v1933 = vpop.f32.mrf.mxu0
        %v1934 = vadd.f32 %v1582, %v1933
        %v1935 = vpop.f32.mrf.mxu0
        %1936 = vmatprep.mubr.bf16.mxu0 %v1410
        %1937 = vmatmul.mubr.bf16.gmra.mxu0 %v1409
        %v1938 = vpop.f32.mrf.mxu0
        %v1939 = vadd.f32 %v1582, %v1938
        %v1940 = vpop.f32.mrf.mxu0
        %v1941 = vpop.f32.mrf.mxu0
        %v1942 = vadd.f32 %v1582, %v1941
        %v1943 = vpop.f32.mrf.mxu0
        %1944 = vmatprep.mubr.bf16.mxu0 %v1416
        %1945 = vmatmul.mubr.bf16.gmra.mxu0 %v1415
        %v1946 = vpop.f32.mrf.mxu0
        %v1947 = vadd.f32 %v1582, %v1946
        %v1948 = vpop.f32.mrf.mxu0
        %v1949 = vpop.f32.mrf.mxu0
        %v1950 = vadd.f32 %v1582, %v1949
        %v1951 = vpop.f32.mrf.mxu0
        %1952 = vmatprep.mubr.bf16.mxu0 %v1422
        %1953 = vmatmul.mubr.bf16.gmra.mxu0 %v1421
        %v1954 = vpop.f32.mrf.mxu0
        %v1955 = vadd.f32 %v1582, %v1954
        %v1956 = vpop.f32.mrf.mxu0
        %v1957 = vpop.f32.mrf.mxu0
        %v1958 = vadd.f32 %v1582, %v1957
        %v1959 = vpop.f32.mrf.mxu0
        %1960 = vmatprep.mubr.bf16.mxu0 %v1428
        %1961 = vmatmul.mubr.bf16.gmra.mxu0 %v1427
        %v1962 = vpop.f32.mrf.mxu0
        %v1963 = vadd.f32 %v1582, %v1962
        %v1964 = vpop.f32.mrf.mxu0
        %v1965 = vpop.f32.mrf.mxu0
        %v1966 = vadd.f32 %v1582, %v1965
        %v1967 = vpop.f32.mrf.mxu0
        %1968 = vmatprep.mubr.bf16.mxu0 %v1434
        %1969 = vmatmul.mubr.bf16.gmra.mxu0 %v1433
        %v1970 = vpop.f32.mrf.mxu0
        %v1971 = vadd.f32 %v1582, %v1970
        %v1972 = vpop.f32.mrf.mxu0
        %v1973 = vpop.f32.mrf.mxu0
        %v1974 = vadd.f32 %v1582, %v1973
        %v1975 = vpop.f32.mrf.mxu0
        %1976 = vmatprep.mubr.bf16.mxu0 %v1440
        %1977 = vmatmul.mubr.bf16.gmra.mxu0 %v1439
        %v1978 = vpop.f32.mrf.mxu0
        %v1979 = vadd.f32 %v1582, %v1978
        %v1980 = vpop.f32.mrf.mxu0
        %v1981 = vpop.f32.mrf.mxu0
        %v1982 = vadd.f32 %v1582, %v1981
        %v1983 = vpop.f32.mrf.mxu0
        %1984 = vmatprep.mubr.bf16.mxu0 %v1446
        %1985 = vmatmul.mubr.bf16.gmra.mxu0 %v1445
        %v1986 = vpop.f32.mrf.mxu0
        %v1987 = vadd.f32 %v1582, %v1986
        %v1988 = vpop.f32.mrf.mxu0
        %v1989 = vpop.f32.mrf.mxu0
        %v1990 = vadd.f32 %v1582, %v1989
        %v1991 = vpop.f32.mrf.mxu0
        %1992 = vmatprep.mubr.bf16.mxu0 %v1452
        %1993 = vmatmul.mubr.bf16.gmra.mxu0 %v1451
        %v1994 = vpop.f32.mrf.mxu0
        %v1995 = vadd.f32 %v1582, %v1994
        %v1996 = vpop.f32.mrf.mxu0
        %v1997 = vpop.f32.mrf.mxu0
        %v1998 = vadd.f32 %v1582, %v1997
        %v1999 = vpop.f32.mrf.mxu0
        %2000 = vmatprep.mubr.bf16.mxu0 %v1458
        %2001 = vmatmul.mubr.bf16.gmra.mxu0 %v1457
        %v2002 = vpop.f32.mrf.mxu0
        %v2003 = vadd.f32 %v1582, %v2002
        %v2004 = vpop.f32.mrf.mxu0
        %v2005 = vpop.f32.mrf.mxu0
        %v2006 = vadd.f32 %v1582, %v2005
        %v2007 = vpop.f32.mrf.mxu0
        %2008 = vmatprep.mubr.bf16.mxu0 %v1464
        %2009 = vmatmul.mubr.bf16.gmra.mxu0 %v1463
        %v2010 = vpop.f32.mrf.mxu0
        %v2011 = vadd.f32 %v1582, %v2010
        %v2012 = vpop.f32.mrf.mxu0
        %v2013 = vpop.f32.mrf.mxu0
        %v2014 = vadd.f32 %v1582, %v2013
        %v2015 = vpop.f32.mrf.mxu0
        %2016 = vmatprep.mubr.bf16.mxu0 %v1470
        %2017 = vmatmul.mubr.bf16.gmra.mxu0 %v1469
        %v2018 = vpop.f32.mrf.mxu0
        %v2019 = vadd.f32 %v1582, %v2018
        %v2020 = vpop.f32.mrf.mxu0
        %v2021 = vpop.f32.mrf.mxu0
        %v2022 = vadd.f32 %v1582, %v2021
        %v2023 = vpop.f32.mrf.mxu0
        %2024 = vmatprep.mubr.bf16.mxu0 %v1476
        %2025 = vmatmul.mubr.bf16.gmra.mxu0 %v1475
        %v2026 = vpop.f32.mrf.mxu0
        %v2027 = vadd.f32 %v1582, %v2026
        %v2028 = vpop.f32.mrf.mxu0
        %v2029 = vpop.f32.mrf.mxu0
        %v2030 = vadd.f32 %v1582, %v2029
        %v2031 = vpop.f32.mrf.mxu0
        %2032 = vdwg.mxu0
        %2033 = vmatprep.subr.bf16.mxu0 0
        %2034 = vmatpush1.bf16.msra.mxu0 %v1799
        %2035 = vmatprep.subr.bf16.mxu0 0
        %2036 = vmatpush1.bf16.msra.mxu0 %v1798
        %2037 = vmatprep.subr.bf16.mxu0 0
        %2038 = vmatpush1.bf16.msra.mxu0 %v1797
        %2039 = vmatprep.subr.bf16.mxu0 0
        %2040 = vmatpush1.bf16.msra.mxu0 %v1796
        %2041 = vmatprep.subr.bf16.mxu0 0
        %2042 = vmatpush1.bf16.msra.mxu0 %v1795
        %2043 = vmatprep.subr.bf16.mxu0 0
        %2044 = vmatpush1.bf16.msra.mxu0 %v1794
        %2045 = vmatprep.subr.bf16.mxu0 0
        %2046 = vmatpush1.bf16.msra.mxu0 %v1793
        %2047 = vmatprep.subr.bf16.mxu0 0
        %2048 = vmatpush1.bf16.msra.mxu0 %v1792
        %2049 = vmatprep.subr.bf16.mxu0 0
        %2050 = vmatpush2.bf16.msra.mxu0 %v1807
        %2051 = vmatprep.subr.bf16.mxu0 0
        %2052 = vmatpush2.bf16.msra.mxu0 %v1806
        %2053 = vmatprep.subr.bf16.mxu0 0
        %2054 = vmatpush2.bf16.msra.mxu0 %v1805
        %2055 = vmatprep.subr.bf16.mxu0 0
        %2056 = vmatpush2.bf16.msra.mxu0 %v1804
        %2057 = vmatprep.subr.bf16.mxu0 0
        %2058 = vmatpush2.bf16.msra.mxu0 %v1803
        %2059 = vmatprep.subr.bf16.mxu0 0
        %2060 = vmatpush2.bf16.msra.mxu0 %v1802
        %2061 = vmatprep.subr.bf16.mxu0 0
        %2062 = vmatpush2.bf16.msra.mxu0 %v1801
        %2063 = vmatprep.subr.bf16.mxu0 0
        %2064 = vmatpush2.bf16.msra.mxu0 %v1800
        %2065 = vmatprep.mubr.bf16.mxu0 %v1388
        %2066 = vmatmul.mubr.bf16.gmra.mxu0 %v1387
        %v2067 = vpop.f32.mrf.mxu0
        %v2068 = vadd.f32 %v1907, %v2067
        %v2069 = vpop.f32.mrf.mxu0
        %v2070 = vpop.f32.mrf.mxu0
        %v2071 = vadd.f32 %v1910, %v2070
        %v2072 = vpop.f32.mrf.mxu0
        %2073 = vmatprep.mubr.bf16.mxu0 %v1394
        %2074 = vmatmul.mubr.bf16.gmra.mxu0 %v1393
        %v2075 = vpop.f32.mrf.mxu0
        %v2076 = vadd.f32 %v1915, %v2075
        %v2077 = vpop.f32.mrf.mxu0
        %v2078 = vpop.f32.mrf.mxu0
        %v2079 = vadd.f32 %v1918, %v2078
        %v2080 = vpop.f32.mrf.mxu0
        %2081 = vmatprep.mubr.bf16.mxu0 %v1400
        %2082 = vmatmul.mubr.bf16.gmra.mxu0 %v1399
        %v2083 = vpop.f32.mrf.mxu0
        %v2084 = vadd.f32 %v1923, %v2083
        %v2085 = vpop.f32.mrf.mxu0
        %v2086 = vpop.f32.mrf.mxu0
        %v2087 = vadd.f32 %v1926, %v2086
        %v2088 = vpop.f32.mrf.mxu0
        %2089 = vmatprep.mubr.bf16.mxu0 %v1406
        %2090 = vmatmul.mubr.bf16.gmra.mxu0 %v1405
        %v2091 = vpop.f32.mrf.mxu0
        %v2092 = vadd.f32 %v1931, %v2091
        %v2093 = vpop.f32.mrf.mxu0
        %v2094 = vpop.f32.mrf.mxu0
        %v2095 = vadd.f32 %v1934, %v2094
        %v2096 = vpop.f32.mrf.mxu0
        %2097 = vmatprep.mubr.bf16.mxu0 %v1412
        %2098 = vmatmul.mubr.bf16.gmra.mxu0 %v1411
        %v2099 = vpop.f32.mrf.mxu0
        %v2100 = vadd.f32 %v1939, %v2099
        %v2101 = vpop.f32.mrf.mxu0
        %v2102 = vpop.f32.mrf.mxu0
        %v2103 = vadd.f32 %v1942, %v2102
        %v2104 = vpop.f32.mrf.mxu0
        %2105 = vmatprep.mubr.bf16.mxu0 %v1418
        %2106 = vmatmul.mubr.bf16.gmra.mxu0 %v1417
        %v2107 = vpop.f32.mrf.mxu0
        %v2108 = vadd.f32 %v1947, %v2107
        %v2109 = vpop.f32.mrf.mxu0
        %v2110 = vpop.f32.mrf.mxu0
        %v2111 = vadd.f32 %v1950, %v2110
        %v2112 = vpop.f32.mrf.mxu0
        %2113 = vmatprep.mubr.bf16.mxu0 %v1424
        %2114 = vmatmul.mubr.bf16.gmra.mxu0 %v1423
        %v2115 = vpop.f32.mrf.mxu0
        %v2116 = vadd.f32 %v1955, %v2115
        %v2117 = vpop.f32.mrf.mxu0
        %v2118 = vpop.f32.mrf.mxu0
        %v2119 = vadd.f32 %v1958, %v2118
        %v2120 = vpop.f32.mrf.mxu0
        %2121 = vmatprep.mubr.bf16.mxu0 %v1430
        %2122 = vmatmul.mubr.bf16.gmra.mxu0 %v1429
        %v2123 = vpop.f32.mrf.mxu0
        %v2124 = vadd.f32 %v1963, %v2123
        %v2125 = vpop.f32.mrf.mxu0
        %v2126 = vpop.f32.mrf.mxu0
        %v2127 = vadd.f32 %v1966, %v2126
        %v2128 = vpop.f32.mrf.mxu0
        %2129 = vmatprep.mubr.bf16.mxu0 %v1436
        %2130 = vmatmul.mubr.bf16.gmra.mxu0 %v1435
        %v2131 = vpop.f32.mrf.mxu0
        %v2132 = vadd.f32 %v1971, %v2131
        %v2133 = vpop.f32.mrf.mxu0
        %v2134 = vpop.f32.mrf.mxu0
        %v2135 = vadd.f32 %v1974, %v2134
        %v2136 = vpop.f32.mrf.mxu0
        %2137 = vmatprep.mubr.bf16.mxu0 %v1442
        %2138 = vmatmul.mubr.bf16.gmra.mxu0 %v1441
        %v2139 = vpop.f32.mrf.mxu0
        %v2140 = vadd.f32 %v1979, %v2139
        %v2141 = vpop.f32.mrf.mxu0
        %v2142 = vpop.f32.mrf.mxu0
        %v2143 = vadd.f32 %v1982, %v2142
        %v2144 = vpop.f32.mrf.mxu0
        %2145 = vmatprep.mubr.bf16.mxu0 %v1448
        %2146 = vmatmul.mubr.bf16.gmra.mxu0 %v1447
        %v2147 = vpop.f32.mrf.mxu0
        %v2148 = vadd.f32 %v1987, %v2147
        %v2149 = vpop.f32.mrf.mxu0
        %v2150 = vpop.f32.mrf.mxu0
        %v2151 = vadd.f32 %v1990, %v2150
        %v2152 = vpop.f32.mrf.mxu0
        %2153 = vmatprep.mubr.bf16.mxu0 %v1454
        %2154 = vmatmul.mubr.bf16.gmra.mxu0 %v1453
        %v2155 = vpop.f32.mrf.mxu0
        %v2156 = vadd.f32 %v1995, %v2155
        %v2157 = vpop.f32.mrf.mxu0
        %v2158 = vpop.f32.mrf.mxu0
        %v2159 = vadd.f32 %v1998, %v2158
        %v2160 = vpop.f32.mrf.mxu0
        %2161 = vmatprep.mubr.bf16.mxu0 %v1460
        %2162 = vmatmul.mubr.bf16.gmra.mxu0 %v1459
        %v2163 = vpop.f32.mrf.mxu0
        %v2164 = vadd.f32 %v2003, %v2163
        %v2165 = vpop.f32.mrf.mxu0
        %v2166 = vpop.f32.mrf.mxu0
        %v2167 = vadd.f32 %v2006, %v2166
        %v2168 = vpop.f32.mrf.mxu0
        %2169 = vmatprep.mubr.bf16.mxu0 %v1466
        %2170 = vmatmul.mubr.bf16.gmra.mxu0 %v1465
        %v2171 = vpop.f32.mrf.mxu0
        %v2172 = vadd.f32 %v2011, %v2171
        %v2173 = vpop.f32.mrf.mxu0
        %v2174 = vpop.f32.mrf.mxu0
        %v2175 = vadd.f32 %v2014, %v2174
        %v2176 = vpop.f32.mrf.mxu0
        %2177 = vmatprep.mubr.bf16.mxu0 %v1472
        %2178 = vmatmul.mubr.bf16.gmra.mxu0 %v1471
        %v2179 = vpop.f32.mrf.mxu0
        %v2180 = vadd.f32 %v2019, %v2179
        %v2181 = vpop.f32.mrf.mxu0
        %v2182 = vpop.f32.mrf.mxu0
        %v2183 = vadd.f32 %v2022, %v2182
        %v2184 = vpop.f32.mrf.mxu0
        %2185 = vmatprep.mubr.bf16.mxu0 %v1478
        %2186 = vmatmul.mubr.bf16.gmra.mxu0 %v1477
        %v2187 = vpop.f32.mrf.mxu0
        %v2188 = vadd.f32 %v2027, %v2187
        %v2189 = vpop.f32.mrf.mxu0
        %v2190 = vpop.f32.mrf.mxu0
        %v2191 = vadd.f32 %v2030, %v2190
        %v2192 = vpop.f32.mrf.mxu0
        %2193 = vdwg.mxu0
        %2194 = vmatprep.subr.bf16.mxu0 0
        %2195 = vmatpush1.bf16.msra.mxu0 %v1815
        %2196 = vmatprep.subr.bf16.mxu0 0
        %2197 = vmatpush1.bf16.msra.mxu0 %v1814
        %2198 = vmatprep.subr.bf16.mxu0 0
        %2199 = vmatpush1.bf16.msra.mxu0 %v1813
        %2200 = vmatprep.subr.bf16.mxu0 0
        %2201 = vmatpush1.bf16.msra.mxu0 %v1812
        %2202 = vmatprep.subr.bf16.mxu0 0
        %2203 = vmatpush1.bf16.msra.mxu0 %v1811
        %2204 = vmatprep.subr.bf16.mxu0 0
        %2205 = vmatpush1.bf16.msra.mxu0 %v1810
        %2206 = vmatprep.subr.bf16.mxu0 0
        %2207 = vmatpush1.bf16.msra.mxu0 %v1809
        %2208 = vmatprep.subr.bf16.mxu0 0
        %2209 = vmatpush1.bf16.msra.mxu0 %v1808
        %2210 = vmatprep.subr.bf16.mxu0 0
        %2211 = vmatpush2.bf16.msra.mxu0 %v1823
        %2212 = vmatprep.subr.bf16.mxu0 0
        %2213 = vmatpush2.bf16.msra.mxu0 %v1822
        %2214 = vmatprep.subr.bf16.mxu0 0
        %2215 = vmatpush2.bf16.msra.mxu0 %v1821
        %2216 = vmatprep.subr.bf16.mxu0 0
        %2217 = vmatpush2.bf16.msra.mxu0 %v1820
        %2218 = vmatprep.subr.bf16.mxu0 0
        %2219 = vmatpush2.bf16.msra.mxu0 %v1819
        %2220 = vmatprep.subr.bf16.mxu0 0
        %2221 = vmatpush2.bf16.msra.mxu0 %v1818
        %2222 = vmatprep.subr.bf16.mxu0 0
        %2223 = vmatpush2.bf16.msra.mxu0 %v1817
        %2224 = vmatprep.subr.bf16.mxu0 0
        %2225 = vmatpush2.bf16.msra.mxu0 %v1816
        %2226 = vmatprep.mubr.bf16.mxu0 %v1390
        %2227 = vmatmul.mubr.bf16.gmra.mxu0 %v1389
        %v2228 = vpop.f32.mrf.mxu0
        %v2229 = vadd.f32 %v2068, %v2228
        %v2230 = vpop.f32.mrf.mxu0
        %v2231 = vpop.f32.mrf.mxu0
        %v2232 = vadd.f32 %v2071, %v2231
        %v2233 = vpop.f32.mrf.mxu0
        %2234 = vmatprep.mubr.bf16.mxu0 %v1396
        %2235 = vmatmul.mubr.bf16.gmra.mxu0 %v1395
        %v2236 = vpop.f32.mrf.mxu0
        %v2237 = vadd.f32 %v2076, %v2236
        %v2238 = vpop.f32.mrf.mxu0
        %v2239 = vpop.f32.mrf.mxu0
        %v2240 = vadd.f32 %v2079, %v2239
        %v2241 = vpop.f32.mrf.mxu0
        %2242 = vmatprep.mubr.bf16.mxu0 %v1402
        %2243 = vmatmul.mubr.bf16.gmra.mxu0 %v1401
        %v2244 = vpop.f32.mrf.mxu0
        %v2245 = vadd.f32 %v2084, %v2244
        %v2246 = vpop.f32.mrf.mxu0
        %v2247 = vpop.f32.mrf.mxu0
        %v2248 = vadd.f32 %v2087, %v2247
        %v2249 = vpop.f32.mrf.mxu0
        %2250 = vmatprep.mubr.bf16.mxu0 %v1408
        %2251 = vmatmul.mubr.bf16.gmra.mxu0 %v1407
        %v2252 = vpop.f32.mrf.mxu0
        %v2253 = vadd.f32 %v2092, %v2252
        %v2254 = vpop.f32.mrf.mxu0
        %v2255 = vpop.f32.mrf.mxu0
        %v2256 = vadd.f32 %v2095, %v2255
        %v2257 = vpop.f32.mrf.mxu0
        %2258 = vmatprep.mubr.bf16.mxu0 %v1414
        %2259 = vmatmul.mubr.bf16.gmra.mxu0 %v1413
        %v2260 = vpop.f32.mrf.mxu0
        %v2261 = vadd.f32 %v2100, %v2260
        %v2262 = vpop.f32.mrf.mxu0
        %v2263 = vpop.f32.mrf.mxu0
        %v2264 = vadd.f32 %v2103, %v2263
        %v2265 = vpop.f32.mrf.mxu0
        %2266 = vmatprep.mubr.bf16.mxu0 %v1420
        %2267 = vmatmul.mubr.bf16.gmra.mxu0 %v1419
        %v2268 = vpop.f32.mrf.mxu0
        %v2269 = vadd.f32 %v2108, %v2268
        %v2270 = vpop.f32.mrf.mxu0
        %v2271 = vpop.f32.mrf.mxu0
        %v2272 = vadd.f32 %v2111, %v2271
        %v2273 = vpop.f32.mrf.mxu0
        %2274 = vmatprep.mubr.bf16.mxu0 %v1426
        %2275 = vmatmul.mubr.bf16.gmra.mxu0 %v1425
        %v2276 = vpop.f32.mrf.mxu0
        %v2277 = vadd.f32 %v2116, %v2276
        %v2278 = vpop.f32.mrf.mxu0
        %v2279 = vpop.f32.mrf.mxu0
        %v2280 = vadd.f32 %v2119, %v2279
        %v2281 = vpop.f32.mrf.mxu0
        %2282 = vmatprep.mubr.bf16.mxu0 %v1432
        %2283 = vmatmul.mubr.bf16.gmra.mxu0 %v1431
        %v2284 = vpop.f32.mrf.mxu0
        %v2285 = vadd.f32 %v2124, %v2284
        %v2286 = vpop.f32.mrf.mxu0
        %v2287 = vpop.f32.mrf.mxu0
        %v2288 = vadd.f32 %v2127, %v2287
        %v2289 = vpop.f32.mrf.mxu0
        %2290 = vmatprep.mubr.bf16.mxu0 %v1438
        %2291 = vmatmul.mubr.bf16.gmra.mxu0 %v1437
        %v2292 = vpop.f32.mrf.mxu0
        %v2293 = vadd.f32 %v2132, %v2292
        %v2294 = vpop.f32.mrf.mxu0
        %v2295 = vpop.f32.mrf.mxu0
        %v2296 = vadd.f32 %v2135, %v2295
        %v2297 = vpop.f32.mrf.mxu0
        %2298 = vmatprep.mubr.bf16.mxu0 %v1444
        %2299 = vmatmul.mubr.bf16.gmra.mxu0 %v1443
        %v2300 = vpop.f32.mrf.mxu0
        %v2301 = vadd.f32 %v2140, %v2300
        %v2302 = vpop.f32.mrf.mxu0
        %v2303 = vpop.f32.mrf.mxu0
        %v2304 = vadd.f32 %v2143, %v2303
        %v2305 = vpop.f32.mrf.mxu0
        %2306 = vmatprep.mubr.bf16.mxu0 %v1450
        %2307 = vmatmul.mubr.bf16.gmra.mxu0 %v1449
        %v2308 = vpop.f32.mrf.mxu0
        %v2309 = vadd.f32 %v2148, %v2308
        %v2310 = vpop.f32.mrf.mxu0
        %v2311 = vpop.f32.mrf.mxu0
        %v2312 = vadd.f32 %v2151, %v2311
        %v2313 = vpop.f32.mrf.mxu0
        %2314 = vmatprep.mubr.bf16.mxu0 %v1456
        %2315 = vmatmul.mubr.bf16.gmra.mxu0 %v1455
        %v2316 = vpop.f32.mrf.mxu0
        %v2317 = vadd.f32 %v2156, %v2316
        %v2318 = vpop.f32.mrf.mxu0
        %v2319 = vpop.f32.mrf.mxu0
        %v2320 = vadd.f32 %v2159, %v2319
        %v2321 = vpop.f32.mrf.mxu0
        %2322 = vmatprep.mubr.bf16.mxu0 %v1462
        %2323 = vmatmul.mubr.bf16.gmra.mxu0 %v1461
        %v2324 = vpop.f32.mrf.mxu0
        %v2325 = vadd.f32 %v2164, %v2324
        %v2326 = vpop.f32.mrf.mxu0
        %v2327 = vpop.f32.mrf.mxu0
        %v2328 = vadd.f32 %v2167, %v2327
        %v2329 = vpop.f32.mrf.mxu0
        %2330 = vmatprep.mubr.bf16.mxu0 %v1468
        %2331 = vmatmul.mubr.bf16.gmra.mxu0 %v1467
        %v2332 = vpop.f32.mrf.mxu0
        %v2333 = vadd.f32 %v2172, %v2332
        %v2334 = vpop.f32.mrf.mxu0
        %v2335 = vpop.f32.mrf.mxu0
        %v2336 = vadd.f32 %v2175, %v2335
        %v2337 = vpop.f32.mrf.mxu0
        %2338 = vmatprep.mubr.bf16.mxu0 %v1474
        %2339 = vmatmul.mubr.bf16.gmra.mxu0 %v1473
        %v2340 = vpop.f32.mrf.mxu0
        %v2341 = vadd.f32 %v2180, %v2340
        %v2342 = vpop.f32.mrf.mxu0
        %v2343 = vpop.f32.mrf.mxu0
        %v2344 = vadd.f32 %v2183, %v2343
        %v2345 = vpop.f32.mrf.mxu0
        %2346 = vmatprep.mubr.bf16.mxu0 %v1480
        %2347 = vmatmul.mubr.bf16.gmra.mxu0 %v1479
        %v2348 = vpop.f32.mrf.mxu0
        %v2349 = vadd.f32 %v2188, %v2348
        %v2350 = vpop.f32.mrf.mxu0
        %v2351 = vpop.f32.mrf.mxu0
        %v2352 = vadd.f32 %v2191, %v2351
        %v2353 = vpop.f32.mrf.mxu0
        %2354 = vdwg.mxu0
        %v2355 = vmax.f32 %v2229, 0.0
        %v2356 = vmax.f32 %v2232, 0.0
        %v2357 = vmax.f32 %v2237, 0.0
        %v2358 = vmax.f32 %v2240, 0.0
        %v2359 = vmax.f32 %v2245, 0.0
        %v2360 = vmax.f32 %v2248, 0.0
        %v2361 = vmax.f32 %v2253, 0.0
        %v2362 = vmax.f32 %v2256, 0.0
        %v2363 = vmax.f32 %v2261, 0.0
        %v2364 = vmax.f32 %v2264, 0.0
        %v2365 = vmax.f32 %v2269, 0.0
        %v2366 = vmax.f32 %v2272, 0.0
        %v2367 = vmax.f32 %v2277, 0.0
        %v2368 = vmax.f32 %v2280, 0.0
        %v2369 = vmax.f32 %v2285, 0.0
        %v2370 = vmax.f32 %v2288, 0.0
        %v2371 = vmax.f32 %v2293, 0.0
        %v2372 = vmax.f32 %v2296, 0.0
        %v2373 = vmax.f32 %v2301, 0.0
        %v2374 = vmax.f32 %v2304, 0.0
        %v2375 = vmax.f32 %v2309, 0.0
        %v2376 = vmax.f32 %v2312, 0.0
        %v2377 = vmax.f32 %v2317, 0.0
        %v2378 = vmax.f32 %v2320, 0.0
        %v2379 = vmax.f32 %v2325, 0.0
        %v2380 = vmax.f32 %v2328, 0.0
        %v2381 = vmax.f32 %v2333, 0.0
        %v2382 = vmax.f32 %v2336, 0.0
        %v2383 = vmax.f32 %v2341, 0.0
        %v2384 = vmax.f32 %v2344, 0.0
        %v2385 = vmax.f32 %v2349, 0.0
        %v2386 = vmax.f32 %v2352, 0.0
        %v2387 = vpack.c.bf16 %v2356, %v2355
        %v2388 = vpack.c.bf16 %v2358, %v2357
        %v2389 = vpack.c.bf16 %v2360, %v2359
        %v2390 = vpack.c.bf16 %v2362, %v2361
        %v2391 = vpack.c.bf16 %v2364, %v2363
        %v2392 = vpack.c.bf16 %v2366, %v2365
        %v2393 = vpack.c.bf16 %v2368, %v2367
        %v2394 = vpack.c.bf16 %v2370, %v2369
        %v2395 = vpack.c.bf16 %v2372, %v2371
        %v2396 = vpack.c.bf16 %v2374, %v2373
        %v2397 = vpack.c.bf16 %v2376, %v2375
        %v2398 = vpack.c.bf16 %v2378, %v2377
        %v2399 = vpack.c.bf16 %v2380, %v2379
        %v2400 = vpack.c.bf16 %v2382, %v2381
        %v2401 = vpack.c.bf16 %v2384, %v2383
        %v2402 = vpack.c.bf16 %v2386, %v2385
        %v2403 = vld [vmem:[#allocation8] sm:$0xff]
        %v2404 = vld [vmem:[#allocation8 + $0x8] sm:$0xff]
        %v2405 = vld [vmem:[#allocation8 + $0x10] sm:$0xff]
        %v2406 = vld [vmem:[#allocation8 + $0x18] sm:$0xff]
        %v2407 = vld [vmem:[#allocation8 + $0x20] sm:$0xff]
        %v2408 = vld [vmem:[#allocation8 + $0x28] sm:$0xff]
        %v2409 = vld [vmem:[#allocation8 + $0x30] sm:$0xff]
        %v2410 = vld [vmem:[#allocation8 + $0x38] sm:$0xff]
        %v2411 = vld [vmem:[#allocation8 + $0x40] sm:$0xff]
        %v2412 = vld [vmem:[#allocation8 + $0x48] sm:$0xff]
        %v2413 = vld [vmem:[#allocation8 + $0x50] sm:$0xff]
        %v2414 = vld [vmem:[#allocation8 + $0x58] sm:$0xff]
        %v2415 = vld [vmem:[#allocation8 + $0x60] sm:$0xff]
        %v2416 = vld [vmem:[#allocation8 + $0x68] sm:$0xff]
        %v2417 = vld [vmem:[#allocation8 + $0x70] sm:$0xff]
        %v2418 = vld [vmem:[#allocation8 + $0x78] sm:$0xff]
        %v2419 = vld [vmem:[#allocation8 + $0x80] sm:$0xff]
        %v2420 = vld [vmem:[#allocation8 + $0x88] sm:$0xff]
        %v2421 = vld [vmem:[#allocation8 + $0x90] sm:$0xff]
        %v2422 = vld [vmem:[#allocation8 + $0x98] sm:$0xff]
        %v2423 = vld [vmem:[#allocation8 + $0xa0] sm:$0xff]
        %v2424 = vld [vmem:[#allocation8 + $0xa8] sm:$0xff]
        %v2425 = vld [vmem:[#allocation8 + $0xb0] sm:$0xff]
        %v2426 = vld [vmem:[#allocation8 + $0xb8] sm:$0xff]
        %v2427 = vld [vmem:[#allocation8 + $0xc0] sm:$0xff]
        %v2428 = vld [vmem:[#allocation8 + $0xc8] sm:$0xff]
        %v2429 = vld [vmem:[#allocation8 + $0xd0] sm:$0xff]
        %v2430 = vld [vmem:[#allocation8 + $0xd8] sm:$0xff]
        %v2431 = vld [vmem:[#allocation8 + $0xe0] sm:$0xff]
        %v2432 = vld [vmem:[#allocation8 + $0xe8] sm:$0xff]
        %v2433 = vld [vmem:[#allocation8 + $0xf0] sm:$0xff]
        %v2434 = vld [vmem:[#allocation8 + $0xf8] sm:$0xff]
        %v2435 = vld [vmem:[#allocation8 + $0x100] sm:$0xff]
        %v2436 = vld [vmem:[#allocation8 + $0x108] sm:$0xff]
        %v2437 = vld [vmem:[#allocation8 + $0x110] sm:$0xff]
        %v2438 = vld [vmem:[#allocation8 + $0x118] sm:$0xff]
        %v2439 = vld [vmem:[#allocation8 + $0x120] sm:$0xff]
        %v2440 = vld [vmem:[#allocation8 + $0x128] sm:$0xff]
        %v2441 = vld [vmem:[#allocation8 + $0x130] sm:$0xff]
        %v2442 = vld [vmem:[#allocation8 + $0x138] sm:$0xff]
        %v2443 = vld [vmem:[#allocation8 + $0x140] sm:$0xff]
        %v2444 = vld [vmem:[#allocation8 + $0x148] sm:$0xff]
        %v2445 = vld [vmem:[#allocation8 + $0x150] sm:$0xff]
        %v2446 = vld [vmem:[#allocation8 + $0x158] sm:$0xff]
        %v2447 = vld [vmem:[#allocation8 + $0x160] sm:$0xff]
        %v2448 = vld [vmem:[#allocation8 + $0x168] sm:$0xff]
        %v2449 = vld [vmem:[#allocation8 + $0x170] sm:$0xff]
        %v2450 = vld [vmem:[#allocation8 + $0x178] sm:$0xff]
        %v2451 = vld [vmem:[#allocation10] sm:$0x3f]
        %v2453 = vlaneseq
        %v2454 = vshrl.u32 %v2453, 7
        %v2455 = vsub.s32 0, %v2454
        %v2456 = vrot.slane %v2451, %v2455
        %v2457 = vlaneseq
        %v2458 = vshrl.u32 %v2457, 7
        %v2459 = vsub.s32 1, %v2458
        %v2460 = vrot.slane %v2451, %v2459
        %v2461 = vlaneseq
        %v2462 = vshrl.u32 %v2461, 7
        %v2463 = vsub.s32 2, %v2462
        %v2464 = vrot.slane %v2451, %v2463
        %v2465 = vlaneseq
        %v2466 = vshrl.u32 %v2465, 7
        %v2467 = vsub.s32 3, %v2466
        %v2468 = vrot.slane %v2451, %v2467
        %v2469 = vlaneseq
        %v2470 = vshrl.u32 %v2469, 7
        %v2471 = vsub.s32 4, %v2470
        %v2472 = vrot.slane %v2451, %v2471
        %v2473 = vlaneseq
        %v2474 = vshrl.u32 %v2473, 7
        %v2475 = vsub.s32 5, %v2474
        %v2476 = vrot.slane %v2451, %v2475
        %v2531 = vunpack.c.l.b16 %v2403
        %v2532 = vunpack.c.h.b16 %v2403
        %v2533 = vunpack.c.l.b16 %v2404
        %v2534 = vunpack.c.h.b16 %v2404
        %v2535 = vunpack.c.l.b16 %v2405
        %v2536 = vunpack.c.h.b16 %v2405
        %v2537 = vunpack.c.l.b16 %v2406
        %v2538 = vunpack.c.h.b16 %v2406
        %v2539 = vunpack.c.l.b16 %v2407
        %v2540 = vunpack.c.h.b16 %v2407
        %v2541 = vunpack.c.l.b16 %v2408
        %v2542 = vunpack.c.h.b16 %v2408
        %v2543 = vunpack.c.l.b16 %v2409
        %v2544 = vunpack.c.h.b16 %v2409
        %v2545 = vunpack.c.l.b16 %v2410
        %v2546 = vunpack.c.h.b16 %v2410
        %v2547 = vunpack.c.l.b16 %v2411
        %v2548 = vunpack.c.h.b16 %v2411
        %v2549 = vunpack.c.l.b16 %v2412
        %v2550 = vunpack.c.h.b16 %v2412
        %v2551 = vunpack.c.l.b16 %v2413
        %v2552 = vunpack.c.h.b16 %v2413
        %v2553 = vunpack.c.l.b16 %v2414
        %v2554 = vunpack.c.h.b16 %v2414
        %v2555 = vunpack.c.l.b16 %v2415
        %v2556 = vunpack.c.h.b16 %v2415
        %v2557 = vunpack.c.l.b16 %v2416
        %v2558 = vunpack.c.h.b16 %v2416
        %v2559 = vunpack.c.l.b16 %v2417
        %v2560 = vunpack.c.h.b16 %v2417
        %v2561 = vunpack.c.l.b16 %v2418
        %v2562 = vunpack.c.h.b16 %v2418
        %v2563 = vunpack.c.l.b16 %v2419
        %v2564 = vunpack.c.h.b16 %v2419
        %v2565 = vunpack.c.l.b16 %v2420
        %v2566 = vunpack.c.h.b16 %v2420
        %v2567 = vunpack.c.l.b16 %v2421
        %v2568 = vunpack.c.h.b16 %v2421
        %v2569 = vunpack.c.l.b16 %v2422
        %v2570 = vunpack.c.h.b16 %v2422
        %v2571 = vunpack.c.l.b16 %v2423
        %v2572 = vunpack.c.h.b16 %v2423
        %v2573 = vunpack.c.l.b16 %v2424
        %v2574 = vunpack.c.h.b16 %v2424
        %v2575 = vunpack.c.l.b16 %v2425
        %v2576 = vunpack.c.h.b16 %v2425
        %v2577 = vunpack.c.l.b16 %v2426
        %v2578 = vunpack.c.h.b16 %v2426
        %v2579 = vunpack.c.l.b16 %v2427
        %v2580 = vunpack.c.h.b16 %v2427
        %v2581 = vunpack.c.l.b16 %v2428
        %v2582 = vunpack.c.h.b16 %v2428
        %v2583 = vunpack.c.l.b16 %v2429
        %v2584 = vunpack.c.h.b16 %v2429
        %v2585 = vunpack.c.l.b16 %v2430
        %v2586 = vunpack.c.h.b16 %v2430
        %v2587 = vunpack.c.l.b16 %v2431
        %v2588 = vunpack.c.h.b16 %v2431
        %v2589 = vunpack.c.l.b16 %v2432
        %v2590 = vunpack.c.h.b16 %v2432
        %v2591 = vunpack.c.l.b16 %v2433
        %v2592 = vunpack.c.h.b16 %v2433
        %v2593 = vunpack.c.l.b16 %v2434
        %v2594 = vunpack.c.h.b16 %v2434
        %v2595 = vunpack.c.l.b16 %v2435
        %v2596 = vunpack.c.h.b16 %v2435
        %v2597 = vunpack.c.l.b16 %v2436
        %v2598 = vunpack.c.h.b16 %v2436
        %v2599 = vunpack.c.l.b16 %v2437
        %v2600 = vunpack.c.h.b16 %v2437
        %v2601 = vunpack.c.l.b16 %v2438
        %v2602 = vunpack.c.h.b16 %v2438
        %v2603 = vunpack.c.l.b16 %v2439
        %v2604 = vunpack.c.h.b16 %v2439
        %v2605 = vunpack.c.l.b16 %v2440
        %v2606 = vunpack.c.h.b16 %v2440
        %v2607 = vunpack.c.l.b16 %v2441
        %v2608 = vunpack.c.h.b16 %v2441
        %v2609 = vunpack.c.l.b16 %v2442
        %v2610 = vunpack.c.h.b16 %v2442
        %v2611 = vunpack.c.l.b16 %v2443
        %v2612 = vunpack.c.h.b16 %v2443
        %v2613 = vunpack.c.l.b16 %v2444
        %v2614 = vunpack.c.h.b16 %v2444
        %v2615 = vunpack.c.l.b16 %v2445
        %v2616 = vunpack.c.h.b16 %v2445
        %v2617 = vunpack.c.l.b16 %v2446
        %v2618 = vunpack.c.h.b16 %v2446
        %v2619 = vunpack.c.l.b16 %v2447
        %v2620 = vunpack.c.h.b16 %v2447
        %v2621 = vunpack.c.l.b16 %v2448
        %v2622 = vunpack.c.h.b16 %v2448
        %v2623 = vunpack.c.l.b16 %v2449
        %v2624 = vunpack.c.h.b16 %v2449
        %v2625 = vunpack.c.l.b16 %v2450
        %v2626 = vunpack.c.h.b16 %v2450
        %v2627 = vpack.c.b16 %v2537, %v2531
        %v2628 = vpack.c.b16 %v2538, %v2532
        %v2629 = vpack.c.b16 %v2539, %v2533
        %v2630 = vpack.c.b16 %v2540, %v2534
        %v2631 = vpack.c.b16 %v2541, %v2535
        %v2632 = vpack.c.b16 %v2542, %v2536
        %v2633 = vpack.c.b16 %v2549, %v2543
        %v2634 = vpack.c.b16 %v2550, %v2544
        %v2635 = vpack.c.b16 %v2551, %v2545
        %v2636 = vpack.c.b16 %v2552, %v2546
        %v2637 = vpack.c.b16 %v2553, %v2547
        %v2638 = vpack.c.b16 %v2554, %v2548
        %v2639 = vpack.c.b16 %v2561, %v2555
        %v2640 = vpack.c.b16 %v2562, %v2556
        %v2641 = vpack.c.b16 %v2563, %v2557
        %v2642 = vpack.c.b16 %v2564, %v2558
        %v2643 = vpack.c.b16 %v2565, %v2559
        %v2644 = vpack.c.b16 %v2566, %v2560
        %v2645 = vpack.c.b16 %v2573, %v2567
        %v2646 = vpack.c.b16 %v2574, %v2568
        %v2647 = vpack.c.b16 %v2575, %v2569
        %v2648 = vpack.c.b16 %v2576, %v2570
        %v2649 = vpack.c.b16 %v2577, %v2571
        %v2650 = vpack.c.b16 %v2578, %v2572
        %v2651 = vpack.c.b16 %v2585, %v2579
        %v2652 = vpack.c.b16 %v2586, %v2580
        %v2653 = vpack.c.b16 %v2587, %v2581
        %v2654 = vpack.c.b16 %v2588, %v2582
        %v2655 = vpack.c.b16 %v2589, %v2583
        %v2656 = vpack.c.b16 %v2590, %v2584
        %v2657 = vpack.c.b16 %v2597, %v2591
        %v2658 = vpack.c.b16 %v2598, %v2592
        %v2659 = vpack.c.b16 %v2599, %v2593
        %v2660 = vpack.c.b16 %v2600, %v2594
        %v2661 = vpack.c.b16 %v2601, %v2595
        %v2662 = vpack.c.b16 %v2602, %v2596
        %v2663 = vpack.c.b16 %v2609, %v2603
        %v2664 = vpack.c.b16 %v2610, %v2604
        %v2665 = vpack.c.b16 %v2611, %v2605
        %v2666 = vpack.c.b16 %v2612, %v2606
        %v2667 = vpack.c.b16 %v2613, %v2607
        %v2668 = vpack.c.b16 %v2614, %v2608
        %v2669 = vpack.c.b16 %v2621, %v2615
        %v2670 = vpack.c.b16 %v2622, %v2616
        %v2671 = vpack.c.b16 %v2623, %v2617
        %v2672 = vpack.c.b16 %v2624, %v2618
        %v2673 = vpack.c.b16 %v2625, %v2619
        %v2674 = vpack.c.b16 %v2626, %v2620
        %2723 = vmatprep.subr.bf16.mxu0 %v2670
        %2724 = vmatpush1.bf16.msra.mxu0 %v2669
        %2725 = vmatprep.subr.bf16.mxu0 %v2664
        %2726 = vmatpush1.bf16.msra.mxu0 %v2663
        %2727 = vmatprep.subr.bf16.mxu0 %v2658
        %2728 = vmatpush1.bf16.msra.mxu0 %v2657
        %2729 = vmatprep.subr.bf16.mxu0 %v2652
        %2730 = vmatpush1.bf16.msra.mxu0 %v2651
        %2731 = vmatprep.subr.bf16.mxu0 %v2646
        %2732 = vmatpush1.bf16.msra.mxu0 %v2645
        %2733 = vmatprep.subr.bf16.mxu0 %v2640
        %2734 = vmatpush1.bf16.msra.mxu0 %v2639
        %2735 = vmatprep.subr.bf16.mxu0 %v2634
        %2736 = vmatpush1.bf16.msra.mxu0 %v2633
        %2737 = vmatprep.subr.bf16.mxu0 %v2628
        %2738 = vmatpush1.bf16.msra.mxu0 %v2627
        %2739 = vmatprep.subr.bf16.mxu0 0
        %2740 = vmatpush2.bf16.msra.mxu0 0
        %2741 = vmatprep.subr.bf16.mxu0 0
        %2742 = vmatpush2.bf16.msra.mxu0 0
        %2743 = vmatprep.subr.bf16.mxu0 0
        %2744 = vmatpush2.bf16.msra.mxu0 0
        %2745 = vmatprep.subr.bf16.mxu0 0
        %2746 = vmatpush2.bf16.msra.mxu0 0
        %2747 = vmatprep.subr.bf16.mxu0 0
        %2748 = vmatpush2.bf16.msra.mxu0 0
        %2749 = vmatprep.subr.bf16.mxu0 0
        %2750 = vmatpush2.bf16.msra.mxu0 0
        %2751 = vmatprep.subr.bf16.mxu0 0
        %2752 = vmatpush2.bf16.msra.mxu0 0
        %2753 = vmatprep.subr.bf16.mxu0 0
        %2754 = vmatpush2.bf16.msra.mxu0 0
        %2755 = vmatprep.mubr.bf16.mxu0 0
        %2756 = vmatmul.mubr.bf16.gmra.mxu0 %v2387
        %v2757 = vpop.f32.mrf.mxu0
        %v2758 = vadd.f32 %v2456, %v2757
        %v2759 = vpop.f32.mrf.mxu0
        %v2760 = vadd.f32 %v2460, %v2759
        %v2761 = vpop.f32.mrf.mxu0
        %v2762 = vadd.f32 %v2456, %v2761
        %v2763 = vpop.f32.mrf.mxu0
        %v2764 = vadd.f32 %v2460, %v2763
        %2765 = vmatprep.mubr.bf16.mxu0 0
        %2766 = vmatmul.mubr.bf16.gmra.mxu0 %v2388
        %v2767 = vpop.f32.mrf.mxu0
        %v2768 = vadd.f32 %v2456, %v2767
        %v2769 = vpop.f32.mrf.mxu0
        %v2770 = vadd.f32 %v2460, %v2769
        %v2771 = vpop.f32.mrf.mxu0
        %v2772 = vadd.f32 %v2456, %v2771
        %v2773 = vpop.f32.mrf.mxu0
        %v2774 = vadd.f32 %v2460, %v2773
        %2775 = vmatprep.mubr.bf16.mxu0 0
        %2776 = vmatmul.mubr.bf16.gmra.mxu0 %v2389
        %v2777 = vpop.f32.mrf.mxu0
        %v2778 = vadd.f32 %v2456, %v2777
        %v2779 = vpop.f32.mrf.mxu0
        %v2780 = vadd.f32 %v2460, %v2779
        %v2781 = vpop.f32.mrf.mxu0
        %v2782 = vadd.f32 %v2456, %v2781
        %v2783 = vpop.f32.mrf.mxu0
        %v2784 = vadd.f32 %v2460, %v2783
        %2785 = vmatprep.mubr.bf16.mxu0 0
        %2786 = vmatmul.mubr.bf16.gmra.mxu0 %v2390
        %v2787 = vpop.f32.mrf.mxu0
        %v2788 = vadd.f32 %v2456, %v2787
        %v2789 = vpop.f32.mrf.mxu0
        %v2790 = vadd.f32 %v2460, %v2789
        %v2791 = vpop.f32.mrf.mxu0
        %v2792 = vadd.f32 %v2456, %v2791
        %v2793 = vpop.f32.mrf.mxu0
        %v2794 = vadd.f32 %v2460, %v2793
        %2795 = vmatprep.mubr.bf16.mxu0 0
        %2796 = vmatmul.mubr.bf16.gmra.mxu0 %v2391
        %v2797 = vpop.f32.mrf.mxu0
        %v2798 = vadd.f32 %v2456, %v2797
        %v2799 = vpop.f32.mrf.mxu0
        %v2800 = vadd.f32 %v2460, %v2799
        %v2801 = vpop.f32.mrf.mxu0
        %v2802 = vadd.f32 %v2456, %v2801
        %v2803 = vpop.f32.mrf.mxu0
        %v2804 = vadd.f32 %v2460, %v2803
        %2805 = vmatprep.mubr.bf16.mxu0 0
        %2806 = vmatmul.mubr.bf16.gmra.mxu0 %v2392
        %v2807 = vpop.f32.mrf.mxu0
        %v2808 = vadd.f32 %v2456, %v2807
        %v2809 = vpop.f32.mrf.mxu0
        %v2810 = vadd.f32 %v2460, %v2809
        %v2811 = vpop.f32.mrf.mxu0
        %v2812 = vadd.f32 %v2456, %v2811
        %v2813 = vpop.f32.mrf.mxu0
        %v2814 = vadd.f32 %v2460, %v2813
        %2815 = vmatprep.mubr.bf16.mxu0 0
        %2816 = vmatmul.mubr.bf16.gmra.mxu0 %v2393
        %v2817 = vpop.f32.mrf.mxu0
        %v2818 = vadd.f32 %v2456, %v2817
        %v2819 = vpop.f32.mrf.mxu0
        %v2820 = vadd.f32 %v2460, %v2819
        %v2821 = vpop.f32.mrf.mxu0
        %v2822 = vadd.f32 %v2456, %v2821
        %v2823 = vpop.f32.mrf.mxu0
        %v2824 = vadd.f32 %v2460, %v2823
        %2825 = vmatprep.mubr.bf16.mxu0 0
        %2826 = vmatmul.mubr.bf16.gmra.mxu0 %v2394
        %v2827 = vpop.f32.mrf.mxu0
        %v2828 = vadd.f32 %v2456, %v2827
        %v2829 = vpop.f32.mrf.mxu0
        %v2830 = vadd.f32 %v2460, %v2829
        %v2831 = vpop.f32.mrf.mxu0
        %v2832 = vadd.f32 %v2456, %v2831
        %v2833 = vpop.f32.mrf.mxu0
        %v2834 = vadd.f32 %v2460, %v2833
        %2835 = vmatprep.mubr.bf16.mxu0 0
        %2836 = vmatmul.mubr.bf16.gmra.mxu0 %v2395
        %v2837 = vpop.f32.mrf.mxu0
        %v2838 = vadd.f32 %v2456, %v2837
        %v2839 = vpop.f32.mrf.mxu0
        %v2840 = vadd.f32 %v2460, %v2839
        %v2841 = vpop.f32.mrf.mxu0
        %v2842 = vadd.f32 %v2456, %v2841
        %v2843 = vpop.f32.mrf.mxu0
        %v2844 = vadd.f32 %v2460, %v2843
        %2845 = vmatprep.mubr.bf16.mxu0 0
        %2846 = vmatmul.mubr.bf16.gmra.mxu0 %v2396
        %v2847 = vpop.f32.mrf.mxu0
        %v2848 = vadd.f32 %v2456, %v2847
        %v2849 = vpop.f32.mrf.mxu0
        %v2850 = vadd.f32 %v2460, %v2849
        %v2851 = vpop.f32.mrf.mxu0
        %v2852 = vadd.f32 %v2456, %v2851
        %v2853 = vpop.f32.mrf.mxu0
        %v2854 = vadd.f32 %v2460, %v2853
        %2855 = vmatprep.mubr.bf16.mxu0 0
        %2856 = vmatmul.mubr.bf16.gmra.mxu0 %v2397
        %v2857 = vpop.f32.mrf.mxu0
        %v2858 = vadd.f32 %v2456, %v2857
        %v2859 = vpop.f32.mrf.mxu0
        %v2860 = vadd.f32 %v2460, %v2859
        %v2861 = vpop.f32.mrf.mxu0
        %v2862 = vadd.f32 %v2456, %v2861
        %v2863 = vpop.f32.mrf.mxu0
        %v2864 = vadd.f32 %v2460, %v2863
        %2865 = vmatprep.mubr.bf16.mxu0 0
        %2866 = vmatmul.mubr.bf16.gmra.mxu0 %v2398
        %v2867 = vpop.f32.mrf.mxu0
        %v2868 = vadd.f32 %v2456, %v2867
        %v2869 = vpop.f32.mrf.mxu0
        %v2870 = vadd.f32 %v2460, %v2869
        %v2871 = vpop.f32.mrf.mxu0
        %v2872 = vadd.f32 %v2456, %v2871
        %v2873 = vpop.f32.mrf.mxu0
        %v2874 = vadd.f32 %v2460, %v2873
        %2875 = vmatprep.mubr.bf16.mxu0 0
        %2876 = vmatmul.mubr.bf16.gmra.mxu0 %v2399
        %v2877 = vpop.f32.mrf.mxu0
        %v2878 = vadd.f32 %v2456, %v2877
        %v2879 = vpop.f32.mrf.mxu0
        %v2880 = vadd.f32 %v2460, %v2879
        %v2881 = vpop.f32.mrf.mxu0
        %v2882 = vadd.f32 %v2456, %v2881
        %v2883 = vpop.f32.mrf.mxu0
        %v2884 = vadd.f32 %v2460, %v2883
        %2885 = vmatprep.mubr.bf16.mxu0 0
        %2886 = vmatmul.mubr.bf16.gmra.mxu0 %v2400
        %v2887 = vpop.f32.mrf.mxu0
        %v2888 = vadd.f32 %v2456, %v2887
        %v2889 = vpop.f32.mrf.mxu0
        %v2890 = vadd.f32 %v2460, %v2889
        %v2891 = vpop.f32.mrf.mxu0
        %v2892 = vadd.f32 %v2456, %v2891
        %v2893 = vpop.f32.mrf.mxu0
        %v2894 = vadd.f32 %v2460, %v2893
        %2895 = vmatprep.mubr.bf16.mxu0 0
        %2896 = vmatmul.mubr.bf16.gmra.mxu0 %v2401
        %v2897 = vpop.f32.mrf.mxu0
        %v2898 = vadd.f32 %v2456, %v2897
        %v2899 = vpop.f32.mrf.mxu0
        %v2900 = vadd.f32 %v2460, %v2899
        %v2901 = vpop.f32.mrf.mxu0
        %v2902 = vadd.f32 %v2456, %v2901
        %v2903 = vpop.f32.mrf.mxu0
        %v2904 = vadd.f32 %v2460, %v2903
        %2905 = vmatprep.mubr.bf16.mxu0 0
        %2906 = vmatmul.mubr.bf16.gmra.mxu0 %v2402
        %v2907 = vpop.f32.mrf.mxu0
        %v2908 = vadd.f32 %v2456, %v2907
        %v2909 = vpop.f32.mrf.mxu0
        %v2910 = vadd.f32 %v2460, %v2909
        %v2911 = vpop.f32.mrf.mxu0
        %v2912 = vadd.f32 %v2456, %v2911
        %v2913 = vpop.f32.mrf.mxu0
        %v2914 = vadd.f32 %v2460, %v2913
        %2915 = vdwg.mxu0
        %2916 = vmatprep.subr.bf16.mxu0 %v2672
        %2917 = vmatpush1.bf16.msra.mxu0 %v2671
        %2918 = vmatprep.subr.bf16.mxu0 %v2666
        %2919 = vmatpush1.bf16.msra.mxu0 %v2665
        %2920 = vmatprep.subr.bf16.mxu0 %v2660
        %2921 = vmatpush1.bf16.msra.mxu0 %v2659
        %2922 = vmatprep.subr.bf16.mxu0 %v2654
        %2923 = vmatpush1.bf16.msra.mxu0 %v2653
        %2924 = vmatprep.subr.bf16.mxu0 %v2648
        %2925 = vmatpush1.bf16.msra.mxu0 %v2647
        %2926 = vmatprep.subr.bf16.mxu0 %v2642
        %2927 = vmatpush1.bf16.msra.mxu0 %v2641
        %2928 = vmatprep.subr.bf16.mxu0 %v2636
        %2929 = vmatpush1.bf16.msra.mxu0 %v2635
        %2930 = vmatprep.subr.bf16.mxu0 %v2630
        %2931 = vmatpush1.bf16.msra.mxu0 %v2629
        %2932 = vmatprep.subr.bf16.mxu0 0
        %2933 = vmatpush2.bf16.msra.mxu0 0
        %2934 = vmatprep.subr.bf16.mxu0 0
        %2935 = vmatpush2.bf16.msra.mxu0 0
        %2936 = vmatprep.subr.bf16.mxu0 0
        %2937 = vmatpush2.bf16.msra.mxu0 0
        %2938 = vmatprep.subr.bf16.mxu0 0
        %2939 = vmatpush2.bf16.msra.mxu0 0
        %2940 = vmatprep.subr.bf16.mxu0 0
        %2941 = vmatpush2.bf16.msra.mxu0 0
        %2942 = vmatprep.subr.bf16.mxu0 0
        %2943 = vmatpush2.bf16.msra.mxu0 0
        %2944 = vmatprep.subr.bf16.mxu0 0
        %2945 = vmatpush2.bf16.msra.mxu0 0
        %2946 = vmatprep.subr.bf16.mxu0 0
        %2947 = vmatpush2.bf16.msra.mxu0 0
        %2948 = vmatprep.mubr.bf16.mxu0 0
        %2949 = vmatmul.mubr.bf16.gmra.mxu0 %v2387
        %v2950 = vpop.f32.mrf.mxu0
        %v2951 = vadd.f32 %v2464, %v2950
        %v2952 = vpop.f32.mrf.mxu0
        %v2953 = vadd.f32 %v2468, %v2952
        %v2954 = vpop.f32.mrf.mxu0
        %v2955 = vadd.f32 %v2464, %v2954
        %v2956 = vpop.f32.mrf.mxu0
        %v2957 = vadd.f32 %v2468, %v2956
        %2958 = vmatprep.mubr.bf16.mxu0 0
        %2959 = vmatmul.mubr.bf16.gmra.mxu0 %v2388
        %v2960 = vpop.f32.mrf.mxu0
        %v2961 = vadd.f32 %v2464, %v2960
        %v2962 = vpop.f32.mrf.mxu0
        %v2963 = vadd.f32 %v2468, %v2962
        %v2964 = vpop.f32.mrf.mxu0
        %v2965 = vadd.f32 %v2464, %v2964
        %v2966 = vpop.f32.mrf.mxu0
        %v2967 = vadd.f32 %v2468, %v2966
        %2968 = vmatprep.mubr.bf16.mxu0 0
        %2969 = vmatmul.mubr.bf16.gmra.mxu0 %v2389
        %v2970 = vpop.f32.mrf.mxu0
        %v2971 = vadd.f32 %v2464, %v2970
        %v2972 = vpop.f32.mrf.mxu0
        %v2973 = vadd.f32 %v2468, %v2972
        %v2974 = vpop.f32.mrf.mxu0
        %v2975 = vadd.f32 %v2464, %v2974
        %v2976 = vpop.f32.mrf.mxu0
        %v2977 = vadd.f32 %v2468, %v2976
        %2978 = vmatprep.mubr.bf16.mxu0 0
        %2979 = vmatmul.mubr.bf16.gmra.mxu0 %v2390
        %v2980 = vpop.f32.mrf.mxu0
        %v2981 = vadd.f32 %v2464, %v2980
        %v2982 = vpop.f32.mrf.mxu0
        %v2983 = vadd.f32 %v2468, %v2982
        %v2984 = vpop.f32.mrf.mxu0
        %v2985 = vadd.f32 %v2464, %v2984
        %v2986 = vpop.f32.mrf.mxu0
        %v2987 = vadd.f32 %v2468, %v2986
        %2988 = vmatprep.mubr.bf16.mxu0 0
        %2989 = vmatmul.mubr.bf16.gmra.mxu0 %v2391
        %v2990 = vpop.f32.mrf.mxu0
        %v2991 = vadd.f32 %v2464, %v2990
        %v2992 = vpop.f32.mrf.mxu0
        %v2993 = vadd.f32 %v2468, %v2992
        %v2994 = vpop.f32.mrf.mxu0
        %v2995 = vadd.f32 %v2464, %v2994
        %v2996 = vpop.f32.mrf.mxu0
        %v2997 = vadd.f32 %v2468, %v2996
        %2998 = vmatprep.mubr.bf16.mxu0 0
        %2999 = vmatmul.mubr.bf16.gmra.mxu0 %v2392
        %v3000 = vpop.f32.mrf.mxu0
        %v3001 = vadd.f32 %v2464, %v3000
        %v3002 = vpop.f32.mrf.mxu0
        %v3003 = vadd.f32 %v2468, %v3002
        %v3004 = vpop.f32.mrf.mxu0
        %v3005 = vadd.f32 %v2464, %v3004
        %v3006 = vpop.f32.mrf.mxu0
        %v3007 = vadd.f32 %v2468, %v3006
        %3008 = vmatprep.mubr.bf16.mxu0 0
        %3009 = vmatmul.mubr.bf16.gmra.mxu0 %v2393
        %v3010 = vpop.f32.mrf.mxu0
        %v3011 = vadd.f32 %v2464, %v3010
        %v3012 = vpop.f32.mrf.mxu0
        %v3013 = vadd.f32 %v2468, %v3012
        %v3014 = vpop.f32.mrf.mxu0
        %v3015 = vadd.f32 %v2464, %v3014
        %v3016 = vpop.f32.mrf.mxu0
        %v3017 = vadd.f32 %v2468, %v3016
        %3018 = vmatprep.mubr.bf16.mxu0 0
        %3019 = vmatmul.mubr.bf16.gmra.mxu0 %v2394
        %v3020 = vpop.f32.mrf.mxu0
        %v3021 = vadd.f32 %v2464, %v3020
        %v3022 = vpop.f32.mrf.mxu0
        %v3023 = vadd.f32 %v2468, %v3022
        %v3024 = vpop.f32.mrf.mxu0
        %v3025 = vadd.f32 %v2464, %v3024
        %v3026 = vpop.f32.mrf.mxu0
        %v3027 = vadd.f32 %v2468, %v3026
        %3028 = vmatprep.mubr.bf16.mxu0 0
        %3029 = vmatmul.mubr.bf16.gmra.mxu0 %v2395
        %v3030 = vpop.f32.mrf.mxu0
        %v3031 = vadd.f32 %v2464, %v3030
        %v3032 = vpop.f32.mrf.mxu0
        %v3033 = vadd.f32 %v2468, %v3032
        %v3034 = vpop.f32.mrf.mxu0
        %v3035 = vadd.f32 %v2464, %v3034
        %v3036 = vpop.f32.mrf.mxu0
        %v3037 = vadd.f32 %v2468, %v3036
        %3038 = vmatprep.mubr.bf16.mxu0 0
        %3039 = vmatmul.mubr.bf16.gmra.mxu0 %v2396
        %v3040 = vpop.f32.mrf.mxu0
        %v3041 = vadd.f32 %v2464, %v3040
        %v3042 = vpop.f32.mrf.mxu0
        %v3043 = vadd.f32 %v2468, %v3042
        %v3044 = vpop.f32.mrf.mxu0
        %v3045 = vadd.f32 %v2464, %v3044
        %v3046 = vpop.f32.mrf.mxu0
        %v3047 = vadd.f32 %v2468, %v3046
        %3048 = vmatprep.mubr.bf16.mxu0 0
        %3049 = vmatmul.mubr.bf16.gmra.mxu0 %v2397
        %v3050 = vpop.f32.mrf.mxu0
        %v3051 = vadd.f32 %v2464, %v3050
        %v3052 = vpop.f32.mrf.mxu0
        %v3053 = vadd.f32 %v2468, %v3052
        %v3054 = vpop.f32.mrf.mxu0
        %v3055 = vadd.f32 %v2464, %v3054
        %v3056 = vpop.f32.mrf.mxu0
        %v3057 = vadd.f32 %v2468, %v3056
        %3058 = vmatprep.mubr.bf16.mxu0 0
        %3059 = vmatmul.mubr.bf16.gmra.mxu0 %v2398
        %v3060 = vpop.f32.mrf.mxu0
        %v3061 = vadd.f32 %v2464, %v3060
        %v3062 = vpop.f32.mrf.mxu0
        %v3063 = vadd.f32 %v2468, %v3062
        %v3064 = vpop.f32.mrf.mxu0
        %v3065 = vadd.f32 %v2464, %v3064
        %v3066 = vpop.f32.mrf.mxu0
        %v3067 = vadd.f32 %v2468, %v3066
        %3068 = vmatprep.mubr.bf16.mxu0 0
        %3069 = vmatmul.mubr.bf16.gmra.mxu0 %v2399
        %v3070 = vpop.f32.mrf.mxu0
        %v3071 = vadd.f32 %v2464, %v3070
        %v3072 = vpop.f32.mrf.mxu0
        %v3073 = vadd.f32 %v2468, %v3072
        %v3074 = vpop.f32.mrf.mxu0
        %v3075 = vadd.f32 %v2464, %v3074
        %v3076 = vpop.f32.mrf.mxu0
        %v3077 = vadd.f32 %v2468, %v3076
        %3078 = vmatprep.mubr.bf16.mxu0 0
        %3079 = vmatmul.mubr.bf16.gmra.mxu0 %v2400
        %v3080 = vpop.f32.mrf.mxu0
        %v3081 = vadd.f32 %v2464, %v3080
        %v3082 = vpop.f32.mrf.mxu0
        %v3083 = vadd.f32 %v2468, %v3082
        %v3084 = vpop.f32.mrf.mxu0
        %v3085 = vadd.f32 %v2464, %v3084
        %v3086 = vpop.f32.mrf.mxu0
        %v3087 = vadd.f32 %v2468, %v3086
        %3088 = vmatprep.mubr.bf16.mxu0 0
        %3089 = vmatmul.mubr.bf16.gmra.mxu0 %v2401
        %v3090 = vpop.f32.mrf.mxu0
        %v3091 = vadd.f32 %v2464, %v3090
        %v3092 = vpop.f32.mrf.mxu0
        %v3093 = vadd.f32 %v2468, %v3092
        %v3094 = vpop.f32.mrf.mxu0
        %v3095 = vadd.f32 %v2464, %v3094
        %v3096 = vpop.f32.mrf.mxu0
        %v3097 = vadd.f32 %v2468, %v3096
        %3098 = vmatprep.mubr.bf16.mxu0 0
        %3099 = vmatmul.mubr.bf16.gmra.mxu0 %v2402
        %v3100 = vpop.f32.mrf.mxu0
        %v3101 = vadd.f32 %v2464, %v3100
        %v3102 = vpop.f32.mrf.mxu0
        %v3103 = vadd.f32 %v2468, %v3102
        %v3104 = vpop.f32.mrf.mxu0
        %v3105 = vadd.f32 %v2464, %v3104
        %v3106 = vpop.f32.mrf.mxu0
        %v3107 = vadd.f32 %v2468, %v3106
        %3108 = vdwg.mxu0
        %3109 = vmatprep.subr.bf16.mxu0 %v2674
        %3110 = vmatpush1.bf16.msra.mxu0 %v2673
        %3111 = vmatprep.subr.bf16.mxu0 %v2668
        %3112 = vmatpush1.bf16.msra.mxu0 %v2667
        %3113 = vmatprep.subr.bf16.mxu0 %v2662
        %3114 = vmatpush1.bf16.msra.mxu0 %v2661
        %3115 = vmatprep.subr.bf16.mxu0 %v2656
        %3116 = vmatpush1.bf16.msra.mxu0 %v2655
        %3117 = vmatprep.subr.bf16.mxu0 %v2650
        %3118 = vmatpush1.bf16.msra.mxu0 %v2649
        %3119 = vmatprep.subr.bf16.mxu0 %v2644
        %3120 = vmatpush1.bf16.msra.mxu0 %v2643
        %3121 = vmatprep.subr.bf16.mxu0 %v2638
        %3122 = vmatpush1.bf16.msra.mxu0 %v2637
        %3123 = vmatprep.subr.bf16.mxu0 %v2632
        %3124 = vmatpush1.bf16.msra.mxu0 %v2631
        %3125 = vmatprep.subr.bf16.mxu0 0
        %3126 = vmatpush2.bf16.msra.mxu0 0
        %3127 = vmatprep.subr.bf16.mxu0 0
        %3128 = vmatpush2.bf16.msra.mxu0 0
        %3129 = vmatprep.subr.bf16.mxu0 0
        %3130 = vmatpush2.bf16.msra.mxu0 0
        %3131 = vmatprep.subr.bf16.mxu0 0
        %3132 = vmatpush2.bf16.msra.mxu0 0
        %3133 = vmatprep.subr.bf16.mxu0 0
        %3134 = vmatpush2.bf16.msra.mxu0 0
        %3135 = vmatprep.subr.bf16.mxu0 0
        %3136 = vmatpush2.bf16.msra.mxu0 0
        %3137 = vmatprep.subr.bf16.mxu0 0
        %3138 = vmatpush2.bf16.msra.mxu0 0
        %3139 = vmatprep.subr.bf16.mxu0 0
        %3140 = vmatpush2.bf16.msra.mxu0 0
        %3141 = vmatprep.mubr.bf16.mxu0 0
        %3142 = vmatmul.mubr.bf16.gmra.mxu0 %v2387
        %v3143 = vpop.f32.mrf.mxu0
        %v3144 = vadd.f32 %v2472, %v3143
        %v3145 = vpop.f32.mrf.mxu0
        %v3146 = vadd.f32 %v2476, %v3145
        %v3147 = vpop.f32.mrf.mxu0
        %v3148 = vadd.f32 %v2472, %v3147
        %v3149 = vpop.f32.mrf.mxu0
        %v3150 = vadd.f32 %v2476, %v3149
        %3151 = vmatprep.mubr.bf16.mxu0 0
        %3152 = vmatmul.mubr.bf16.gmra.mxu0 %v2388
        %v3153 = vpop.f32.mrf.mxu0
        %v3154 = vadd.f32 %v2472, %v3153
        %v3155 = vpop.f32.mrf.mxu0
        %v3156 = vadd.f32 %v2476, %v3155
        %v3157 = vpop.f32.mrf.mxu0
        %v3158 = vadd.f32 %v2472, %v3157
        %v3159 = vpop.f32.mrf.mxu0
        %v3160 = vadd.f32 %v2476, %v3159
        %3161 = vmatprep.mubr.bf16.mxu0 0
        %3162 = vmatmul.mubr.bf16.gmra.mxu0 %v2389
        %v3163 = vpop.f32.mrf.mxu0
        %v3164 = vadd.f32 %v2472, %v3163
        %v3165 = vpop.f32.mrf.mxu0
        %v3166 = vadd.f32 %v2476, %v3165
        %v3167 = vpop.f32.mrf.mxu0
        %v3168 = vadd.f32 %v2472, %v3167
        %v3169 = vpop.f32.mrf.mxu0
        %v3170 = vadd.f32 %v2476, %v3169
        %3171 = vmatprep.mubr.bf16.mxu0 0
        %3172 = vmatmul.mubr.bf16.gmra.mxu0 %v2390
        %v3173 = vpop.f32.mrf.mxu0
        %v3174 = vadd.f32 %v2472, %v3173
        %v3175 = vpop.f32.mrf.mxu0
        %v3176 = vadd.f32 %v2476, %v3175
        %v3177 = vpop.f32.mrf.mxu0
        %v3178 = vadd.f32 %v2472, %v3177
        %v3179 = vpop.f32.mrf.mxu0
        %v3180 = vadd.f32 %v2476, %v3179
        %3181 = vmatprep.mubr.bf16.mxu0 0
        %3182 = vmatmul.mubr.bf16.gmra.mxu0 %v2391
        %v3183 = vpop.f32.mrf.mxu0
        %v3184 = vadd.f32 %v2472, %v3183
        %v3185 = vpop.f32.mrf.mxu0
        %v3186 = vadd.f32 %v2476, %v3185
        %v3187 = vpop.f32.mrf.mxu0
        %v3188 = vadd.f32 %v2472, %v3187
        %v3189 = vpop.f32.mrf.mxu0
        %v3190 = vadd.f32 %v2476, %v3189
        %3191 = vmatprep.mubr.bf16.mxu0 0
        %3192 = vmatmul.mubr.bf16.gmra.mxu0 %v2392
        %v3193 = vpop.f32.mrf.mxu0
        %v3194 = vadd.f32 %v2472, %v3193
        %v3195 = vpop.f32.mrf.mxu0
        %v3196 = vadd.f32 %v2476, %v3195
        %v3197 = vpop.f32.mrf.mxu0
        %v3198 = vadd.f32 %v2472, %v3197
        %v3199 = vpop.f32.mrf.mxu0
        %v3200 = vadd.f32 %v2476, %v3199
        %3201 = vmatprep.mubr.bf16.mxu0 0
        %3202 = vmatmul.mubr.bf16.gmra.mxu0 %v2393
        %v3203 = vpop.f32.mrf.mxu0
        %v3204 = vadd.f32 %v2472, %v3203
        %v3205 = vpop.f32.mrf.mxu0
        %v3206 = vadd.f32 %v2476, %v3205
        %v3207 = vpop.f32.mrf.mxu0
        %v3208 = vadd.f32 %v2472, %v3207
        %v3209 = vpop.f32.mrf.mxu0
        %v3210 = vadd.f32 %v2476, %v3209
        %3211 = vmatprep.mubr.bf16.mxu0 0
        %3212 = vmatmul.mubr.bf16.gmra.mxu0 %v2394
        %v3213 = vpop.f32.mrf.mxu0
        %v3214 = vadd.f32 %v2472, %v3213
        %v3215 = vpop.f32.mrf.mxu0
        %v3216 = vadd.f32 %v2476, %v3215
        %v3217 = vpop.f32.mrf.mxu0
        %v3218 = vadd.f32 %v2472, %v3217
        %v3219 = vpop.f32.mrf.mxu0
        %v3220 = vadd.f32 %v2476, %v3219
        %3221 = vmatprep.mubr.bf16.mxu0 0
        %3222 = vmatmul.mubr.bf16.gmra.mxu0 %v2395
        %v3223 = vpop.f32.mrf.mxu0
        %v3224 = vadd.f32 %v2472, %v3223
        %v3225 = vpop.f32.mrf.mxu0
        %v3226 = vadd.f32 %v2476, %v3225
        %v3227 = vpop.f32.mrf.mxu0
        %v3228 = vadd.f32 %v2472, %v3227
        %v3229 = vpop.f32.mrf.mxu0
        %v3230 = vadd.f32 %v2476, %v3229
        %3231 = vmatprep.mubr.bf16.mxu0 0
        %3232 = vmatmul.mubr.bf16.gmra.mxu0 %v2396
        %v3233 = vpop.f32.mrf.mxu0
        %v3234 = vadd.f32 %v2472, %v3233
        %v3235 = vpop.f32.mrf.mxu0
        %v3236 = vadd.f32 %v2476, %v3235
        %v3237 = vpop.f32.mrf.mxu0
        %v3238 = vadd.f32 %v2472, %v3237
        %v3239 = vpop.f32.mrf.mxu0
        %v3240 = vadd.f32 %v2476, %v3239
        %3241 = vmatprep.mubr.bf16.mxu0 0
        %3242 = vmatmul.mubr.bf16.gmra.mxu0 %v2397
        %v3243 = vpop.f32.mrf.mxu0
        %v3244 = vadd.f32 %v2472, %v3243
        %v3245 = vpop.f32.mrf.mxu0
        %v3246 = vadd.f32 %v2476, %v3245
        %v3247 = vpop.f32.mrf.mxu0
        %v3248 = vadd.f32 %v2472, %v3247
        %v3249 = vpop.f32.mrf.mxu0
        %v3250 = vadd.f32 %v2476, %v3249
        %3251 = vmatprep.mubr.bf16.mxu0 0
        %3252 = vmatmul.mubr.bf16.gmra.mxu0 %v2398
        %v3253 = vpop.f32.mrf.mxu0
        %v3254 = vadd.f32 %v2472, %v3253
        %v3255 = vpop.f32.mrf.mxu0
        %v3256 = vadd.f32 %v2476, %v3255
        %v3257 = vpop.f32.mrf.mxu0
        %v3258 = vadd.f32 %v2472, %v3257
        %v3259 = vpop.f32.mrf.mxu0
        %v3260 = vadd.f32 %v2476, %v3259
        %3261 = vmatprep.mubr.bf16.mxu0 0
        %3262 = vmatmul.mubr.bf16.gmra.mxu0 %v2399
        %v3263 = vpop.f32.mrf.mxu0
        %v3264 = vadd.f32 %v2472, %v3263
        %v3265 = vpop.f32.mrf.mxu0
        %v3266 = vadd.f32 %v2476, %v3265
        %v3267 = vpop.f32.mrf.mxu0
        %v3268 = vadd.f32 %v2472, %v3267
        %v3269 = vpop.f32.mrf.mxu0
        %v3270 = vadd.f32 %v2476, %v3269
        %3271 = vmatprep.mubr.bf16.mxu0 0
        %3272 = vmatmul.mubr.bf16.gmra.mxu0 %v2400
        %v3273 = vpop.f32.mrf.mxu0
        %v3274 = vadd.f32 %v2472, %v3273
        %v3275 = vpop.f32.mrf.mxu0
        %v3276 = vadd.f32 %v2476, %v3275
        %v3277 = vpop.f32.mrf.mxu0
        %v3278 = vadd.f32 %v2472, %v3277
        %v3279 = vpop.f32.mrf.mxu0
        %v3280 = vadd.f32 %v2476, %v3279
        %3281 = vmatprep.mubr.bf16.mxu0 0
        %3282 = vmatmul.mubr.bf16.gmra.mxu0 %v2401
        %v3283 = vpop.f32.mrf.mxu0
        %v3284 = vadd.f32 %v2472, %v3283
        %v3285 = vpop.f32.mrf.mxu0
        %v3286 = vadd.f32 %v2476, %v3285
        %v3287 = vpop.f32.mrf.mxu0
        %v3288 = vadd.f32 %v2472, %v3287
        %v3289 = vpop.f32.mrf.mxu0
        %v3290 = vadd.f32 %v2476, %v3289
        %3291 = vmatprep.mubr.bf16.mxu0 0
        %3292 = vmatmul.mubr.bf16.gmra.mxu0 %v2402
        %v3293 = vpop.f32.mrf.mxu0
        %v3294 = vadd.f32 %v2472, %v3293
        %v3295 = vpop.f32.mrf.mxu0
        %v3296 = vadd.f32 %v2476, %v3295
        %v3297 = vpop.f32.mrf.mxu0
        %v3298 = vadd.f32 %v2472, %v3297
        %v3299 = vpop.f32.mrf.mxu0
        %v3300 = vadd.f32 %v2476, %v3299
        %3301 = vdwg.mxu0
        %v3302 = vmul.f32 %v2758, %v2758
        %v3303 = vmul.f32 %v2760, %v2760
        %v3304 = vmul.f32 %v2951, %v2951
        %v3305 = vmul.f32 %v2953, %v2953
        %v3306 = vmul.f32 %v3144, %v3144
        %v3307 = vmul.f32 %v3146, %v3146
        %v3308 = vmul.f32 %v2762, %v2762
        %v3309 = vmul.f32 %v2764, %v2764
        %v3310 = vmul.f32 %v2955, %v2955
        %v3311 = vmul.f32 %v2957, %v2957
        %v3312 = vmul.f32 %v3148, %v3148
        %v3313 = vmul.f32 %v3150, %v3150
        %v3314 = vmul.f32 %v2768, %v2768
        %v3315 = vmul.f32 %v2770, %v2770
        %v3316 = vmul.f32 %v2961, %v2961
        %v3317 = vmul.f32 %v2963, %v2963
        %v3318 = vmul.f32 %v3154, %v3154
        %v3319 = vmul.f32 %v3156, %v3156
        %v3320 = vmul.f32 %v2772, %v2772
        %v3321 = vmul.f32 %v2774, %v2774
        %v3322 = vmul.f32 %v2965, %v2965
        %v3323 = vmul.f32 %v2967, %v2967
        %v3324 = vmul.f32 %v3158, %v3158
        %v3325 = vmul.f32 %v3160, %v3160
        %v3326 = vmul.f32 %v2778, %v2778
        %v3327 = vmul.f32 %v2780, %v2780
        %v3328 = vmul.f32 %v2971, %v2971
        %v3329 = vmul.f32 %v2973, %v2973
        %v3330 = vmul.f32 %v3164, %v3164
        %v3331 = vmul.f32 %v3166, %v3166
        %v3332 = vmul.f32 %v2782, %v2782
        %v3333 = vmul.f32 %v2784, %v2784
        %v3334 = vmul.f32 %v2975, %v2975
        %v3335 = vmul.f32 %v2977, %v2977
        %v3336 = vmul.f32 %v3168, %v3168
        %v3337 = vmul.f32 %v3170, %v3170
        %v3338 = vmul.f32 %v2788, %v2788
        %v3339 = vmul.f32 %v2790, %v2790
        %v3340 = vmul.f32 %v2981, %v2981
        %v3341 = vmul.f32 %v2983, %v2983
        %v3342 = vmul.f32 %v3174, %v3174
        %v3343 = vmul.f32 %v3176, %v3176
        %v3344 = vmul.f32 %v2792, %v2792
        %v3345 = vmul.f32 %v2794, %v2794
        %v3346 = vmul.f32 %v2985, %v2985
        %v3347 = vmul.f32 %v2987, %v2987
        %v3348 = vmul.f32 %v3178, %v3178
        %v3349 = vmul.f32 %v3180, %v3180
        %v3350 = vmul.f32 %v2798, %v2798
        %v3351 = vmul.f32 %v2800, %v2800
        %v3352 = vmul.f32 %v2991, %v2991
        %v3353 = vmul.f32 %v2993, %v2993
        %v3354 = vmul.f32 %v3184, %v3184
        %v3355 = vmul.f32 %v3186, %v3186
        %v3356 = vmul.f32 %v2802, %v2802
        %v3357 = vmul.f32 %v2804, %v2804
        %v3358 = vmul.f32 %v2995, %v2995
        %v3359 = vmul.f32 %v2997, %v2997
        %v3360 = vmul.f32 %v3188, %v3188
        %v3361 = vmul.f32 %v3190, %v3190
        %v3362 = vmul.f32 %v2808, %v2808
        %v3363 = vmul.f32 %v2810, %v2810
        %v3364 = vmul.f32 %v3001, %v3001
        %v3365 = vmul.f32 %v3003, %v3003
        %v3366 = vmul.f32 %v3194, %v3194
        %v3367 = vmul.f32 %v3196, %v3196
        %v3368 = vmul.f32 %v2812, %v2812
        %v3369 = vmul.f32 %v2814, %v2814
        %v3370 = vmul.f32 %v3005, %v3005
        %v3371 = vmul.f32 %v3007, %v3007
        %v3372 = vmul.f32 %v3198, %v3198
        %v3373 = vmul.f32 %v3200, %v3200
        %v3374 = vmul.f32 %v2818, %v2818
        %v3375 = vmul.f32 %v2820, %v2820
        %v3376 = vmul.f32 %v3011, %v3011
        %v3377 = vmul.f32 %v3013, %v3013
        %v3378 = vmul.f32 %v3204, %v3204
        %v3379 = vmul.f32 %v3206, %v3206
        %v3380 = vmul.f32 %v2822, %v2822
        %v3381 = vmul.f32 %v2824, %v2824
        %v3382 = vmul.f32 %v3015, %v3015
        %v3383 = vmul.f32 %v3017, %v3017
        %v3384 = vmul.f32 %v3208, %v3208
        %v3385 = vmul.f32 %v3210, %v3210
        %v3386 = vmul.f32 %v2828, %v2828
        %v3387 = vmul.f32 %v2830, %v2830
        %v3388 = vmul.f32 %v3021, %v3021
        %v3389 = vmul.f32 %v3023, %v3023
        %v3390 = vmul.f32 %v3214, %v3214
        %v3391 = vmul.f32 %v3216, %v3216
        %v3392 = vmul.f32 %v2832, %v2832
        %v3393 = vmul.f32 %v2834, %v2834
        %v3394 = vmul.f32 %v3025, %v3025
        %v3395 = vmul.f32 %v3027, %v3027
        %v3396 = vmul.f32 %v3218, %v3218
        %v3397 = vmul.f32 %v3220, %v3220
        %v3398 = vmul.f32 %v2838, %v2838
        %v3399 = vmul.f32 %v2840, %v2840
        %v3400 = vmul.f32 %v3031, %v3031
        %v3401 = vmul.f32 %v3033, %v3033
        %v3402 = vmul.f32 %v3224, %v3224
        %v3403 = vmul.f32 %v3226, %v3226
        %v3404 = vmul.f32 %v2842, %v2842
        %v3405 = vmul.f32 %v2844, %v2844
        %v3406 = vmul.f32 %v3035, %v3035
        %v3407 = vmul.f32 %v3037, %v3037
        %v3408 = vmul.f32 %v3228, %v3228
        %v3409 = vmul.f32 %v3230, %v3230
        %v3410 = vmul.f32 %v2848, %v2848
        %v3411 = vmul.f32 %v2850, %v2850
        %v3412 = vmul.f32 %v3041, %v3041
        %v3413 = vmul.f32 %v3043, %v3043
        %v3414 = vmul.f32 %v3234, %v3234
        %v3415 = vmul.f32 %v3236, %v3236
        %v3416 = vmul.f32 %v2852, %v2852
        %v3417 = vmul.f32 %v2854, %v2854
        %v3418 = vmul.f32 %v3045, %v3045
        %v3419 = vmul.f32 %v3047, %v3047
        %v3420 = vmul.f32 %v3238, %v3238
        %v3421 = vmul.f32 %v3240, %v3240
        %v3422 = vmul.f32 %v2858, %v2858
        %v3423 = vmul.f32 %v2860, %v2860
        %v3424 = vmul.f32 %v3051, %v3051
        %v3425 = vmul.f32 %v3053, %v3053
        %v3426 = vmul.f32 %v3244, %v3244
        %v3427 = vmul.f32 %v3246, %v3246
        %v3428 = vmul.f32 %v2862, %v2862
        %v3429 = vmul.f32 %v2864, %v2864
        %v3430 = vmul.f32 %v3055, %v3055
        %v3431 = vmul.f32 %v3057, %v3057
        %v3432 = vmul.f32 %v3248, %v3248
        %v3433 = vmul.f32 %v3250, %v3250
        %v3434 = vmul.f32 %v2868, %v2868
        %v3435 = vmul.f32 %v2870, %v2870
        %v3436 = vmul.f32 %v3061, %v3061
        %v3437 = vmul.f32 %v3063, %v3063
        %v3438 = vmul.f32 %v3254, %v3254
        %v3439 = vmul.f32 %v3256, %v3256
        %v3440 = vmul.f32 %v2872, %v2872
        %v3441 = vmul.f32 %v2874, %v2874
        %v3442 = vmul.f32 %v3065, %v3065
        %v3443 = vmul.f32 %v3067, %v3067
        %v3444 = vmul.f32 %v3258, %v3258
        %v3445 = vmul.f32 %v3260, %v3260
        %v3446 = vmul.f32 %v2878, %v2878
        %v3447 = vmul.f32 %v2880, %v2880
        %v3448 = vmul.f32 %v3071, %v3071
        %v3449 = vmul.f32 %v3073, %v3073
        %v3450 = vmul.f32 %v3264, %v3264
        %v3451 = vmul.f32 %v3266, %v3266
        %v3452 = vmul.f32 %v2882, %v2882
        %v3453 = vmul.f32 %v2884, %v2884
        %v3454 = vmul.f32 %v3075, %v3075
        %v3455 = vmul.f32 %v3077, %v3077
        %v3456 = vmul.f32 %v3268, %v3268
        %v3457 = vmul.f32 %v3270, %v3270
        %v3458 = vmul.f32 %v2888, %v2888
        %v3459 = vmul.f32 %v2890, %v2890
        %v3460 = vmul.f32 %v3081, %v3081
        %v3461 = vmul.f32 %v3083, %v3083
        %v3462 = vmul.f32 %v3274, %v3274
        %v3463 = vmul.f32 %v3276, %v3276
        %v3464 = vmul.f32 %v2892, %v2892
        %v3465 = vmul.f32 %v2894, %v2894
        %v3466 = vmul.f32 %v3085, %v3085
        %v3467 = vmul.f32 %v3087, %v3087
        %v3468 = vmul.f32 %v3278, %v3278
        %v3469 = vmul.f32 %v3280, %v3280
        %v3470 = vmul.f32 %v2898, %v2898
        %v3471 = vmul.f32 %v2900, %v2900
        %v3472 = vmul.f32 %v3091, %v3091
        %v3473 = vmul.f32 %v3093, %v3093
        %v3474 = vmul.f32 %v3284, %v3284
        %v3475 = vmul.f32 %v3286, %v3286
        %v3476 = vmul.f32 %v2902, %v2902
        %v3477 = vmul.f32 %v2904, %v2904
        %v3478 = vmul.f32 %v3095, %v3095
        %v3479 = vmul.f32 %v3097, %v3097
        %v3480 = vmul.f32 %v3288, %v3288
        %v3481 = vmul.f32 %v3290, %v3290
        %v3482 = vmul.f32 %v2908, %v2908
        %v3483 = vmul.f32 %v2910, %v2910
        %v3484 = vmul.f32 %v3101, %v3101
        %v3485 = vmul.f32 %v3103, %v3103
        %v3486 = vmul.f32 %v3294, %v3294
        %v3487 = vmul.f32 %v3296, %v3296
        %v3488 = vmul.f32 %v2912, %v2912
        %v3489 = vmul.f32 %v2914, %v2914
        %v3490 = vmul.f32 %v3105, %v3105
        %v3491 = vmul.f32 %v3107, %v3107
        %v3492 = vmul.f32 %v3298, %v3298
        %v3493 = vmul.f32 %v3300, %v3300
        %v3494 = vadd.f32 %v3302, %v3303
        %v3495 = vadd.f32 %v3494, %v3304
        %v3496 = vadd.f32 %v3495, %v3305
        %v3497 = vadd.f32 %v3496, %v3306
        %v3498 = vadd.f32 %v3497, %v3307
        %3499 = vadd.xlane.f32.xlu0 %v3498
        %v3500 = vpop.xlane.xlu0 %3499
        %v3501 = vadd.f32 %v3308, %v3309
        %v3502 = vadd.f32 %v3501, %v3310
        %v3503 = vadd.f32 %v3502, %v3311
        %v3504 = vadd.f32 %v3503, %v3312
        %v3505 = vadd.f32 %v3504, %v3313
        %3506 = vadd.xlane.f32.xlu0 %v3505
        %v3507 = vpop.xlane.xlu0 %3506
        %v3508 = vadd.f32 %v3314, %v3315
        %v3509 = vadd.f32 %v3508, %v3316
        %v3510 = vadd.f32 %v3509, %v3317
        %v3511 = vadd.f32 %v3510, %v3318
        %v3512 = vadd.f32 %v3511, %v3319
        %3513 = vadd.xlane.f32.xlu0 %v3512
        %v3514 = vpop.xlane.xlu0 %3513
        %v3515 = vadd.f32 %v3320, %v3321
        %v3516 = vadd.f32 %v3515, %v3322
        %v3517 = vadd.f32 %v3516, %v3323
        %v3518 = vadd.f32 %v3517, %v3324
        %v3519 = vadd.f32 %v3518, %v3325
        %3520 = vadd.xlane.f32.xlu0 %v3519
        %v3521 = vpop.xlane.xlu0 %3520
        %v3522 = vadd.f32 %v3326, %v3327
        %v3523 = vadd.f32 %v3522, %v3328
        %v3524 = vadd.f32 %v3523, %v3329
        %v3525 = vadd.f32 %v3524, %v3330
        %v3526 = vadd.f32 %v3525, %v3331
        %3527 = vadd.xlane.f32.xlu0 %v3526
        %v3528 = vpop.xlane.xlu0 %3527
        %v3529 = vadd.f32 %v3332, %v3333
        %v3530 = vadd.f32 %v3529, %v3334
        %v3531 = vadd.f32 %v3530, %v3335
        %v3532 = vadd.f32 %v3531, %v3336
        %v3533 = vadd.f32 %v3532, %v3337
        %3534 = vadd.xlane.f32.xlu0 %v3533
        %v3535 = vpop.xlane.xlu0 %3534
        %v3536 = vadd.f32 %v3338, %v3339
        %v3537 = vadd.f32 %v3536, %v3340
        %v3538 = vadd.f32 %v3537, %v3341
        %v3539 = vadd.f32 %v3538, %v3342
        %v3540 = vadd.f32 %v3539, %v3343
        %3541 = vadd.xlane.f32.xlu0 %v3540
        %v3542 = vpop.xlane.xlu0 %3541
        %v3543 = vadd.f32 %v3344, %v3345
        %v3544 = vadd.f32 %v3543, %v3346
        %v3545 = vadd.f32 %v3544, %v3347
        %v3546 = vadd.f32 %v3545, %v3348
        %v3547 = vadd.f32 %v3546, %v3349
        %3548 = vadd.xlane.f32.xlu0 %v3547
        %v3549 = vpop.xlane.xlu0 %3548
        %v3550 = vadd.f32 %v3350, %v3351
        %v3551 = vadd.f32 %v3550, %v3352
        %v3552 = vadd.f32 %v3551, %v3353
        %v3553 = vadd.f32 %v3552, %v3354
        %v3554 = vadd.f32 %v3553, %v3355
        %3555 = vadd.xlane.f32.xlu0 %v3554
        %v3556 = vpop.xlane.xlu0 %3555
        %v3557 = vadd.f32 %v3356, %v3357
        %v3558 = vadd.f32 %v3557, %v3358
        %v3559 = vadd.f32 %v3558, %v3359
        %v3560 = vadd.f32 %v3559, %v3360
        %v3561 = vadd.f32 %v3560, %v3361
        %3562 = vadd.xlane.f32.xlu0 %v3561
        %v3563 = vpop.xlane.xlu0 %3562
        %v3564 = vadd.f32 %v3362, %v3363
        %v3565 = vadd.f32 %v3564, %v3364
        %v3566 = vadd.f32 %v3565, %v3365
        %v3567 = vadd.f32 %v3566, %v3366
        %v3568 = vadd.f32 %v3567, %v3367
        %3569 = vadd.xlane.f32.xlu0 %v3568
        %v3570 = vpop.xlane.xlu0 %3569
        %v3571 = vadd.f32 %v3368, %v3369
        %v3572 = vadd.f32 %v3571, %v3370
        %v3573 = vadd.f32 %v3572, %v3371
        %v3574 = vadd.f32 %v3573, %v3372
        %v3575 = vadd.f32 %v3574, %v3373
        %3576 = vadd.xlane.f32.xlu0 %v3575
        %v3577 = vpop.xlane.xlu0 %3576
        %v3578 = vadd.f32 %v3374, %v3375
        %v3579 = vadd.f32 %v3578, %v3376
        %v3580 = vadd.f32 %v3579, %v3377
        %v3581 = vadd.f32 %v3580, %v3378
        %v3582 = vadd.f32 %v3581, %v3379
        %3583 = vadd.xlane.f32.xlu0 %v3582
        %v3584 = vpop.xlane.xlu0 %3583
        %v3585 = vadd.f32 %v3380, %v3381
        %v3586 = vadd.f32 %v3585, %v3382
        %v3587 = vadd.f32 %v3586, %v3383
        %v3588 = vadd.f32 %v3587, %v3384
        %v3589 = vadd.f32 %v3588, %v3385
        %3590 = vadd.xlane.f32.xlu0 %v3589
        %v3591 = vpop.xlane.xlu0 %3590
        %v3592 = vadd.f32 %v3386, %v3387
        %v3593 = vadd.f32 %v3592, %v3388
        %v3594 = vadd.f32 %v3593, %v3389
        %v3595 = vadd.f32 %v3594, %v3390
        %v3596 = vadd.f32 %v3595, %v3391
        %3597 = vadd.xlane.f32.xlu0 %v3596
        %v3598 = vpop.xlane.xlu0 %3597
        %v3599 = vadd.f32 %v3392, %v3393
        %v3600 = vadd.f32 %v3599, %v3394
        %v3601 = vadd.f32 %v3600, %v3395
        %v3602 = vadd.f32 %v3601, %v3396
        %v3603 = vadd.f32 %v3602, %v3397
        %3604 = vadd.xlane.f32.xlu0 %v3603
        %v3605 = vpop.xlane.xlu0 %3604
        %v3606 = vadd.f32 %v3398, %v3399
        %v3607 = vadd.f32 %v3606, %v3400
        %v3608 = vadd.f32 %v3607, %v3401
        %v3609 = vadd.f32 %v3608, %v3402
        %v3610 = vadd.f32 %v3609, %v3403
        %3611 = vadd.xlane.f32.xlu0 %v3610
        %v3612 = vpop.xlane.xlu0 %3611
        %v3613 = vadd.f32 %v3404, %v3405
        %v3614 = vadd.f32 %v3613, %v3406
        %v3615 = vadd.f32 %v3614, %v3407
        %v3616 = vadd.f32 %v3615, %v3408
        %v3617 = vadd.f32 %v3616, %v3409
        %3618 = vadd.xlane.f32.xlu0 %v3617
        %v3619 = vpop.xlane.xlu0 %3618
        %v3620 = vadd.f32 %v3410, %v3411
        %v3621 = vadd.f32 %v3620, %v3412
        %v3622 = vadd.f32 %v3621, %v3413
        %v3623 = vadd.f32 %v3622, %v3414
        %v3624 = vadd.f32 %v3623, %v3415
        %3625 = vadd.xlane.f32.xlu0 %v3624
        %v3626 = vpop.xlane.xlu0 %3625
        %v3627 = vadd.f32 %v3416, %v3417
        %v3628 = vadd.f32 %v3627, %v3418
        %v3629 = vadd.f32 %v3628, %v3419
        %v3630 = vadd.f32 %v3629, %v3420
        %v3631 = vadd.f32 %v3630, %v3421
        %3632 = vadd.xlane.f32.xlu0 %v3631
        %v3633 = vpop.xlane.xlu0 %3632
        %v3634 = vadd.f32 %v3422, %v3423
        %v3635 = vadd.f32 %v3634, %v3424
        %v3636 = vadd.f32 %v3635, %v3425
        %v3637 = vadd.f32 %v3636, %v3426
        %v3638 = vadd.f32 %v3637, %v3427
        %3639 = vadd.xlane.f32.xlu0 %v3638
        %v3640 = vpop.xlane.xlu0 %3639
        %v3641 = vadd.f32 %v3428, %v3429
        %v3642 = vadd.f32 %v3641, %v3430
        %v3643 = vadd.f32 %v3642, %v3431
        %v3644 = vadd.f32 %v3643, %v3432
        %v3645 = vadd.f32 %v3644, %v3433
        %3646 = vadd.xlane.f32.xlu0 %v3645
        %v3647 = vpop.xlane.xlu0 %3646
        %v3648 = vadd.f32 %v3434, %v3435
        %v3649 = vadd.f32 %v3648, %v3436
        %v3650 = vadd.f32 %v3649, %v3437
        %v3651 = vadd.f32 %v3650, %v3438
        %v3652 = vadd.f32 %v3651, %v3439
        %3653 = vadd.xlane.f32.xlu0 %v3652
        %v3654 = vpop.xlane.xlu0 %3653
        %v3655 = vadd.f32 %v3440, %v3441
        %v3656 = vadd.f32 %v3655, %v3442
        %v3657 = vadd.f32 %v3656, %v3443
        %v3658 = vadd.f32 %v3657, %v3444
        %v3659 = vadd.f32 %v3658, %v3445
        %3660 = vadd.xlane.f32.xlu0 %v3659
        %v3661 = vpop.xlane.xlu0 %3660
        %v3662 = vadd.f32 %v3446, %v3447
        %v3663 = vadd.f32 %v3662, %v3448
        %v3664 = vadd.f32 %v3663, %v3449
        %v3665 = vadd.f32 %v3664, %v3450
        %v3666 = vadd.f32 %v3665, %v3451
        %3667 = vadd.xlane.f32.xlu0 %v3666
        %v3668 = vpop.xlane.xlu0 %3667
        %v3669 = vadd.f32 %v3452, %v3453
        %v3670 = vadd.f32 %v3669, %v3454
        %v3671 = vadd.f32 %v3670, %v3455
        %v3672 = vadd.f32 %v3671, %v3456
        %v3673 = vadd.f32 %v3672, %v3457
        %3674 = vadd.xlane.f32.xlu0 %v3673
        %v3675 = vpop.xlane.xlu0 %3674
        %v3676 = vadd.f32 %v3458, %v3459
        %v3677 = vadd.f32 %v3676, %v3460
        %v3678 = vadd.f32 %v3677, %v3461
        %v3679 = vadd.f32 %v3678, %v3462
        %v3680 = vadd.f32 %v3679, %v3463
        %3681 = vadd.xlane.f32.xlu0 %v3680
        %v3682 = vpop.xlane.xlu0 %3681
        %v3683 = vadd.f32 %v3464, %v3465
        %v3684 = vadd.f32 %v3683, %v3466
        %v3685 = vadd.f32 %v3684, %v3467
        %v3686 = vadd.f32 %v3685, %v3468
        %v3687 = vadd.f32 %v3686, %v3469
        %3688 = vadd.xlane.f32.xlu0 %v3687
        %v3689 = vpop.xlane.xlu0 %3688
        %v3690 = vadd.f32 %v3470, %v3471
        %v3691 = vadd.f32 %v3690, %v3472
        %v3692 = vadd.f32 %v3691, %v3473
        %v3693 = vadd.f32 %v3692, %v3474
        %v3694 = vadd.f32 %v3693, %v3475
        %3695 = vadd.xlane.f32.xlu0 %v3694
        %v3696 = vpop.xlane.xlu0 %3695
        %v3697 = vadd.f32 %v3476, %v3477
        %v3698 = vadd.f32 %v3697, %v3478
        %v3699 = vadd.f32 %v3698, %v3479
        %v3700 = vadd.f32 %v3699, %v3480
        %v3701 = vadd.f32 %v3700, %v3481
        %3702 = vadd.xlane.f32.xlu0 %v3701
        %v3703 = vpop.xlane.xlu0 %3702
        %v3704 = vadd.f32 %v3482, %v3483
        %v3705 = vadd.f32 %v3704, %v3484
        %v3706 = vadd.f32 %v3705, %v3485
        %v3707 = vadd.f32 %v3706, %v3486
        %v3708 = vadd.f32 %v3707, %v3487
        %3709 = vadd.xlane.f32.xlu0 %v3708
        %v3710 = vpop.xlane.xlu0 %3709
        %v3711 = vadd.f32 %v3488, %v3489
        %v3712 = vadd.f32 %v3711, %v3490
        %v3713 = vadd.f32 %v3712, %v3491
        %v3714 = vadd.f32 %v3713, %v3492
        %v3715 = vadd.f32 %v3714, %v3493
        %3716 = vadd.xlane.f32.xlu0 %v3715
        %v3717 = vpop.xlane.xlu0 %3716
        %v3718 = vmax.f32 %v3500, 1e-24
        %v3719 = vmax.f32 %v3507, 1e-24
        %v3720 = vmax.f32 %v3514, 1e-24
        %v3721 = vmax.f32 %v3521, 1e-24
        %v3722 = vmax.f32 %v3528, 1e-24
        %v3723 = vmax.f32 %v3535, 1e-24
        %v3724 = vmax.f32 %v3542, 1e-24
        %v3725 = vmax.f32 %v3549, 1e-24
        %v3726 = vmax.f32 %v3556, 1e-24
        %v3727 = vmax.f32 %v3563, 1e-24
        %v3728 = vmax.f32 %v3570, 1e-24
        %v3729 = vmax.f32 %v3577, 1e-24
        %v3730 = vmax.f32 %v3584, 1e-24
        %v3731 = vmax.f32 %v3591, 1e-24
        %v3732 = vmax.f32 %v3598, 1e-24
        %v3733 = vmax.f32 %v3605, 1e-24
        %v3734 = vmax.f32 %v3612, 1e-24
        %v3735 = vmax.f32 %v3619, 1e-24
        %v3736 = vmax.f32 %v3626, 1e-24
        %v3737 = vmax.f32 %v3633, 1e-24
        %v3738 = vmax.f32 %v3640, 1e-24
        %v3739 = vmax.f32 %v3647, 1e-24
        %v3740 = vmax.f32 %v3654, 1e-24
        %v3741 = vmax.f32 %v3661, 1e-24
        %v3742 = vmax.f32 %v3668, 1e-24
        %v3743 = vmax.f32 %v3675, 1e-24
        %v3744 = vmax.f32 %v3682, 1e-24
        %v3745 = vmax.f32 %v3689, 1e-24
        %v3746 = vmax.f32 %v3696, 1e-24
        %v3747 = vmax.f32 %v3703, 1e-24
        %v3748 = vmax.f32 %v3710, 1e-24
        %v3749 = vmax.f32 %v3717, 1e-24
        %v3750 = vrsqrt.pop %v3718
        %v3751 = vrsqrt.pop %v3719
        %v3752 = vrsqrt.pop %v3720
        %v3753 = vrsqrt.pop %v3721
        %v3754 = vrsqrt.pop %v3722
        %v3755 = vrsqrt.pop %v3723
        %v3756 = vrsqrt.pop %v3724
        %v3757 = vrsqrt.pop %v3725
        %v3758 = vrsqrt.pop %v3726
        %v3759 = vrsqrt.pop %v3727
        %v3760 = vrsqrt.pop %v3728
        %v3761 = vrsqrt.pop %v3729
        %v3762 = vrsqrt.pop %v3730
        %v3763 = vrsqrt.pop %v3731
        %v3764 = vrsqrt.pop %v3732
        %v3765 = vrsqrt.pop %v3733
        %v3766 = vrsqrt.pop %v3734
        %v3767 = vrsqrt.pop %v3735
        %v3768 = vrsqrt.pop %v3736
        %v3769 = vrsqrt.pop %v3737
        %v3770 = vrsqrt.pop %v3738
        %v3771 = vrsqrt.pop %v3739
        %v3772 = vrsqrt.pop %v3740
        %v3773 = vrsqrt.pop %v3741
        %v3774 = vrsqrt.pop %v3742
        %v3775 = vrsqrt.pop %v3743
        %v3776 = vrsqrt.pop %v3744
        %v3777 = vrsqrt.pop %v3745
        %v3778 = vrsqrt.pop %v3746
        %v3779 = vrsqrt.pop %v3747
        %v3780 = vrsqrt.pop %v3748
        %v3781 = vrsqrt.pop %v3749
        %v3782 = vmul.f32 %v2758, %v3750
        %v3783 = vmul.f32 %v2760, %v3750
        %v3784 = vmul.f32 %v2951, %v3750
        %v3785 = vmul.f32 %v2953, %v3750
        %v3786 = vmul.f32 %v3144, %v3750
        %v3787 = vmul.f32 %v3146, %v3750
        %v3788 = vmul.f32 %v2762, %v3751
        %v3789 = vmul.f32 %v2764, %v3751
        %v3790 = vmul.f32 %v2955, %v3751
        %v3791 = vmul.f32 %v2957, %v3751
        %v3792 = vmul.f32 %v3148, %v3751
        %v3793 = vmul.f32 %v3150, %v3751
        %v3794 = vmul.f32 %v2768, %v3752
        %v3795 = vmul.f32 %v2770, %v3752
        %v3796 = vmul.f32 %v2961, %v3752
        %v3797 = vmul.f32 %v2963, %v3752
        %v3798 = vmul.f32 %v3154, %v3752
        %v3799 = vmul.f32 %v3156, %v3752
        %v3800 = vmul.f32 %v2772, %v3753
        %v3801 = vmul.f32 %v2774, %v3753
        %v3802 = vmul.f32 %v2965, %v3753
        %v3803 = vmul.f32 %v2967, %v3753
        %v3804 = vmul.f32 %v3158, %v3753
        %v3805 = vmul.f32 %v3160, %v3753
        %v3806 = vmul.f32 %v2778, %v3754
        %v3807 = vmul.f32 %v2780, %v3754
        %v3808 = vmul.f32 %v2971, %v3754
        %v3809 = vmul.f32 %v2973, %v3754
        %v3810 = vmul.f32 %v3164, %v3754
        %v3811 = vmul.f32 %v3166, %v3754
        %v3812 = vmul.f32 %v2782, %v3755
        %v3813 = vmul.f32 %v2784, %v3755
        %v3814 = vmul.f32 %v2975, %v3755
        %v3815 = vmul.f32 %v2977, %v3755
        %v3816 = vmul.f32 %v3168, %v3755
        %v3817 = vmul.f32 %v3170, %v3755
        %v3818 = vmul.f32 %v2788, %v3756
        %v3819 = vmul.f32 %v2790, %v3756
        %v3820 = vmul.f32 %v2981, %v3756
        %v3821 = vmul.f32 %v2983, %v3756
        %v3822 = vmul.f32 %v3174, %v3756
        %v3823 = vmul.f32 %v3176, %v3756
        %v3824 = vmul.f32 %v2792, %v3757
        %v3825 = vmul.f32 %v2794, %v3757
        %v3826 = vmul.f32 %v2985, %v3757
        %v3827 = vmul.f32 %v2987, %v3757
        %v3828 = vmul.f32 %v3178, %v3757
        %v3829 = vmul.f32 %v3180, %v3757
        %v3830 = vmul.f32 %v2798, %v3758
        %v3831 = vmul.f32 %v2800, %v3758
        %v3832 = vmul.f32 %v2991, %v3758
        %v3833 = vmul.f32 %v2993, %v3758
        %v3834 = vmul.f32 %v3184, %v3758
        %v3835 = vmul.f32 %v3186, %v3758
        %v3836 = vmul.f32 %v2802, %v3759
        %v3837 = vmul.f32 %v2804, %v3759
        %v3838 = vmul.f32 %v2995, %v3759
        %v3839 = vmul.f32 %v2997, %v3759
        %v3840 = vmul.f32 %v3188, %v3759
        %v3841 = vmul.f32 %v3190, %v3759
        %v3842 = vmul.f32 %v2808, %v3760
        %v3843 = vmul.f32 %v2810, %v3760
        %v3844 = vmul.f32 %v3001, %v3760
        %v3845 = vmul.f32 %v3003, %v3760
        %v3846 = vmul.f32 %v3194, %v3760
        %v3847 = vmul.f32 %v3196, %v3760
        %v3848 = vmul.f32 %v2812, %v3761
        %v3849 = vmul.f32 %v2814, %v3761
        %v3850 = vmul.f32 %v3005, %v3761
        %v3851 = vmul.f32 %v3007, %v3761
        %v3852 = vmul.f32 %v3198, %v3761
        %v3853 = vmul.f32 %v3200, %v3761
        %v3854 = vmul.f32 %v2818, %v3762
        %v3855 = vmul.f32 %v2820, %v3762
        %v3856 = vmul.f32 %v3011, %v3762
        %v3857 = vmul.f32 %v3013, %v3762
        %v3858 = vmul.f32 %v3204, %v3762
        %v3859 = vmul.f32 %v3206, %v3762
        %v3860 = vmul.f32 %v2822, %v3763
        %v3861 = vmul.f32 %v2824, %v3763
        %v3862 = vmul.f32 %v3015, %v3763
        %v3863 = vmul.f32 %v3017, %v3763
        %v3864 = vmul.f32 %v3208, %v3763
        %v3865 = vmul.f32 %v3210, %v3763
        %v3866 = vmul.f32 %v2828, %v3764
        %v3867 = vmul.f32 %v2830, %v3764
        %v3868 = vmul.f32 %v3021, %v3764
        %v3869 = vmul.f32 %v3023, %v3764
        %v3870 = vmul.f32 %v3214, %v3764
        %v3871 = vmul.f32 %v3216, %v3764
        %v3872 = vmul.f32 %v2832, %v3765
        %v3873 = vmul.f32 %v2834, %v3765
        %v3874 = vmul.f32 %v3025, %v3765
        %v3875 = vmul.f32 %v3027, %v3765
        %v3876 = vmul.f32 %v3218, %v3765
        %v3877 = vmul.f32 %v3220, %v3765
        %v3878 = vmul.f32 %v2838, %v3766
        %v3879 = vmul.f32 %v2840, %v3766
        %v3880 = vmul.f32 %v3031, %v3766
        %v3881 = vmul.f32 %v3033, %v3766
        %v3882 = vmul.f32 %v3224, %v3766
        %v3883 = vmul.f32 %v3226, %v3766
        %v3884 = vmul.f32 %v2842, %v3767
        %v3885 = vmul.f32 %v2844, %v3767
        %v3886 = vmul.f32 %v3035, %v3767
        %v3887 = vmul.f32 %v3037, %v3767
        %v3888 = vmul.f32 %v3228, %v3767
        %v3889 = vmul.f32 %v3230, %v3767
        %v3890 = vmul.f32 %v2848, %v3768
        %v3891 = vmul.f32 %v2850, %v3768
        %v3892 = vmul.f32 %v3041, %v3768
        %v3893 = vmul.f32 %v3043, %v3768
        %v3894 = vmul.f32 %v3234, %v3768
        %v3895 = vmul.f32 %v3236, %v3768
        %v3896 = vmul.f32 %v2852, %v3769
        %v3897 = vmul.f32 %v2854, %v3769
        %v3898 = vmul.f32 %v3045, %v3769
        %v3899 = vmul.f32 %v3047, %v3769
        %v3900 = vmul.f32 %v3238, %v3769
        %v3901 = vmul.f32 %v3240, %v3769
        %v3902 = vmul.f32 %v2858, %v3770
        %v3903 = vmul.f32 %v2860, %v3770
        %v3904 = vmul.f32 %v3051, %v3770
        %v3905 = vmul.f32 %v3053, %v3770
        %v3906 = vmul.f32 %v3244, %v3770
        %v3907 = vmul.f32 %v3246, %v3770
        %v3908 = vmul.f32 %v2862, %v3771
        %v3909 = vmul.f32 %v2864, %v3771
        %v3910 = vmul.f32 %v3055, %v3771
        %v3911 = vmul.f32 %v3057, %v3771
        %v3912 = vmul.f32 %v3248, %v3771
        %v3913 = vmul.f32 %v3250, %v3771
        %v3914 = vmul.f32 %v2868, %v3772
        %v3915 = vmul.f32 %v2870, %v3772
        %v3916 = vmul.f32 %v3061, %v3772
        %v3917 = vmul.f32 %v3063, %v3772
        %v3918 = vmul.f32 %v3254, %v3772
        %v3919 = vmul.f32 %v3256, %v3772
        %v3920 = vmul.f32 %v2872, %v3773
        %v3921 = vmul.f32 %v2874, %v3773
        %v3922 = vmul.f32 %v3065, %v3773
        %v3923 = vmul.f32 %v3067, %v3773
        %v3924 = vmul.f32 %v3258, %v3773
        %v3925 = vmul.f32 %v3260, %v3773
        %v3926 = vmul.f32 %v2878, %v3774
        %v3927 = vmul.f32 %v2880, %v3774
        %v3928 = vmul.f32 %v3071, %v3774
        %v3929 = vmul.f32 %v3073, %v3774
        %v3930 = vmul.f32 %v3264, %v3774
        %v3931 = vmul.f32 %v3266, %v3774
        %v3932 = vmul.f32 %v2882, %v3775
        %v3933 = vmul.f32 %v2884, %v3775
        %v3934 = vmul.f32 %v3075, %v3775
        %v3935 = vmul.f32 %v3077, %v3775
        %v3936 = vmul.f32 %v3268, %v3775
        %v3937 = vmul.f32 %v3270, %v3775
        %v3938 = vmul.f32 %v2888, %v3776
        %v3939 = vmul.f32 %v2890, %v3776
        %v3940 = vmul.f32 %v3081, %v3776
        %v3941 = vmul.f32 %v3083, %v3776
        %v3942 = vmul.f32 %v3274, %v3776
        %v3943 = vmul.f32 %v3276, %v3776
        %v3944 = vmul.f32 %v2892, %v3777
        %v3945 = vmul.f32 %v2894, %v3777
        %v3946 = vmul.f32 %v3085, %v3777
        %v3947 = vmul.f32 %v3087, %v3777
        %v3948 = vmul.f32 %v3278, %v3777
        %v3949 = vmul.f32 %v3280, %v3777
        %v3950 = vmul.f32 %v2898, %v3778
        %v3951 = vmul.f32 %v2900, %v3778
        %v3952 = vmul.f32 %v3091, %v3778
        %v3953 = vmul.f32 %v3093, %v3778
        %v3954 = vmul.f32 %v3284, %v3778
        %v3955 = vmul.f32 %v3286, %v3778
        %v3956 = vmul.f32 %v2902, %v3779
        %v3957 = vmul.f32 %v2904, %v3779
        %v3958 = vmul.f32 %v3095, %v3779
        %v3959 = vmul.f32 %v3097, %v3779
        %v3960 = vmul.f32 %v3288, %v3779
        %v3961 = vmul.f32 %v3290, %v3779
        %v3962 = vmul.f32 %v2908, %v3780
        %v3963 = vmul.f32 %v2910, %v3780
        %v3964 = vmul.f32 %v3101, %v3780
        %v3965 = vmul.f32 %v3103, %v3780
        %v3966 = vmul.f32 %v3294, %v3780
        %v3967 = vmul.f32 %v3296, %v3780
        %v3968 = vmul.f32 %v2912, %v3781
        %v3969 = vmul.f32 %v2914, %v3781
        %v3970 = vmul.f32 %v3105, %v3781
        %v3971 = vmul.f32 %v3107, %v3781
        %v3972 = vmul.f32 %v3298, %v3781
        %v3973 = vmul.f32 %v3300, %v3781
        %3974 = vst [vmem:[%s403] sm:$0xff] %v3782
        %3975 = vst [vmem:[%s403 + $0x8] sm:$0xff] %v3783
        %3976 = vst [vmem:[%s403 + $0x10] sm:$0xff] %v3784
        %3977 = vst [vmem:[%s403 + $0x18] sm:$0xff] %v3785
        %3978 = vst [vmem:[%s403 + $0x20] sm:$0xff] %v3786
        %3979 = vst [vmem:[%s403 + $0x28] sm:$0xff] %v3787
        %3980 = vst [vmem:[%s403 + $0x30] sm:$0xff] %v3788
        %3981 = vst [vmem:[%s403 + $0x38] sm:$0xff] %v3789
        %3982 = vst [vmem:[%s403 + $0x40] sm:$0xff] %v3790
        %3983 = vst [vmem:[%s403 + $0x48] sm:$0xff] %v3791
        %3984 = vst [vmem:[%s403 + $0x50] sm:$0xff] %v3792
        %3985 = vst [vmem:[%s403 + $0x58] sm:$0xff] %v3793
        %3986 = vst [vmem:[%s403 + $0x60] sm:$0xff] %v3794
        %3987 = vst [vmem:[%s403 + $0x68] sm:$0xff] %v3795
        %3988 = vst [vmem:[%s403 + $0x70] sm:$0xff] %v3796
        %3989 = vst [vmem:[%s403 + $0x78] sm:$0xff] %v3797
        %3990 = vst [vmem:[%s403 + $0x80] sm:$0xff] %v3798
        %3991 = vst [vmem:[%s403 + $0x88] sm:$0xff] %v3799
        %3992 = vst [vmem:[%s403 + $0x90] sm:$0xff] %v3800
        %3993 = vst [vmem:[%s403 + $0x98] sm:$0xff] %v3801
        %3994 = vst [vmem:[%s403 + $0xa0] sm:$0xff] %v3802
        %3995 = vst [vmem:[%s403 + $0xa8] sm:$0xff] %v3803
        %3996 = vst [vmem:[%s403 + $0xb0] sm:$0xff] %v3804
        %3997 = vst [vmem:[%s403 + $0xb8] sm:$0xff] %v3805
        %3998 = vst [vmem:[%s403 + $0xc0] sm:$0xff] %v3806
        %3999 = vst [vmem:[%s403 + $0xc8] sm:$0xff] %v3807
        %4000 = vst [vmem:[%s403 + $0xd0] sm:$0xff] %v3808
        %4001 = vst [vmem:[%s403 + $0xd8] sm:$0xff] %v3809
        %4002 = vst [vmem:[%s403 + $0xe0] sm:$0xff] %v3810
        %4003 = vst [vmem:[%s403 + $0xe8] sm:$0xff] %v3811
        %4004 = vst [vmem:[%s403 + $0xf0] sm:$0xff] %v3812
        %4005 = vst [vmem:[%s403 + $0xf8] sm:$0xff] %v3813
        %4006 = vst [vmem:[%s403 + $0x100] sm:$0xff] %v3814
        %4007 = vst [vmem:[%s403 + $0x108] sm:$0xff] %v3815
        %4008 = vst [vmem:[%s403 + $0x110] sm:$0xff] %v3816
        %4009 = vst [vmem:[%s403 + $0x118] sm:$0xff] %v3817
        %4010 = vst [vmem:[%s403 + $0x120] sm:$0xff] %v3818
        %4011 = vst [vmem:[%s403 + $0x128] sm:$0xff] %v3819
        %4012 = vst [vmem:[%s403 + $0x130] sm:$0xff] %v3820
        %4013 = vst [vmem:[%s403 + $0x138] sm:$0xff] %v3821
        %4014 = vst [vmem:[%s403 + $0x140] sm:$0xff] %v3822
        %4015 = vst [vmem:[%s403 + $0x148] sm:$0xff] %v3823
        %4016 = vst [vmem:[%s403 + $0x150] sm:$0xff] %v3824
        %4017 = vst [vmem:[%s403 + $0x158] sm:$0xff] %v3825
        %4018 = vst [vmem:[%s403 + $0x160] sm:$0xff] %v3826
        %4019 = vst [vmem:[%s403 + $0x168] sm:$0xff] %v3827
        %4020 = vst [vmem:[%s403 + $0x170] sm:$0xff] %v3828
        %4021 = vst [vmem:[%s403 + $0x178] sm:$0xff] %v3829
        %4022 = vst [vmem:[%s403 + $0x180] sm:$0xff] %v3830
        %4023 = vst [vmem:[%s403 + $0x188] sm:$0xff] %v3831
        %4024 = vst [vmem:[%s403 + $0x190] sm:$0xff] %v3832
        %4025 = vst [vmem:[%s403 + $0x198] sm:$0xff] %v3833
        %4026 = vst [vmem:[%s403 + $0x1a0] sm:$0xff] %v3834
        %4027 = vst [vmem:[%s403 + $0x1a8] sm:$0xff] %v3835
        %4028 = vst [vmem:[%s403 + $0x1b0] sm:$0xff] %v3836
        %4029 = vst [vmem:[%s403 + $0x1b8] sm:$0xff] %v3837
        %4030 = vst [vmem:[%s403 + $0x1c0] sm:$0xff] %v3838
        %4031 = vst [vmem:[%s403 + $0x1c8] sm:$0xff] %v3839
        %4032 = vst [vmem:[%s403 + $0x1d0] sm:$0xff] %v3840
        %4033 = vst [vmem:[%s403 + $0x1d8] sm:$0xff] %v3841
        %4034 = vst [vmem:[%s403 + $0x1e0] sm:$0xff] %v3842
        %4035 = vst [vmem:[%s403 + $0x1e8] sm:$0xff] %v3843
        %4036 = vst [vmem:[%s403 + $0x1f0] sm:$0xff] %v3844
        %4037 = vst [vmem:[%s403 + $0x1f8] sm:$0xff] %v3845
        %4038 = vst [vmem:[%s403 + $0x200] sm:$0xff] %v3846
        %4039 = vst [vmem:[%s403 + $0x208] sm:$0xff] %v3847
        %4040 = vst [vmem:[%s403 + $0x210] sm:$0xff] %v3848
        %4041 = vst [vmem:[%s403 + $0x218] sm:$0xff] %v3849
        %4042 = vst [vmem:[%s403 + $0x220] sm:$0xff] %v3850
        %4043 = vst [vmem:[%s403 + $0x228] sm:$0xff] %v3851
        %4044 = vst [vmem:[%s403 + $0x230] sm:$0xff] %v3852
        %4045 = vst [vmem:[%s403 + $0x238] sm:$0xff] %v3853
        %4046 = vst [vmem:[%s403 + $0x240] sm:$0xff] %v3854
        %4047 = vst [vmem:[%s403 + $0x248] sm:$0xff] %v3855
        %4048 = vst [vmem:[%s403 + $0x250] sm:$0xff] %v3856
        %4049 = vst [vmem:[%s403 + $0x258] sm:$0xff] %v3857
        %4050 = vst [vmem:[%s403 + $0x260] sm:$0xff] %v3858
        %4051 = vst [vmem:[%s403 + $0x268] sm:$0xff] %v3859
        %4052 = vst [vmem:[%s403 + $0x270] sm:$0xff] %v3860
        %4053 = vst [vmem:[%s403 + $0x278] sm:$0xff] %v3861
        %4054 = vst [vmem:[%s403 + $0x280] sm:$0xff] %v3862
        %4055 = vst [vmem:[%s403 + $0x288] sm:$0xff] %v3863
        %4056 = vst [vmem:[%s403 + $0x290] sm:$0xff] %v3864
        %4057 = vst [vmem:[%s403 + $0x298] sm:$0xff] %v3865
        %4058 = vst [vmem:[%s403 + $0x2a0] sm:$0xff] %v3866
        %4059 = vst [vmem:[%s403 + $0x2a8] sm:$0xff] %v3867
        %4060 = vst [vmem:[%s403 + $0x2b0] sm:$0xff] %v3868
        %4061 = vst [vmem:[%s403 + $0x2b8] sm:$0xff] %v3869
        %4062 = vst [vmem:[%s403 + $0x2c0] sm:$0xff] %v3870
        %4063 = vst [vmem:[%s403 + $0x2c8] sm:$0xff] %v3871
        %4064 = vst [vmem:[%s403 + $0x2d0] sm:$0xff] %v3872
        %4065 = vst [vmem:[%s403 + $0x2d8] sm:$0xff] %v3873
        %4066 = vst [vmem:[%s403 + $0x2e0] sm:$0xff] %v3874
        %4067 = vst [vmem:[%s403 + $0x2e8] sm:$0xff] %v3875
        %4068 = vst [vmem:[%s403 + $0x2f0] sm:$0xff] %v3876
        %4069 = vst [vmem:[%s403 + $0x2f8] sm:$0xff] %v3877
        %4070 = vst [vmem:[%s403 + $0x300] sm:$0xff] %v3878
        %4071 = vst [vmem:[%s403 + $0x308] sm:$0xff] %v3879
        %4072 = vst [vmem:[%s403 + $0x310] sm:$0xff] %v3880
        %4073 = vst [vmem:[%s403 + $0x318] sm:$0xff] %v3881
        %4074 = vst [vmem:[%s403 + $0x320] sm:$0xff] %v3882
        %4075 = vst [vmem:[%s403 + $0x328] sm:$0xff] %v3883
        %4076 = vst [vmem:[%s403 + $0x330] sm:$0xff] %v3884
        %4077 = vst [vmem:[%s403 + $0x338] sm:$0xff] %v3885
        %4078 = vst [vmem:[%s403 + $0x340] sm:$0xff] %v3886
        %4079 = vst [vmem:[%s403 + $0x348] sm:$0xff] %v3887
        %4080 = vst [vmem:[%s403 + $0x350] sm:$0xff] %v3888
        %4081 = vst [vmem:[%s403 + $0x358] sm:$0xff] %v3889
        %4082 = vst [vmem:[%s403 + $0x360] sm:$0xff] %v3890
        %4083 = vst [vmem:[%s403 + $0x368] sm:$0xff] %v3891
        %4084 = vst [vmem:[%s403 + $0x370] sm:$0xff] %v3892
        %4085 = vst [vmem:[%s403 + $0x378] sm:$0xff] %v3893
        %4086 = vst [vmem:[%s403 + $0x380] sm:$0xff] %v3894
        %4087 = vst [vmem:[%s403 + $0x388] sm:$0xff] %v3895
        %4088 = vst [vmem:[%s403 + $0x390] sm:$0xff] %v3896
        %4089 = vst [vmem:[%s403 + $0x398] sm:$0xff] %v3897
        %4090 = vst [vmem:[%s403 + $0x3a0] sm:$0xff] %v3898
        %4091 = vst [vmem:[%s403 + $0x3a8] sm:$0xff] %v3899
        %4092 = vst [vmem:[%s403 + $0x3b0] sm:$0xff] %v3900
        %4093 = vst [vmem:[%s403 + $0x3b8] sm:$0xff] %v3901
        %4094 = vst [vmem:[%s403 + $0x3c0] sm:$0xff] %v3902
        %4095 = vst [vmem:[%s403 + $0x3c8] sm:$0xff] %v3903
        %4096 = vst [vmem:[%s403 + $0x3d0] sm:$0xff] %v3904
        %4097 = vst [vmem:[%s403 + $0x3d8] sm:$0xff] %v3905
        %4098 = vst [vmem:[%s403 + $0x3e0] sm:$0xff] %v3906
        %4099 = vst [vmem:[%s403 + $0x3e8] sm:$0xff] %v3907
        %4100 = vst [vmem:[%s403 + $0x3f0] sm:$0xff] %v3908
        %4101 = vst [vmem:[%s403 + $0x3f8] sm:$0xff] %v3909
        %4102 = vst [vmem:[%s403 + $0x400] sm:$0xff] %v3910
        %4103 = vst [vmem:[%s403 + $0x408] sm:$0xff] %v3911
        %4104 = vst [vmem:[%s403 + $0x410] sm:$0xff] %v3912
        %4105 = vst [vmem:[%s403 + $0x418] sm:$0xff] %v3913
        %4106 = vst [vmem:[%s403 + $0x420] sm:$0xff] %v3914
        %4107 = vst [vmem:[%s403 + $0x428] sm:$0xff] %v3915
        %4108 = vst [vmem:[%s403 + $0x430] sm:$0xff] %v3916
        %4109 = vst [vmem:[%s403 + $0x438] sm:$0xff] %v3917
        %4110 = vst [vmem:[%s403 + $0x440] sm:$0xff] %v3918
        %4111 = vst [vmem:[%s403 + $0x448] sm:$0xff] %v3919
        %4112 = vst [vmem:[%s403 + $0x450] sm:$0xff] %v3920
        %4113 = vst [vmem:[%s403 + $0x458] sm:$0xff] %v3921
        %4114 = vst [vmem:[%s403 + $0x460] sm:$0xff] %v3922
        %4115 = vst [vmem:[%s403 + $0x468] sm:$0xff] %v3923
        %4116 = vst [vmem:[%s403 + $0x470] sm:$0xff] %v3924
        %4117 = vst [vmem:[%s403 + $0x478] sm:$0xff] %v3925
        %4118 = vst [vmem:[%s403 + $0x480] sm:$0xff] %v3926
        %4119 = vst [vmem:[%s403 + $0x488] sm:$0xff] %v3927
        %4120 = vst [vmem:[%s403 + $0x490] sm:$0xff] %v3928
        %4121 = vst [vmem:[%s403 + $0x498] sm:$0xff] %v3929
        %4122 = vst [vmem:[%s403 + $0x4a0] sm:$0xff] %v3930
        %4123 = vst [vmem:[%s403 + $0x4a8] sm:$0xff] %v3931
        %4124 = vst [vmem:[%s403 + $0x4b0] sm:$0xff] %v3932
        %4125 = vst [vmem:[%s403 + $0x4b8] sm:$0xff] %v3933
        %4126 = vst [vmem:[%s403 + $0x4c0] sm:$0xff] %v3934
        %4127 = vst [vmem:[%s403 + $0x4c8] sm:$0xff] %v3935
        %4128 = vst [vmem:[%s403 + $0x4d0] sm:$0xff] %v3936
        %4129 = vst [vmem:[%s403 + $0x4d8] sm:$0xff] %v3937
        %4130 = vst [vmem:[%s403 + $0x4e0] sm:$0xff] %v3938
        %4131 = vst [vmem:[%s403 + $0x4e8] sm:$0xff] %v3939
        %4132 = vst [vmem:[%s403 + $0x4f0] sm:$0xff] %v3940
        %4133 = vst [vmem:[%s403 + $0x4f8] sm:$0xff] %v3941
        %4134 = vst [vmem:[%s403 + $0x500] sm:$0xff] %v3942
        %4135 = vst [vmem:[%s403 + $0x508] sm:$0xff] %v3943
        %4136 = vst [vmem:[%s403 + $0x510] sm:$0xff] %v3944
        %4137 = vst [vmem:[%s403 + $0x518] sm:$0xff] %v3945
        %4138 = vst [vmem:[%s403 + $0x520] sm:$0xff] %v3946
        %4139 = vst [vmem:[%s403 + $0x528] sm:$0xff] %v3947
        %4140 = vst [vmem:[%s403 + $0x530] sm:$0xff] %v3948
        %4141 = vst [vmem:[%s403 + $0x538] sm:$0xff] %v3949
        %4142 = vst [vmem:[%s403 + $0x540] sm:$0xff] %v3950
        %4143 = vst [vmem:[%s403 + $0x548] sm:$0xff] %v3951
        %4144 = vst [vmem:[%s403 + $0x550] sm:$0xff] %v3952
        %4145 = vst [vmem:[%s403 + $0x558] sm:$0xff] %v3953
        %4146 = vst [vmem:[%s403 + $0x560] sm:$0xff] %v3954
        %4147 = vst [vmem:[%s403 + $0x568] sm:$0xff] %v3955
        %4148 = vst [vmem:[%s403 + $0x570] sm:$0xff] %v3956
        %4149 = vst [vmem:[%s403 + $0x578] sm:$0xff] %v3957
        %4150 = vst [vmem:[%s403 + $0x580] sm:$0xff] %v3958
        %4151 = vst [vmem:[%s403 + $0x588] sm:$0xff] %v3959
        %4152 = vst [vmem:[%s403 + $0x590] sm:$0xff] %v3960
        %4153 = vst [vmem:[%s403 + $0x598] sm:$0xff] %v3961
        %4154 = vst [vmem:[%s403 + $0x5a0] sm:$0xff] %v3962
        %4155 = vst [vmem:[%s403 + $0x5a8] sm:$0xff] %v3963
        %4156 = vst [vmem:[%s403 + $0x5b0] sm:$0xff] %v3964
        %4157 = vst [vmem:[%s403 + $0x5b8] sm:$0xff] %v3965
        %4158 = vst [vmem:[%s403 + $0x5c0] sm:$0xff] %v3966
        %4159 = vst [vmem:[%s403 + $0x5c8] sm:$0xff] %v3967
        %4160 = vst [vmem:[%s403 + $0x5d0] sm:$0xff] %v3968
        %4161 = vst [vmem:[%s403 + $0x5d8] sm:$0xff] %v3969
        %4162 = vst [vmem:[%s403 + $0x5e0] sm:$0xff] %v3970
        %4163 = vst [vmem:[%s403 + $0x5e8] sm:$0xff] %v3971
        %4164 = vst [vmem:[%s403 + $0x5f0] sm:$0xff] %v3972
        %4165 = vst [vmem:[%s403 + $0x5f8] sm:$0xff] %v3973
        %s4166 = sand.u32 %s190, 1
        %s4167 = scalar_lea.sflag [#allocation4], %s4166
        %s4168 = sand.u32 %s190, 1
        %s4169 = smul.addr %s4168, 1536
        %s4170 = scalar_lea.vmem [#allocation11], %s4169
        %s4171 = sand.u32 %s218, 1
        %s4172 = scalar_lea.sflag [#allocation13], %s4171
        %s4173 = sand.u32 %s218, 1
        %s4174 = smul.addr %s4173, 1536
        %s4175 = scalar_lea.vmem [#allocation12], %s4174
        // Predicated region
        $region65: #{tpu_custom_call.1} parent=43 // pred_check
          %p4176 = pneg %p200
        $region66: #{tpu_custom_call.1} parent=43 // pred_check_branch
          %4178 = sbr.rel (%p4176) target = $region68
        $region67: #{tpu_custom_call.1} parent=43 // pred_region
          %s4179 = smul.u32 32, %s35
          %s4181 = ssub.s32 24576, 24576
          %4182 = vsyncadd %s4167, %s4181
          %s4183 = smul.addr %s4179, 6
          %s4184 = smul.addr %s34, 192
          %s4185 = sadd.s32 %s4183, %s4184
          %s4186 = smul.addr %s4185, 128
          %s4187 = scalar_lea.hbm %s6, %s4186
          %s4188 = sshll.u32 %s4170, 4
          %s4189 = int_to_ptr.vmem [resolvable:$true] %s4188
          %4194 = dma.vmem_to_hbm [thread:$0]  %s4189, 24576, %s4187, %s4167, 768, 768, 48
        $region68: #{tpu_custom_call.1} parent=43 // pred_fallthru
          _
        // Predicated region
        $region69: #{tpu_custom_call.1} parent=43 // pred_check
          %p4195 = pneg %p228
        $region70: #{tpu_custom_call.1} parent=43 // pred_check_branch
          %4197 = sbr.rel (%p4195) target = $region72
        $region71: #{tpu_custom_call.1} parent=43 // pred_region
          %s4198 = smul.u32 32, %s35
          %s4200 = ssub.s32 24576, 24576
          %4201 = vsyncadd %s4172, %s4200
          %s4202 = smul.addr %s4198, 6
          %s4203 = smul.addr %s34, 192
          %s4204 = sadd.s32 %s4202, %s4203
          %s4205 = smul.addr %s4204, 128
          %s4206 = scalar_lea.hbm %s7, %s4205
          %s4207 = sshll.u32 %s4175, 4
          %s4208 = int_to_ptr.vmem [resolvable:$true] %s4207
          %4213 = dma.vmem_to_hbm [thread:$0]  %s4208, 24576, %s4206, %s4172, 768, 768, 48
        $region72: #{tpu_custom_call.1} parent=43 // pred_fallthru
          _
      $region44: #{tpu_custom_call.1} parent=5 // pred_fallthru
        _
      %p4214 = scmp.le.s32.totalorder 2, %s25
      // Predicated region
      $region73: #{tpu_custom_call.1} parent=5 // pred_check
        %p4215 = pneg %p4214
      $region74: #{tpu_custom_call.1} parent=5 // pred_check_branch
        %4217 = sbr.rel (%p4215) target = $region76
      $region75: #{tpu_custom_call.1} parent=5 // pred_region
        %s4218 = ssub.s32 %s25, 2
        // Predicated region
        $region77: #{tpu_custom_call.1} parent=75 // pred_check
          %p4219 = pneg %p206
        $region78: #{tpu_custom_call.1} parent=75 // pred_check_branch
          %4221 = sbr.rel (%p4219) target = $region80
        $region79: #{tpu_custom_call.1} parent=75 // pred_region
          %s4222 = sand.u32 %s191, 1
          %s4223 = scalar_lea.sflag [#allocation4], %s4222
          %s4224 = sand.u32 %s191, 1
          %s4225 = smul.addr %s4224, 1536
          %s4226 = scalar_lea.vmem [#allocation11], %s4225
          %4227 = dma.done %s4223, 24576
        $region80: #{tpu_custom_call.1} parent=75 // pred_fallthru
          _
        // Predicated region
        $region81: #{tpu_custom_call.1} parent=75 // pred_check
          %p4228 = pneg %p234
        $region82: #{tpu_custom_call.1} parent=75 // pred_check_branch
          %4230 = sbr.rel (%p4228) target = $region84
        $region83: #{tpu_custom_call.1} parent=75 // pred_region
          %s4231 = sand.u32 %s219, 1
          %s4232 = scalar_lea.sflag [#allocation13], %s4231
          %s4233 = sand.u32 %s219, 1
          %s4234 = smul.addr %s4233, 1536
          %s4235 = scalar_lea.vmem [#allocation12], %s4234
          %4236 = dma.done %s4232, 24576
        $region84: #{tpu_custom_call.1} parent=75 // pred_fallthru
          _
      $region76: #{tpu_custom_call.1} parent=5 // pred_fallthru
        _
    $region6: #{tpu_custom_call.1} parent=1 // loop_footer
      %s29 = sadd.s32 1, %s25
    $region7: #{tpu_custom_call.1} parent=1 // loop_footer_branch
      %24 = sbr.rel target = $region3
    $region8: #{tpu_custom_call.1} parent=1 // loop_exit
      _
    %4237 = vsyncpa [#allocation3], 1
    %s4238 = scalar_lea.sflag [#allocation3], 1
    %4239 = vsyncpa %s4238, 1
    %4240 = vsyncpa [#allocation6], 1
    %4241 = vsyncpa [#allocation9], 1
    %4242 = vsyncpa [#allocation4], 1
    %s4243 = scalar_lea.sflag [#allocation4], 1
    %4244 = vsyncpa %s4243, 1
    %4245 = vsyncpa [#allocation13], 1
    %s4246 = scalar_lea.sflag [#allocation13], 1
    %4247 = vsyncpa %s4246, 1

</llo_original>
